<compile_context>
chip_gen: v6e
topology: v6e:2x2x1
jax: 0.10.0
libtpu: 0.0.40
codegen_flags: <defaults>
</compile_context>

<pallas_src>
import math
import functools

import jax
import jax.numpy as jnp
from jax.experimental import pallas as pl
from jax.experimental.pallas import tpu as pltpu

LN_EPS = 1e-5                      # torch.nn.LayerNorm default
_VMEM_LIMIT = 32 * 1024 * 1024     # explicit scoped-VMEM budget (safe on v5e/v6e/v7x)


# ----------------------------- in-kernel helpers ----------------------------

def _bf16(x):
    return x.astype(jnp.bfloat16)


def _ln(x, g, b):
    """LayerNorm over the last axis, f32 math (matches torch defaults)."""
    mu = jnp.mean(x, axis=-1, keepdims=True)
    xc = x - mu
    var = jnp.mean(xc * xc, axis=-1, keepdims=True)
    return xc * jax.lax.rsqrt(var + LN_EPS) * g + b


def _softmax_rows(s):
    """Row softmax in f32; reciprocal goes to the EUP slot."""
    s = s - jnp.max(s, axis=-1, keepdims=True)
    e = jnp.exp(s)
    return e * pl.reciprocal(jnp.sum(e, axis=-1, keepdims=True), approx=True)


# ----------------------------- the fused kernel ------------------------------

def _coattention_kernel(x_ref,
                        w_qkv_mc_ref, b_qkv_mc_ref,
                        w_mc_out_ref, b_mc_out_ref,
                        g_sc_ref, bt_sc_ref,
                        w_x_ref, b_x_ref,
                        g_ln_ref, bt_ln_ref,
                        w_qkv_sc_ref, b_qkv_sc_ref,
                        w_sc_out_ref, b_sc_out_ref,
                        g_E_ref, bt_E_ref,
                        w_E_ref, b_Eproj_ref,
                        g_Eo_ref, bt_Eo_ref,
                        w1_ref, w2_ref, b_out_ref,
                        out_ref,
                        q_s, k_s, v_s, qkv_s,
                        *, C, T, oc, ed, H, hd_mc, scale_mc, hd_sc, scale_sc):
    # TODO(synk): for very large T the (T, T) score matrices should be tiled flash-style
    #             (online softmax) so the block also fits v7x's 64 MiB VMEM; full-T blocks
    #             are fine at TS-VAD sizes.
    # TODO(synk): oc=32 keeps the final output lane-sparse (<128 lanes); padding D to 128 is
    #             pure layout plumbing and was left out to keep the reference semantics intact.

    # ---- 1) fused mc Q/K/V projection (channel-major embed layout, bf16 VMEM scratch) ----
    w_qkv = w_qkv_mc_ref[...]                        # (oc, 3*ed) bf16
    b_qkv = b_qkv_mc_ref[...]                        # (1, 3*ed) f32
    for c in range(C):
        y = jnp.dot(_bf16(x_ref[c]), w_qkv, preferred_element_type=jnp.float32) + b_qkv
        q_s[:, c * ed:(c + 1) * ed] = _bf16(y[:, 0 * ed:1 * ed])
        k_s[:, c * ed:(c + 1) * ed] = _bf16(y[:, 1 * ed:2 * ed])
        v_s[:, c * ed:(c + 1) * ed] = _bf16(y[:, 2 * ed:3 * ed])

    # ---- 2) attention_mc: all heads, out_proj fused, head-averaged attn weights kept ----
    w_sum = jnp.zeros((T, T), jnp.float32)           # head-summed softmax weights
    x_mc = jnp.zeros((T, oc), jnp.float32)           # mc out_proj accumulator
    for h in range(H):
        lo, hi = h * hd_mc, (h + 1) * hd_mc
        s = jax.lax.dot_general(q_s[:, lo:hi], k_s[:, lo:hi], (((1,), (1,)), ((), ())),
                                preferred_element_type=jnp.float32) * scale_mc
        p = _softmax_rows(s)
        w_sum = w_sum + p
        ah = jnp.dot(_bf16(p), v_s[:, lo:hi], preferred_element_type=jnp.float32)
        # distribute out_proj over head slices: attn_merged @ W == sum_h a_h @ W[h*hd:(h+1)*hd]
        x_mc = x_mc + jnp.dot(_bf16(ah), w_mc_out_ref[lo:hi, :],
                              preferred_element_type=jnp.float32)
    x_mc = x_mc + b_mc_out_ref[...]                  # (T, oc)

    # ---- 3) E_1 = ln_sc(bmm(attn_w_avg, E_in) + E_in); attn weights never leave VMEM ----
    e_in = x_ref[0]                                  # E_in = x[:, 0]   (T, oc) f32
    e1 = jnp.dot(_bf16(w_sum * (1.0 / H)), _bf16(e_in),
                 preferred_element_type=jnp.float32) + e_in
    e1 = _ln(e1, g_sc_ref[...], bt_sc_ref[...])

    # ---- 4) part2 = mean_C ln(x_new + x_proj(x_new)),  x_new = residual + x_mc ----
    wx = w_x_ref[...]
    bx = b_x_ref[...]
    g = g_ln_ref[...]
    beta = bt_ln_ref[...]
    acc = jnp.zeros((T, oc), jnp.float32)
    for c in range(C):
        xn = x_ref[c] + x_mc
        y = jnp.dot(_bf16(xn), wx, preferred_element_type=jnp.float32) + bx + xn
        acc = acc + _ln(y, g, beta)
    part2 = acc * (1.0 / C)

    # ---- 5) E branch: fused E_proj_{q,k,v}, attention_sc (all heads) + out_proj + lns ----
    qkv = jnp.dot(_bf16(e1), w_qkv_sc_ref[...],
                  preferred_element_type=jnp.float32) + b_qkv_sc_ref[...]
    qkv_s[...] = _bf16(qkv)                          # (T, 3*ed) bf16 VMEM scratch
    acc_sc = jnp.zeros((T, oc), jnp.float32)
    for h in range(H):
        lo, hi = h * hd_sc, (h + 1) * hd_sc
        s = jax.lax.dot_general(qkv_s[:, lo:hi], qkv_s[:, ed + lo:ed + hi],
                                (((1,), (1,)), ((), ())),
                                preferred_element_type=jnp.float32) * scale_sc
        p = _softmax_rows(s)
        ah = jnp.dot(_bf16(p), qkv_s[:, 2 * ed + lo:2 * ed + hi],
                     preferred_element_type=jnp.float32)
        acc_sc = acc_sc + jnp.dot(_bf16(ah), w_sc_out_ref[lo:hi, :],
                                  preferred_element_type=jnp.float32)
    # E_11 = ln_E(out_proj(attn) + E_1)
    e11 = _ln(acc_sc + b_sc_out_ref[...] + e1, g_E_ref[...], bt_E_ref[...])
    # part1 = ln_E_out(E_11 + E_proj(E_11))
    p1 = e11 + jnp.dot(_bf16(e11), w_E_ref[...],
                       preferred_element_type=jnp.float32) + b_Eproj_ref[...]
    p1 = _ln(p1, g_Eo_ref[...], bt_Eo_ref[...])

    # ---- 6) out = cat(part1, part2) @ W_out^T + b == part1 @ W1 + part2 @ W2 + b ----
    out_ref[...] = (jnp.dot(_bf16(p1), w1_ref[...], preferred_element_type=jnp.float32)
                    + jnp.dot(_bf16(part2), w2_ref[...], preferred_element_type=jnp.float32)
                    + b_out_ref[...])


def coattention_block(x, kp, *, num_heads):
    B, C, T, oc = x.shape
    ed = kp["w_qkv_mc_t"].shape[1] // 3
    emb = C * ed
    H = num_heads
    assert emb % H == 0 and ed % H == 0
    assert kp["w_mc_out_t"].shape[0] == emb          # module requires C == 8
    hd_mc, hd_sc = emb // H, ed // H
    scale_mc, scale_sc = float(hd_mc) ** -0.5, float(hd_sc) ** -0.5

    vec = pl.BlockSpec((1, oc), lambda b: (0, 0))
    vec3 = pl.BlockSpec((1, 3 * ed), lambda b: (0, 0))
    sq = pl.BlockSpec((oc, oc), lambda b: (0, 0))

    in_specs = [
        pl.BlockSpec((None, C, T, oc), lambda b: (b, 0, 0, 0)),   # x (per batch)
        pl.BlockSpec((oc, 3 * ed), lambda b: (0, 0)), vec3,       # fused mc qkv proj
        pl.BlockSpec((emb, oc), lambda b: (0, 0)), vec,           # mc out_proj
        vec, vec,                                                 # ln_sc
        sq, vec,                                                  # x_proj
        vec, vec,                                                 # ln
        pl.BlockSpec((oc, 3 * ed), lambda b: (0, 0)), vec3,       # fused sc qkv proj
        pl.BlockSpec((ed, oc), lambda b: (0, 0)), vec,            # sc out_proj
        vec, vec,                                                 # ln_E
        sq, vec,                                                  # E_proj
        vec, vec,                                                 # ln_E_out
        sq, sq, vec,                                              # final out_proj (split)
    ]

    cost = pl.CostEstimate(
        flops=int(B * (2 * C * T * oc * 3 * ed + 4 * T * T * emb + 2 * T * emb * oc
                       + 2 * T * T * oc + 2 * C * T * oc * oc + 2 * T * oc * 3 * ed
                       + 4 * T * T * ed + 2 * T * ed * oc + 6 * T * oc * oc)),
        transcendentals=int(2 * B * H * T * T),
        bytes_accessed=int(x.size * 4 + B * T * oc * 4 + (oc * 3 * ed * 2 + emb * oc) * 2))

    return pl.pallas_call(
        functools.partial(_coattention_kernel, C=C, T=T, oc=oc, ed=ed, H=H,
                          hd_mc=hd_mc, scale_mc=scale_mc,
                          hd_sc=hd_sc, scale_sc=scale_sc),
        grid=(B,),
        in_specs=in_specs,
        out_specs=pl.BlockSpec((None, T, oc), lambda b: (b, 0, 0)),
        out_shape=jax.ShapeDtypeStruct((B, T, oc), jnp.float32),
        scratch_shapes=[pltpu.VMEM((T, emb), jnp.bfloat16),       # q (channel-major)
                        pltpu.VMEM((T, emb), jnp.bfloat16),       # k
                        pltpu.VMEM((T, emb), jnp.bfloat16),       # v
                        pltpu.VMEM((T, 3 * ed), jnp.bfloat16)],   # sc qkv
        compiler_params=pltpu.CompilerParams(
            dimension_semantics=("parallel",),        # B maps onto v7x's 2 TensorCores
            vmem_limit_bytes=_VMEM_LIMIT),
        cost_estimate=cost,
    )(x,
      kp["w_qkv_mc_t"], kp["b_qkv_mc"],
      kp["w_mc_out_t"], kp["b_mc_out"],
      kp["ln_sc_g"], kp["ln_sc_b"],
      kp["w_x_t"], kp["b_x"],
      kp["ln_g"], kp["ln_b"],
      kp["w_qkv_sc_t"], kp["b_qkv_sc"],
      kp["w_sc_out_t"], kp["b_sc_out"],
      kp["ln_E_g"], kp["ln_E_b"],
      kp["w_E_t"], kp["b_E_proj"],
      kp["ln_Eo_g"], kp["ln_Eo_b"],
      kp["w1_t"], kp["w2_t"], kp["b_out"])


# ----------------------------- parameters -----------------------------------

def init_params(key, out_channels, embed_dim):
    """Parameters in the original torch layout (W: (out_f, in_f), b: (out_f,))."""
    oc, ed = out_channels, embed_dim
    keys = jax.random.split(key, 11)

    def lin(k, out_f, in_f):
        std = math.sqrt(1.0 / in_f)   # dropout = 0
        w = std * jax.random.normal(k, (out_f, in_f), jnp.float32)
        b = jnp.zeros((out_f,), jnp.float32)
        return w, b

    def ln(d):
        return jnp.ones((d,), jnp.float32), jnp.zeros((d,), jnp.float32)

    return {
        "in_proj_q": lin(keys[0], ed, oc),
        "in_proj_k": lin(keys[1], ed, oc),
        "in_proj_v": lin(keys[2], ed, oc),
        "mc_out_proj": lin(keys[3], oc, ed * 8),   # attention_mc.out_proj
        "x_proj": lin(keys[4], oc, oc),
        "E_proj_q": lin(keys[5], ed, oc),
        "E_proj_k": lin(keys[6], ed, oc),
        "E_proj_v": lin(keys[7], ed, oc),
        "sc_out_proj": lin(keys[8], oc, ed),       # attention_sc.out_proj
        "E_proj": lin(keys[9], oc, oc),
        "out_proj": lin(keys[10], oc, 2 * oc),
        "ln": ln(oc), "ln_sc": ln(oc), "ln_E": ln(oc), "ln_E_out": ln(oc),
    }


def prepare_params(p):
    """Fuse / pre-transpose / bf16-cast weights once (outside jit) into kernel-ready form."""
    def wt(w):                        # torch (out,in) -> (in,out) bf16 for x @ W
        return jnp.asarray(w).T.astype(jnp.bfloat16)

    def row(b):                       # (d,) -> (1, d) f32
        return jnp.asarray(b, jnp.float32).reshape(1, -1)

    wq, bq = p["in_proj_q"]; wk, bk = p["in_proj_k"]; wv, bv = p["in_proj_v"]
    weq, beq = p["E_proj_q"]; wek, bek = p["E_proj_k"]; wev, bev = p["E_proj_v"]
    w_out, b_out = p["out_proj"]                       # (oc, 2*oc)
    oc = w_out.shape[0]
    return {
        # fused mc Q/K/V projection: x(..., oc) @ (oc, 3*ed)
        "w_qkv_mc_t": wt(jnp.concatenate([wq, wk, wv], axis=0)),
        "b_qkv_mc": row(jnp.concatenate([bq, bk, bv], axis=0)),
        "w_mc_out_t": wt(p["mc_out_proj"][0]), "b_mc_out": row(p["mc_out_proj"][1]),
        "w_x_t": wt(p["x_proj"][0]), "b_x": row(p["x_proj"][1]),
        # fused sc Q/K/V projection
        "w_qkv_sc_t": wt(jnp.concatenate([weq, wek, wev], axis=0)),
        "b_qkv_sc": row(jnp.concatenate([beq, bek, bev], axis=0)),
        "w_sc_out_t": wt(p["sc_out_proj"][0]), "b_sc_out": row(p["sc_out_proj"][1]),
        "w_E_t": wt(p["E_proj"][0]), "b_E_proj": row(p["E_proj"][1]),
        # final out_proj split over the concat: cat(p1,p2) @ W^T = p1 @ W[:, :oc].T + p2 @ W[:, oc:].T
        "w1_t": wt(w_out[:, :oc]), "w2_t": wt(w_out[:, oc:]), "b_out": row(b_out),
        "ln_g": row(p["ln"][0]), "ln_b": row(p["ln"][1]),
        "ln_sc_g": row(p["ln_sc"][0]), "ln_sc_b": row(p["ln_sc"][1]),
        "ln_E_g": row(p["ln_E"][0]), "ln_E_b": row(p["ln_E"][1]),
        "ln_Eo_g": row(p["ln_E_out"][0]), "ln_Eo_b": row(p["ln_E_out"][1]),
    }


# ----------------------------- forward pass ----------------------------------

@functools.partial(jax.jit, static_argnums=(2,))
def coattention_forward(kp, x, num_heads):
    """x: (B, C=8, T, D=out_channels) -> (B, T, out_channels)."""
    return coattention_block(x, kp, num_heads=num_heads)


# ----------------------------- demo ------------------------------------------

if __name__ == "__main__":
    B = 2
    C = 8            # CoAttention requires C == 8 (attention_mc uses embed_dim * 8)
    T = 8
    out_channels = 32
    embed_dim = 32
    num_heads = 4

    key = jax.random.PRNGKey(0)
    k_param, k_x = jax.random.split(key)
    params = init_params(k_param, out_channels, embed_dim)
    kp = prepare_params(params)
    x = jax.random.normal(k_x, (B, C, T, out_channels), jnp.float32)

    out = coattention_forward(kp, x, num_heads)
    out = jax.block_until_ready(out)
    assert out.shape == (B, T, out_channels)
    assert bool(jnp.all(jnp.isfinite(out)))
    print("KERNEL_OK")
</pallas_src>

<mosaic_0001>
module attributes {stable_mosaic.version = 11 : i64} {
  func.func @_coattention_kernel(%arg0: i32, %arg1: memref<1x8x8x32xf32, #tpu.memory_space<vmem>>, %arg2: memref<32x96xbf16, #tpu.memory_space<vmem>>, %arg3: memref<1x96xf32, #tpu.memory_space<vmem>>, %arg4: memref<256x32xbf16, #tpu.memory_space<vmem>>, %arg5: memref<1x32xf32, #tpu.memory_space<vmem>>, %arg6: memref<1x32xf32, #tpu.memory_space<vmem>>, %arg7: memref<1x32xf32, #tpu.memory_space<vmem>>, %arg8: memref<32x32xbf16, #tpu.memory_space<vmem>>, %arg9: memref<1x32xf32, #tpu.memory_space<vmem>>, %arg10: memref<1x32xf32, #tpu.memory_space<vmem>>, %arg11: memref<1x32xf32, #tpu.memory_space<vmem>>, %arg12: memref<32x96xbf16, #tpu.memory_space<vmem>>, %arg13: memref<1x96xf32, #tpu.memory_space<vmem>>, %arg14: memref<32x32xbf16, #tpu.memory_space<vmem>>, %arg15: memref<1x32xf32, #tpu.memory_space<vmem>>, %arg16: memref<1x32xf32, #tpu.memory_space<vmem>>, %arg17: memref<1x32xf32, #tpu.memory_space<vmem>>, %arg18: memref<32x32xbf16, #tpu.memory_space<vmem>>, %arg19: memref<1x32xf32, #tpu.memory_space<vmem>>, %arg20: memref<1x32xf32, #tpu.memory_space<vmem>>, %arg21: memref<1x32xf32, #tpu.memory_space<vmem>>, %arg22: memref<32x32xbf16, #tpu.memory_space<vmem>>, %arg23: memref<32x32xbf16, #tpu.memory_space<vmem>>, %arg24: memref<1x32xf32, #tpu.memory_space<vmem>>, %arg25: memref<1x8x32xf32, #tpu.memory_space<vmem>>, %arg26: memref<8x256xbf16, #tpu.memory_space<vmem>>, %arg27: memref<8x256xbf16, #tpu.memory_space<vmem>>, %arg28: memref<8x256xbf16, #tpu.memory_space<vmem>>, %arg29: memref<8x96xbf16, #tpu.memory_space<vmem>>) attributes {dimension_semantics = [#tpu.dimension_semantics<parallel>], iteration_bounds = array<i64: 2>, scalar_prefetch = 0 : i64, scratch_operands = 4 : i64, tpu.core_type = #tpu.core_type<tc>, window_params = [{transform_indices = @transform_0, window_bounds = array<i64: 1, 8, 8, 32>}, {pipeline_mode = #tpu.pipeline_mode<synchronous>, transform_indices = @transform_1, window_bounds = array<i64: 32, 96>}, {pipeline_mode = #tpu.pipeline_mode<synchronous>, transform_indices = @transform_2, window_bounds = array<i64: 1, 96>}, {pipeline_mode = #tpu.pipeline_mode<synchronous>, transform_indices = @transform_3, window_bounds = array<i64: 256, 32>}, {pipeline_mode = #tpu.pipeline_mode<synchronous>, transform_indices = @transform_4, window_bounds = array<i64: 1, 32>}, {pipeline_mode = #tpu.pipeline_mode<synchronous>, transform_indices = @transform_5, window_bounds = array<i64: 1, 32>}, {pipeline_mode = #tpu.pipeline_mode<synchronous>, transform_indices = @transform_6, window_bounds = array<i64: 1, 32>}, {pipeline_mode = #tpu.pipeline_mode<synchronous>, transform_indices = @transform_7, window_bounds = array<i64: 32, 32>}, {pipeline_mode = #tpu.pipeline_mode<synchronous>, transform_indices = @transform_8, window_bounds = array<i64: 1, 32>}, {pipeline_mode = #tpu.pipeline_mode<synchronous>, transform_indices = @transform_9, window_bounds = array<i64: 1, 32>}, {pipeline_mode = #tpu.pipeline_mode<synchronous>, transform_indices = @transform_10, window_bounds = array<i64: 1, 32>}, {pipeline_mode = #tpu.pipeline_mode<synchronous>, transform_indices = @transform_11, window_bounds = array<i64: 32, 96>}, {pipeline_mode = #tpu.pipeline_mode<synchronous>, transform_indices = @transform_12, window_bounds = array<i64: 1, 96>}, {pipeline_mode = #tpu.pipeline_mode<synchronous>, transform_indices = @transform_13, window_bounds = array<i64: 32, 32>}, {pipeline_mode = #tpu.pipeline_mode<synchronous>, transform_indices = @transform_14, window_bounds = array<i64: 1, 32>}, {pipeline_mode = #tpu.pipeline_mode<synchronous>, transform_indices = @transform_15, window_bounds = array<i64: 1, 32>}, {pipeline_mode = #tpu.pipeline_mode<synchronous>, transform_indices = @transform_16, window_bounds = array<i64: 1, 32>}, {pipeline_mode = #tpu.pipeline_mode<synchronous>, transform_indices = @transform_17, window_bounds = array<i64: 32, 32>}, {pipeline_mode = #tpu.pipeline_mode<synchronous>, transform_indices = @transform_18, window_bounds = array<i64: 1, 32>}, {pipeline_mode = #tpu.pipeline_mode<synchronous>, transform_indices = @transform_19, window_bounds = array<i64: 1, 32>}, {pipeline_mode = #tpu.pipeline_mode<synchronous>, transform_indices = @transform_20, window_bounds = array<i64: 1, 32>}, {pipeline_mode = #tpu.pipeline_mode<synchronous>, transform_indices = @transform_21, window_bounds = array<i64: 32, 32>}, {pipeline_mode = #tpu.pipeline_mode<synchronous>, transform_indices = @transform_22, window_bounds = array<i64: 32, 32>}, {pipeline_mode = #tpu.pipeline_mode<synchronous>, transform_indices = @transform_23, window_bounds = array<i64: 1, 32>}, {transform_indices = @transform_24, window_bounds = array<i64: 1, 8, 32>}]} {
    %c0 = arith.constant 0 : index
    %c0_0 = arith.constant 0 : index
    %0 = vector.load %arg2[%c0, %c0_0] : memref<32x96xbf16, #tpu.memory_space<vmem>>, vector<32x96xbf16>
    %c0_1 = arith.constant 0 : index
    %c0_2 = arith.constant 0 : index
    %1 = vector.load %arg3[%c0_1, %c0_2] : memref<1x96xf32, #tpu.memory_space<vmem>>, vector<1x96xf32>
    %c0_3 = arith.constant 0 : index
    %c0_4 = arith.constant 0 : index
    %c0_5 = arith.constant 0 : index
    %c0_6 = arith.constant 0 : index
    %2 = vector.load %arg1[%c0_3, %c0_4, %c0_5, %c0_6] : memref<1x8x8x32xf32, #tpu.memory_space<vmem>>, vector<1x1x8x32xf32>
    %3 = vector.shape_cast %2 : vector<1x1x8x32xf32> to vector<8x32xf32>
    %4 = arith.truncf %3 : vector<8x32xf32> to vector<8x32xbf16>
    %cst = arith.constant dense<0.000000e+00> : vector<8x96xf32>
    %5 = tpu.matmul %4, %0, %cst {dimension_numbers = #tpu.dot_dimension_numbers<[1], [0], [0], [1], [0, 0, 1, 1], [], []>} : vector<8x32xbf16>, vector<32x96xbf16>, vector<8x96xf32> -> vector<8x96xf32>
    %6 = vector.broadcast %1 : vector<1x96xf32> to vector<8x96xf32>
    %7 = arith.addf %5, %6 : vector<8x96xf32>
    %8 = vector.extract_strided_slice %7 {offsets = [0, 0], sizes = [8, 32], strides = [1, 1]} : vector<8x96xf32> to vector<8x32xf32>
    %9 = arith.truncf %8 : vector<8x32xf32> to vector<8x32xbf16>
    %c0_7 = arith.constant 0 : index
    %c0_8 = arith.constant 0 : index
    %10 = vector.load %arg26[%c0_7, %c0_8] : memref<8x256xbf16, #tpu.memory_space<vmem>>, vector<8x32xbf16>
    tpu.vector_store %arg26[%c0_7, %c0_8], %9 {strides = array<i32>} : memref<8x256xbf16, #tpu.memory_space<vmem>>, vector<8x32xbf16>,
    %11 = vector.extract_strided_slice %7 {offsets = [0, 32], sizes = [8, 32], strides = [1, 1]} : vector<8x96xf32> to vector<8x32xf32>
    %12 = arith.truncf %11 : vector<8x32xf32> to vector<8x32xbf16>
    %c0_9 = arith.constant 0 : index
    %c0_10 = arith.constant 0 : index
    %13 = vector.load %arg27[%c0_9, %c0_10] : memref<8x256xbf16, #tpu.memory_space<vmem>>, vector<8x32xbf16>
    tpu.vector_store %arg27[%c0_9, %c0_10], %12 {strides = array<i32>} : memref<8x256xbf16, #tpu.memory_space<vmem>>, vector<8x32xbf16>,
    %14 = vector.extract_strided_slice %7 {offsets = [0, 64], sizes = [8, 32], strides = [1, 1]} : vector<8x96xf32> to vector<8x32xf32>
    %15 = arith.truncf %14 : vector<8x32xf32> to vector<8x32xbf16>
    %c0_11 = arith.constant 0 : index
    %c0_12 = arith.constant 0 : index
    %16 = vector.load %arg28[%c0_11, %c0_12] : memref<8x256xbf16, #tpu.memory_space<vmem>>, vector<8x32xbf16>
    tpu.vector_store %arg28[%c0_11, %c0_12], %15 {strides = array<i32>} : memref<8x256xbf16, #tpu.memory_space<vmem>>, vector<8x32xbf16>,
    %c0_13 = arith.constant 0 : index
    %c1 = arith.constant 1 : index
    %c0_14 = arith.constant 0 : index
    %c0_15 = arith.constant 0 : index
    %17 = vector.load %arg1[%c0_13, %c1, %c0_14, %c0_15] : memref<1x8x8x32xf32, #tpu.memory_space<vmem>>, vector<1x1x8x32xf32>
    %18 = vector.shape_cast %17 : vector<1x1x8x32xf32> to vector<8x32xf32>
    %19 = arith.truncf %18 : vector<8x32xf32> to vector<8x32xbf16>
    %cst_16 = arith.constant dense<0.000000e+00> : vector<8x96xf32>
    %20 = tpu.matmul %19, %0, %cst_16 {dimension_numbers = #tpu.dot_dimension_numbers<[1], [0], [0], [1], [0, 0, 1, 1], [], []>} : vector<8x32xbf16>, vector<32x96xbf16>, vector<8x96xf32> -> vector<8x96xf32>
    %21 = vector.broadcast %1 : vector<1x96xf32> to vector<8x96xf32>
    %22 = arith.addf %20, %21 : vector<8x96xf32>
    %23 = vector.extract_strided_slice %22 {offsets = [0, 0], sizes = [8, 32], strides = [1, 1]} : vector<8x96xf32> to vector<8x32xf32>
    %24 = arith.truncf %23 : vector<8x32xf32> to vector<8x32xbf16>
    %c0_17 = arith.constant 0 : index
    %c32 = arith.constant 32 : index
    %25 = vector.load %arg26[%c0_17, %c32] : memref<8x256xbf16, #tpu.memory_space<vmem>>, vector<8x32xbf16>
    tpu.vector_store %arg26[%c0_17, %c32], %24 {strides = array<i32>} : memref<8x256xbf16, #tpu.memory_space<vmem>>, vector<8x32xbf16>,
    %26 = vector.extract_strided_slice %22 {offsets = [0, 32], sizes = [8, 32], strides = [1, 1]} : vector<8x96xf32> to vector<8x32xf32>
    %27 = arith.truncf %26 : vector<8x32xf32> to vector<8x32xbf16>
    %c0_18 = arith.constant 0 : index
    %c32_19 = arith.constant 32 : index
    %28 = vector.load %arg27[%c0_18, %c32_19] : memref<8x256xbf16, #tpu.memory_space<vmem>>, vector<8x32xbf16>
    tpu.vector_store %arg27[%c0_18, %c32_19], %27 {strides = array<i32>} : memref<8x256xbf16, #tpu.memory_space<vmem>>, vector<8x32xbf16>,
    %29 = vector.extract_strided_slice %22 {offsets = [0, 64], sizes = [8, 32], strides = [1, 1]} : vector<8x96xf32> to vector<8x32xf32>
    %30 = arith.truncf %29 : vector<8x32xf32> to vector<8x32xbf16>
    %c0_20 = arith.constant 0 : index
    %c32_21 = arith.constant 32 : index
    %31 = vector.load %arg28[%c0_20, %c32_21] : memref<8x256xbf16, #tpu.memory_space<vmem>>, vector<8x32xbf16>
    tpu.vector_store %arg28[%c0_20, %c32_21], %30 {strides = array<i32>} : memref<8x256xbf16, #tpu.memory_space<vmem>>, vector<8x32xbf16>,
    %c0_22 = arith.constant 0 : index
    %c2 = arith.constant 2 : index
    %c0_23 = arith.constant 0 : index
    %c0_24 = arith.constant 0 : index
    %32 = vector.load %arg1[%c0_22, %c2, %c0_23, %c0_24] : memref<1x8x8x32xf32, #tpu.memory_space<vmem>>, vector<1x1x8x32xf32>
    %33 = vector.shape_cast %32 : vector<1x1x8x32xf32> to vector<8x32xf32>
    %34 = arith.truncf %33 : vector<8x32xf32> to vector<8x32xbf16>
    %cst_25 = arith.constant dense<0.000000e+00> : vector<8x96xf32>
    %35 = tpu.matmul %34, %0, %cst_25 {dimension_numbers = #tpu.dot_dimension_numbers<[1], [0], [0], [1], [0, 0, 1, 1], [], []>} : vector<8x32xbf16>, vector<32x96xbf16>, vector<8x96xf32> -> vector<8x96xf32>
    %36 = vector.broadcast %1 : vector<1x96xf32> to vector<8x96xf32>
    %37 = arith.addf %35, %36 : vector<8x96xf32>
    %38 = vector.extract_strided_slice %37 {offsets = [0, 0], sizes = [8, 32], strides = [1, 1]} : vector<8x96xf32> to vector<8x32xf32>
    %39 = arith.truncf %38 : vector<8x32xf32> to vector<8x32xbf16>
    %c0_26 = arith.constant 0 : index
    %c64 = arith.constant 64 : index
    %40 = vector.load %arg26[%c0_26, %c64] : memref<8x256xbf16, #tpu.memory_space<vmem>>, vector<8x32xbf16>
    tpu.vector_store %arg26[%c0_26, %c64], %39 {strides = array<i32>} : memref<8x256xbf16, #tpu.memory_space<vmem>>, vector<8x32xbf16>,
    %41 = vector.extract_strided_slice %37 {offsets = [0, 32], sizes = [8, 32], strides = [1, 1]} : vector<8x96xf32> to vector<8x32xf32>
    %42 = arith.truncf %41 : vector<8x32xf32> to vector<8x32xbf16>
    %c0_27 = arith.constant 0 : index
    %c64_28 = arith.constant 64 : index
    %43 = vector.load %arg27[%c0_27, %c64_28] : memref<8x256xbf16, #tpu.memory_space<vmem>>, vector<8x32xbf16>
    tpu.vector_store %arg27[%c0_27, %c64_28], %42 {strides = array<i32>} : memref<8x256xbf16, #tpu.memory_space<vmem>>, vector<8x32xbf16>,
    %44 = vector.extract_strided_slice %37 {offsets = [0, 64], sizes = [8, 32], strides = [1, 1]} : vector<8x96xf32> to vector<8x32xf32>
    %45 = arith.truncf %44 : vector<8x32xf32> to vector<8x32xbf16>
    %c0_29 = arith.constant 0 : index
    %c64_30 = arith.constant 64 : index
    %46 = vector.load %arg28[%c0_29, %c64_30] : memref<8x256xbf16, #tpu.memory_space<vmem>>, vector<8x32xbf16>
    tpu.vector_store %arg28[%c0_29, %c64_30], %45 {strides = array<i32>} : memref<8x256xbf16, #tpu.memory_space<vmem>>, vector<8x32xbf16>,
    %c0_31 = arith.constant 0 : index
    %c3 = arith.constant 3 : index
    %c0_32 = arith.constant 0 : index
    %c0_33 = arith.constant 0 : index
    %47 = vector.load %arg1[%c0_31, %c3, %c0_32, %c0_33] : memref<1x8x8x32xf32, #tpu.memory_space<vmem>>, vector<1x1x8x32xf32>
    %48 = vector.shape_cast %47 : vector<1x1x8x32xf32> to vector<8x32xf32>
    %49 = arith.truncf %48 : vector<8x32xf32> to vector<8x32xbf16>
    %cst_34 = arith.constant dense<0.000000e+00> : vector<8x96xf32>
    %50 = tpu.matmul %49, %0, %cst_34 {dimension_numbers = #tpu.dot_dimension_numbers<[1], [0], [0], [1], [0, 0, 1, 1], [], []>} : vector<8x32xbf16>, vector<32x96xbf16>, vector<8x96xf32> -> vector<8x96xf32>
    %51 = vector.broadcast %1 : vector<1x96xf32> to vector<8x96xf32>
    %52 = arith.addf %50, %51 : vector<8x96xf32>
    %53 = vector.extract_strided_slice %52 {offsets = [0, 0], sizes = [8, 32], strides = [1, 1]} : vector<8x96xf32> to vector<8x32xf32>
    %54 = arith.truncf %53 : vector<8x32xf32> to vector<8x32xbf16>
    %c0_35 = arith.constant 0 : index
    %c96 = arith.constant 96 : index
    %55 = vector.load %arg26[%c0_35, %c96] : memref<8x256xbf16, #tpu.memory_space<vmem>>, vector<8x32xbf16>
    tpu.vector_store %arg26[%c0_35, %c96], %54 {strides = array<i32>} : memref<8x256xbf16, #tpu.memory_space<vmem>>, vector<8x32xbf16>,
    %56 = vector.extract_strided_slice %52 {offsets = [0, 32], sizes = [8, 32], strides = [1, 1]} : vector<8x96xf32> to vector<8x32xf32>
    %57 = arith.truncf %56 : vector<8x32xf32> to vector<8x32xbf16>
    %c0_36 = arith.constant 0 : index
    %c96_37 = arith.constant 96 : index
    %58 = vector.load %arg27[%c0_36, %c96_37] : memref<8x256xbf16, #tpu.memory_space<vmem>>, vector<8x32xbf16>
    tpu.vector_store %arg27[%c0_36, %c96_37], %57 {strides = array<i32>} : memref<8x256xbf16, #tpu.memory_space<vmem>>, vector<8x32xbf16>,
    %59 = vector.extract_strided_slice %52 {offsets = [0, 64], sizes = [8, 32], strides = [1, 1]} : vector<8x96xf32> to vector<8x32xf32>
    %60 = arith.truncf %59 : vector<8x32xf32> to vector<8x32xbf16>
    %c0_38 = arith.constant 0 : index
    %c96_39 = arith.constant 96 : index
    %61 = vector.load %arg28[%c0_38, %c96_39] : memref<8x256xbf16, #tpu.memory_space<vmem>>, vector<8x32xbf16>
    tpu.vector_store %arg28[%c0_38, %c96_39], %60 {strides = array<i32>} : memref<8x256xbf16, #tpu.memory_space<vmem>>, vector<8x32xbf16>,
    %c0_40 = arith.constant 0 : index
    %c4 = arith.constant 4 : index
    %c0_41 = arith.constant 0 : index
    %c0_42 = arith.constant 0 : index
    %62 = vector.load %arg1[%c0_40, %c4, %c0_41, %c0_42] : memref<1x8x8x32xf32, #tpu.memory_space<vmem>>, vector<1x1x8x32xf32>
    %63 = vector.shape_cast %62 : vector<1x1x8x32xf32> to vector<8x32xf32>
    %64 = arith.truncf %63 : vector<8x32xf32> to vector<8x32xbf16>
    %cst_43 = arith.constant dense<0.000000e+00> : vector<8x96xf32>
    %65 = tpu.matmul %64, %0, %cst_43 {dimension_numbers = #tpu.dot_dimension_numbers<[1], [0], [0], [1], [0, 0, 1, 1], [], []>} : vector<8x32xbf16>, vector<32x96xbf16>, vector<8x96xf32> -> vector<8x96xf32>
    %66 = vector.broadcast %1 : vector<1x96xf32> to vector<8x96xf32>
    %67 = arith.addf %65, %66 : vector<8x96xf32>
    %68 = vector.extract_strided_slice %67 {offsets = [0, 0], sizes = [8, 32], strides = [1, 1]} : vector<8x96xf32> to vector<8x32xf32>
    %69 = arith.truncf %68 : vector<8x32xf32> to vector<8x32xbf16>
    %c0_44 = arith.constant 0 : index
    %c128 = arith.constant 128 : index
    %70 = vector.load %arg26[%c0_44, %c128] : memref<8x256xbf16, #tpu.memory_space<vmem>>, vector<8x32xbf16>
    tpu.vector_store %arg26[%c0_44, %c128], %69 {strides = array<i32>} : memref<8x256xbf16, #tpu.memory_space<vmem>>, vector<8x32xbf16>,
    %71 = vector.extract_strided_slice %67 {offsets = [0, 32], sizes = [8, 32], strides = [1, 1]} : vector<8x96xf32> to vector<8x32xf32>
    %72 = arith.truncf %71 : vector<8x32xf32> to vector<8x32xbf16>
    %c0_45 = arith.constant 0 : index
    %c128_46 = arith.constant 128 : index
    %73 = vector.load %arg27[%c0_45, %c128_46] : memref<8x256xbf16, #tpu.memory_space<vmem>>, vector<8x32xbf16>
    tpu.vector_store %arg27[%c0_45, %c128_46], %72 {strides = array<i32>} : memref<8x256xbf16, #tpu.memory_space<vmem>>, vector<8x32xbf16>,
    %74 = vector.extract_strided_slice %67 {offsets = [0, 64], sizes = [8, 32], strides = [1, 1]} : vector<8x96xf32> to vector<8x32xf32>
    %75 = arith.truncf %74 : vector<8x32xf32> to vector<8x32xbf16>
    %c0_47 = arith.constant 0 : index
    %c128_48 = arith.constant 128 : index
    %76 = vector.load %arg28[%c0_47, %c128_48] : memref<8x256xbf16, #tpu.memory_space<vmem>>, vector<8x32xbf16>
    tpu.vector_store %arg28[%c0_47, %c128_48], %75 {strides = array<i32>} : memref<8x256xbf16, #tpu.memory_space<vmem>>, vector<8x32xbf16>,
    %c0_49 = arith.constant 0 : index
    %c5 = arith.constant 5 : index
    %c0_50 = arith.constant 0 : index
    %c0_51 = arith.constant 0 : index
    %77 = vector.load %arg1[%c0_49, %c5, %c0_50, %c0_51] : memref<1x8x8x32xf32, #tpu.memory_space<vmem>>, vector<1x1x8x32xf32>
    %78 = vector.shape_cast %77 : vector<1x1x8x32xf32> to vector<8x32xf32>
    %79 = arith.truncf %78 : vector<8x32xf32> to vector<8x32xbf16>
    %cst_52 = arith.constant dense<0.000000e+00> : vector<8x96xf32>
    %80 = tpu.matmul %79, %0, %cst_52 {dimension_numbers = #tpu.dot_dimension_numbers<[1], [0], [0], [1], [0, 0, 1, 1], [], []>} : vector<8x32xbf16>, vector<32x96xbf16>, vector<8x96xf32> -> vector<8x96xf32>
    %81 = vector.broadcast %1 : vector<1x96xf32> to vector<8x96xf32>
    %82 = arith.addf %80, %81 : vector<8x96xf32>
    %83 = vector.extract_strided_slice %82 {offsets = [0, 0], sizes = [8, 32], strides = [1, 1]} : vector<8x96xf32> to vector<8x32xf32>
    %84 = arith.truncf %83 : vector<8x32xf32> to vector<8x32xbf16>
    %c0_53 = arith.constant 0 : index
    %c160 = arith.constant 160 : index
    %85 = vector.load %arg26[%c0_53, %c160] : memref<8x256xbf16, #tpu.memory_space<vmem>>, vector<8x32xbf16>
    tpu.vector_store %arg26[%c0_53, %c160], %84 {strides = array<i32>} : memref<8x256xbf16, #tpu.memory_space<vmem>>, vector<8x32xbf16>,
    %86 = vector.extract_strided_slice %82 {offsets = [0, 32], sizes = [8, 32], strides = [1, 1]} : vector<8x96xf32> to vector<8x32xf32>
    %87 = arith.truncf %86 : vector<8x32xf32> to vector<8x32xbf16>
    %c0_54 = arith.constant 0 : index
    %c160_55 = arith.constant 160 : index
    %88 = vector.load %arg27[%c0_54, %c160_55] : memref<8x256xbf16, #tpu.memory_space<vmem>>, vector<8x32xbf16>
    tpu.vector_store %arg27[%c0_54, %c160_55], %87 {strides = array<i32>} : memref<8x256xbf16, #tpu.memory_space<vmem>>, vector<8x32xbf16>,
    %89 = vector.extract_strided_slice %82 {offsets = [0, 64], sizes = [8, 32], strides = [1, 1]} : vector<8x96xf32> to vector<8x32xf32>
    %90 = arith.truncf %89 : vector<8x32xf32> to vector<8x32xbf16>
    %c0_56 = arith.constant 0 : index
    %c160_57 = arith.constant 160 : index
    %91 = vector.load %arg28[%c0_56, %c160_57] : memref<8x256xbf16, #tpu.memory_space<vmem>>, vector<8x32xbf16>
    tpu.vector_store %arg28[%c0_56, %c160_57], %90 {strides = array<i32>} : memref<8x256xbf16, #tpu.memory_space<vmem>>, vector<8x32xbf16>,
    %c0_58 = arith.constant 0 : index
    %c6 = arith.constant 6 : index
    %c0_59 = arith.constant 0 : index
    %c0_60 = arith.constant 0 : index
    %92 = vector.load %arg1[%c0_58, %c6, %c0_59, %c0_60] : memref<1x8x8x32xf32, #tpu.memory_space<vmem>>, vector<1x1x8x32xf32>
    %93 = vector.shape_cast %92 : vector<1x1x8x32xf32> to vector<8x32xf32>
    %94 = arith.truncf %93 : vector<8x32xf32> to vector<8x32xbf16>
    %cst_61 = arith.constant dense<0.000000e+00> : vector<8x96xf32>
    %95 = tpu.matmul %94, %0, %cst_61 {dimension_numbers = #tpu.dot_dimension_numbers<[1], [0], [0], [1], [0, 0, 1, 1], [], []>} : vector<8x32xbf16>, vector<32x96xbf16>, vector<8x96xf32> -> vector<8x96xf32>
    %96 = vector.broadcast %1 : vector<1x96xf32> to vector<8x96xf32>
    %97 = arith.addf %95, %96 : vector<8x96xf32>
    %98 = vector.extract_strided_slice %97 {offsets = [0, 0], sizes = [8, 32], strides = [1, 1]} : vector<8x96xf32> to vector<8x32xf32>
    %99 = arith.truncf %98 : vector<8x32xf32> to vector<8x32xbf16>
    %c0_62 = arith.constant 0 : index
    %c192 = arith.constant 192 : index
    %100 = vector.load %arg26[%c0_62, %c192] : memref<8x256xbf16, #tpu.memory_space<vmem>>, vector<8x32xbf16>
    tpu.vector_store %arg26[%c0_62, %c192], %99 {strides = array<i32>} : memref<8x256xbf16, #tpu.memory_space<vmem>>, vector<8x32xbf16>,
    %101 = vector.extract_strided_slice %97 {offsets = [0, 32], sizes = [8, 32], strides = [1, 1]} : vector<8x96xf32> to vector<8x32xf32>
    %102 = arith.truncf %101 : vector<8x32xf32> to vector<8x32xbf16>
    %c0_63 = arith.constant 0 : index
    %c192_64 = arith.constant 192 : index
    %103 = vector.load %arg27[%c0_63, %c192_64] : memref<8x256xbf16, #tpu.memory_space<vmem>>, vector<8x32xbf16>
    tpu.vector_store %arg27[%c0_63, %c192_64], %102 {strides = array<i32>} : memref<8x256xbf16, #tpu.memory_space<vmem>>, vector<8x32xbf16>,
    %104 = vector.extract_strided_slice %97 {offsets = [0, 64], sizes = [8, 32], strides = [1, 1]} : vector<8x96xf32> to vector<8x32xf32>
    %105 = arith.truncf %104 : vector<8x32xf32> to vector<8x32xbf16>
    %c0_65 = arith.constant 0 : index
    %c192_66 = arith.constant 192 : index
    %106 = vector.load %arg28[%c0_65, %c192_66] : memref<8x256xbf16, #tpu.memory_space<vmem>>, vector<8x32xbf16>
    tpu.vector_store %arg28[%c0_65, %c192_66], %105 {strides = array<i32>} : memref<8x256xbf16, #tpu.memory_space<vmem>>, vector<8x32xbf16>,
    %c0_67 = arith.constant 0 : index
    %c7 = arith.constant 7 : index
    %c0_68 = arith.constant 0 : index
    %c0_69 = arith.constant 0 : index
    %107 = vector.load %arg1[%c0_67, %c7, %c0_68, %c0_69] : memref<1x8x8x32xf32, #tpu.memory_space<vmem>>, vector<1x1x8x32xf32>
    %108 = vector.shape_cast %107 : vector<1x1x8x32xf32> to vector<8x32xf32>
    %109 = arith.truncf %108 : vector<8x32xf32> to vector<8x32xbf16>
    %cst_70 = arith.constant dense<0.000000e+00> : vector<8x96xf32>
    %110 = tpu.matmul %109, %0, %cst_70 {dimension_numbers = #tpu.dot_dimension_numbers<[1], [0], [0], [1], [0, 0, 1, 1], [], []>} : vector<8x32xbf16>, vector<32x96xbf16>, vector<8x96xf32> -> vector<8x96xf32>
    %111 = vector.broadcast %1 : vector<1x96xf32> to vector<8x96xf32>
    %112 = arith.addf %110, %111 : vector<8x96xf32>
    %113 = vector.extract_strided_slice %112 {offsets = [0, 0], sizes = [8, 32], strides = [1, 1]} : vector<8x96xf32> to vector<8x32xf32>
    %114 = arith.truncf %113 : vector<8x32xf32> to vector<8x32xbf16>
    %c0_71 = arith.constant 0 : index
    %c224 = arith.constant 224 : index
    %115 = vector.load %arg26[%c0_71, %c224] : memref<8x256xbf16, #tpu.memory_space<vmem>>, vector<8x32xbf16>
    tpu.vector_store %arg26[%c0_71, %c224], %114 {strides = array<i32>} : memref<8x256xbf16, #tpu.memory_space<vmem>>, vector<8x32xbf16>,
    %116 = vector.extract_strided_slice %112 {offsets = [0, 32], sizes = [8, 32], strides = [1, 1]} : vector<8x96xf32> to vector<8x32xf32>
    %117 = arith.truncf %116 : vector<8x32xf32> to vector<8x32xbf16>
    %c0_72 = arith.constant 0 : index
    %c224_73 = arith.constant 224 : index
    %118 = vector.load %arg27[%c0_72, %c224_73] : memref<8x256xbf16, #tpu.memory_space<vmem>>, vector<8x32xbf16>
    tpu.vector_store %arg27[%c0_72, %c224_73], %117 {strides = array<i32>} : memref<8x256xbf16, #tpu.memory_space<vmem>>, vector<8x32xbf16>,
    %119 = vector.extract_strided_slice %112 {offsets = [0, 64], sizes = [8, 32], strides = [1, 1]} : vector<8x96xf32> to vector<8x32xf32>
    %120 = arith.truncf %119 : vector<8x32xf32> to vector<8x32xbf16>
    %c0_74 = arith.constant 0 : index
    %c224_75 = arith.constant 224 : index
    %121 = vector.load %arg28[%c0_74, %c224_75] : memref<8x256xbf16, #tpu.memory_space<vmem>>, vector<8x32xbf16>
    tpu.vector_store %arg28[%c0_74, %c224_75], %120 {strides = array<i32>} : memref<8x256xbf16, #tpu.memory_space<vmem>>, vector<8x32xbf16>,
    %cst_76 = arith.constant 0.000000e+00 : f32
    %122 = vector.broadcast %cst_76 : f32 to vector<8x8xf32>
    %cst_77 = arith.constant 0.000000e+00 : f32
    %123 = vector.broadcast %cst_77 : f32 to vector<8x32xf32>
    %c0_78 = arith.constant 0 : index
    %c0_79 = arith.constant 0 : index
    %124 = vector.load %arg26[%c0_78, %c0_79] : memref<8x256xbf16, #tpu.memory_space<vmem>>, vector<8x64xbf16>
    %c0_80 = arith.constant 0 : index
    %c0_81 = arith.constant 0 : index
    %125 = vector.load %arg27[%c0_80, %c0_81] : memref<8x256xbf16, #tpu.memory_space<vmem>>, vector<8x64xbf16>
    %cst_82 = arith.constant dense<0.000000e+00> : vector<8x8xf32>
    %126 = tpu.matmul %124, %125, %cst_82 {dimension_numbers = #tpu.dot_dimension_numbers<[1], [1], [0], [0], [0, 0, 1, 0], [], []>} : vector<8x64xbf16>, vector<8x64xbf16>, vector<8x8xf32> -> vector<8x8xf32>
    %cst_83 = arith.constant 1.250000e-01 : f32
    %127 = vector.broadcast %cst_83 : f32 to vector<8x8xf32>
    %128 = arith.mulf %126, %127 : vector<8x8xf32>
    %cst_84 = arith.constant dense<0xFF800000> : vector<8xf32>
    %129 = vector.multi_reduction <maximumf>, %128, %cst_84 [1] : vector<8x8xf32> to vector<8xf32>
    %130 = vector.shape_cast %129 : vector<8xf32> to vector<8x1xf32>
    %131 = vector.broadcast %130 : vector<8x1xf32> to vector<8x8xf32>
    %132 = arith.subf %128, %131 : vector<8x8xf32>
    %133 = math.exp %132 : vector<8x8xf32>
    %cst_85 = arith.constant dense<0.000000e+00> : vector<8xf32>
    %134 = vector.multi_reduction <add>, %133, %cst_85 [1] : vector<8x8xf32> to vector<8xf32>
    %135 = vector.shape_cast %134 : vector<8xf32> to vector<8x1xf32>
    %136 = tpu.reciprocal %135 {approx = true} : vector<8x1xf32> -> vector<8x1xf32>
    %137 = vector.broadcast %136 : vector<8x1xf32> to vector<8x8xf32>
    %138 = arith.mulf %133, %137 : vector<8x8xf32>
    %139 = arith.addf %122, %138 : vector<8x8xf32>
    %140 = arith.truncf %138 : vector<8x8xf32> to vector<8x8xbf16>
    %c0_86 = arith.constant 0 : index
    %c0_87 = arith.constant 0 : index
    %141 = vector.load %arg28[%c0_86, %c0_87] : memref<8x256xbf16, #tpu.memory_space<vmem>>, vector<8x64xbf16>
    %cst_88 = arith.constant dense<0.000000e+00> : vector<8x64xf32>
    %142 = tpu.matmul %140, %141, %cst_88 {dimension_numbers = #tpu.dot_dimension_numbers<[1], [0], [0], [1], [0, 0, 1, 1], [], []>} : vector<8x8xbf16>, vector<8x64xbf16>, vector<8x64xf32> -> vector<8x64xf32>
    %143 = arith.truncf %142 : vector<8x64xf32> to vector<8x64xbf16>
    %c0_89 = arith.constant 0 : index
    %c0_90 = arith.constant 0 : index
    %144 = vector.load %arg4[%c0_89, %c0_90] : memref<256x32xbf16, #tpu.memory_space<vmem>>, vector<64x32xbf16>
    %cst_91 = arith.constant dense<0.000000e+00> : vector<8x32xf32>
    %145 = tpu.matmul %143, %144, %cst_91 {dimension_numbers = #tpu.dot_dimension_numbers<[1], [0], [0], [1], [0, 0, 1, 1], [], []>} : vector<8x64xbf16>, vector<64x32xbf16>, vector<8x32xf32> -> vector<8x32xf32>
    %146 = arith.addf %123, %145 : vector<8x32xf32>
    %c0_92 = arith.constant 0 : index
    %c64_93 = arith.constant 64 : index
    %147 = vector.load %arg26[%c0_92, %c64_93] : memref<8x256xbf16, #tpu.memory_space<vmem>>, vector<8x64xbf16>
    %c0_94 = arith.constant 0 : index
    %c64_95 = arith.constant 64 : index
    %148 = vector.load %arg27[%c0_94, %c64_95] : memref<8x256xbf16, #tpu.memory_space<vmem>>, vector<8x64xbf16>
    %cst_96 = arith.constant dense<0.000000e+00> : vector<8x8xf32>
    %149 = tpu.matmul %147, %148, %cst_96 {dimension_numbers = #tpu.dot_dimension_numbers<[1], [1], [0], [0], [0, 0, 1, 0], [], []>} : vector<8x64xbf16>, vector<8x64xbf16>, vector<8x8xf32> -> vector<8x8xf32>
    %cst_97 = arith.constant 1.250000e-01 : f32
    %150 = vector.broadcast %cst_97 : f32 to vector<8x8xf32>
    %151 = arith.mulf %149, %150 : vector<8x8xf32>
    %cst_98 = arith.constant dense<0xFF800000> : vector<8xf32>
    %152 = vector.multi_reduction <maximumf>, %151, %cst_98 [1] : vector<8x8xf32> to vector<8xf32>
    %153 = vector.shape_cast %152 : vector<8xf32> to vector<8x1xf32>
    %154 = vector.broadcast %153 : vector<8x1xf32> to vector<8x8xf32>
    %155 = arith.subf %151, %154 : vector<8x8xf32>
    %156 = math.exp %155 : vector<8x8xf32>
    %cst_99 = arith.constant dense<0.000000e+00> : vector<8xf32>
    %157 = vector.multi_reduction <add>, %156, %cst_99 [1] : vector<8x8xf32> to vector<8xf32>
    %158 = vector.shape_cast %157 : vector<8xf32> to vector<8x1xf32>
    %159 = tpu.reciprocal %158 {approx = true} : vector<8x1xf32> -> vector<8x1xf32>
    %160 = vector.broadcast %159 : vector<8x1xf32> to vector<8x8xf32>
    %161 = arith.mulf %156, %160 : vector<8x8xf32>
    %162 = arith.addf %139, %161 : vector<8x8xf32>
    %163 = arith.truncf %161 : vector<8x8xf32> to vector<8x8xbf16>
    %c0_100 = arith.constant 0 : index
    %c64_101 = arith.constant 64 : index
    %164 = vector.load %arg28[%c0_100, %c64_101] : memref<8x256xbf16, #tpu.memory_space<vmem>>, vector<8x64xbf16>
    %cst_102 = arith.constant dense<0.000000e+00> : vector<8x64xf32>
    %165 = tpu.matmul %163, %164, %cst_102 {dimension_numbers = #tpu.dot_dimension_numbers<[1], [0], [0], [1], [0, 0, 1, 1], [], []>} : vector<8x8xbf16>, vector<8x64xbf16>, vector<8x64xf32> -> vector<8x64xf32>
    %166 = arith.truncf %165 : vector<8x64xf32> to vector<8x64xbf16>
    %c64_103 = arith.constant 64 : index
    %c0_104 = arith.constant 0 : index
    %167 = vector.load %arg4[%c64_103, %c0_104] : memref<256x32xbf16, #tpu.memory_space<vmem>>, vector<64x32xbf16>
    %cst_105 = arith.constant dense<0.000000e+00> : vector<8x32xf32>
    %168 = tpu.matmul %166, %167, %cst_105 {dimension_numbers = #tpu.dot_dimension_numbers<[1], [0], [0], [1], [0, 0, 1, 1], [], []>} : vector<8x64xbf16>, vector<64x32xbf16>, vector<8x32xf32> -> vector<8x32xf32>
    %169 = arith.addf %146, %168 : vector<8x32xf32>
    %c0_106 = arith.constant 0 : index
    %c128_107 = arith.constant 128 : index
    %170 = vector.load %arg26[%c0_106, %c128_107] : memref<8x256xbf16, #tpu.memory_space<vmem>>, vector<8x64xbf16>
    %c0_108 = arith.constant 0 : index
    %c128_109 = arith.constant 128 : index
    %171 = vector.load %arg27[%c0_108, %c128_109] : memref<8x256xbf16, #tpu.memory_space<vmem>>, vector<8x64xbf16>
    %cst_110 = arith.constant dense<0.000000e+00> : vector<8x8xf32>
    %172 = tpu.matmul %170, %171, %cst_110 {dimension_numbers = #tpu.dot_dimension_numbers<[1], [1], [0], [0], [0, 0, 1, 0], [], []>} : vector<8x64xbf16>, vector<8x64xbf16>, vector<8x8xf32> -> vector<8x8xf32>
    %cst_111 = arith.constant 1.250000e-01 : f32
    %173 = vector.broadcast %cst_111 : f32 to vector<8x8xf32>
    %174 = arith.mulf %172, %173 : vector<8x8xf32>
    %cst_112 = arith.constant dense<0xFF800000> : vector<8xf32>
    %175 = vector.multi_reduction <maximumf>, %174, %cst_112 [1] : vector<8x8xf32> to vector<8xf32>
    %176 = vector.shape_cast %175 : vector<8xf32> to vector<8x1xf32>
    %177 = vector.broadcast %176 : vector<8x1xf32> to vector<8x8xf32>
    %178 = arith.subf %174, %177 : vector<8x8xf32>
    %179 = math.exp %178 : vector<8x8xf32>
    %cst_113 = arith.constant dense<0.000000e+00> : vector<8xf32>
    %180 = vector.multi_reduction <add>, %179, %cst_113 [1] : vector<8x8xf32> to vector<8xf32>
    %181 = vector.shape_cast %180 : vector<8xf32> to vector<8x1xf32>
    %182 = tpu.reciprocal %181 {approx = true} : vector<8x1xf32> -> vector<8x1xf32>
    %183 = vector.broadcast %182 : vector<8x1xf32> to vector<8x8xf32>
    %184 = arith.mulf %179, %183 : vector<8x8xf32>
    %185 = arith.addf %162, %184 : vector<8x8xf32>
    %186 = arith.truncf %184 : vector<8x8xf32> to vector<8x8xbf16>
    %c0_114 = arith.constant 0 : index
    %c128_115 = arith.constant 128 : index
    %187 = vector.load %arg28[%c0_114, %c128_115] : memref<8x256xbf16, #tpu.memory_space<vmem>>, vector<8x64xbf16>
    %cst_116 = arith.constant dense<0.000000e+00> : vector<8x64xf32>
    %188 = tpu.matmul %186, %187, %cst_116 {dimension_numbers = #tpu.dot_dimension_numbers<[1], [0], [0], [1], [0, 0, 1, 1], [], []>} : vector<8x8xbf16>, vector<8x64xbf16>, vector<8x64xf32> -> vector<8x64xf32>
    %189 = arith.truncf %188 : vector<8x64xf32> to vector<8x64xbf16>
    %c128_117 = arith.constant 128 : index
    %c0_118 = arith.constant 0 : index
    %190 = vector.load %arg4[%c128_117, %c0_118] : memref<256x32xbf16, #tpu.memory_space<vmem>>, vector<64x32xbf16>
    %cst_119 = arith.constant dense<0.000000e+00> : vector<8x32xf32>
    %191 = tpu.matmul %189, %190, %cst_119 {dimension_numbers = #tpu.dot_dimension_numbers<[1], [0], [0], [1], [0, 0, 1, 1], [], []>} : vector<8x64xbf16>, vector<64x32xbf16>, vector<8x32xf32> -> vector<8x32xf32>
    %192 = arith.addf %169, %191 : vector<8x32xf32>
    %c0_120 = arith.constant 0 : index
    %c192_121 = arith.constant 192 : index
    %193 = vector.load %arg26[%c0_120, %c192_121] : memref<8x256xbf16, #tpu.memory_space<vmem>>, vector<8x64xbf16>
    %c0_122 = arith.constant 0 : index
    %c192_123 = arith.constant 192 : index
    %194 = vector.load %arg27[%c0_122, %c192_123] : memref<8x256xbf16, #tpu.memory_space<vmem>>, vector<8x64xbf16>
    %cst_124 = arith.constant dense<0.000000e+00> : vector<8x8xf32>
    %195 = tpu.matmul %193, %194, %cst_124 {dimension_numbers = #tpu.dot_dimension_numbers<[1], [1], [0], [0], [0, 0, 1, 0], [], []>} : vector<8x64xbf16>, vector<8x64xbf16>, vector<8x8xf32> -> vector<8x8xf32>
    %cst_125 = arith.constant 1.250000e-01 : f32
    %196 = vector.broadcast %cst_125 : f32 to vector<8x8xf32>
    %197 = arith.mulf %195, %196 : vector<8x8xf32>
    %cst_126 = arith.constant dense<0xFF800000> : vector<8xf32>
    %198 = vector.multi_reduction <maximumf>, %197, %cst_126 [1] : vector<8x8xf32> to vector<8xf32>
    %199 = vector.shape_cast %198 : vector<8xf32> to vector<8x1xf32>
    %200 = vector.broadcast %199 : vector<8x1xf32> to vector<8x8xf32>
    %201 = arith.subf %197, %200 : vector<8x8xf32>
    %202 = math.exp %201 : vector<8x8xf32>
    %cst_127 = arith.constant dense<0.000000e+00> : vector<8xf32>
    %203 = vector.multi_reduction <add>, %202, %cst_127 [1] : vector<8x8xf32> to vector<8xf32>
    %204 = vector.shape_cast %203 : vector<8xf32> to vector<8x1xf32>
    %205 = tpu.reciprocal %204 {approx = true} : vector<8x1xf32> -> vector<8x1xf32>
    %206 = vector.broadcast %205 : vector<8x1xf32> to vector<8x8xf32>
    %207 = arith.mulf %202, %206 : vector<8x8xf32>
    %208 = arith.addf %185, %207 : vector<8x8xf32>
    %209 = arith.truncf %207 : vector<8x8xf32> to vector<8x8xbf16>
    %c0_128 = arith.constant 0 : index
    %c192_129 = arith.constant 192 : index
    %210 = vector.load %arg28[%c0_128, %c192_129] : memref<8x256xbf16, #tpu.memory_space<vmem>>, vector<8x64xbf16>
    %cst_130 = arith.constant dense<0.000000e+00> : vector<8x64xf32>
    %211 = tpu.matmul %209, %210, %cst_130 {dimension_numbers = #tpu.dot_dimension_numbers<[1], [0], [0], [1], [0, 0, 1, 1], [], []>} : vector<8x8xbf16>, vector<8x64xbf16>, vector<8x64xf32> -> vector<8x64xf32>
    %212 = arith.truncf %211 : vector<8x64xf32> to vector<8x64xbf16>
    %c192_131 = arith.constant 192 : index
    %c0_132 = arith.constant 0 : index
    %213 = vector.load %arg4[%c192_131, %c0_132] : memref<256x32xbf16, #tpu.memory_space<vmem>>, vector<64x32xbf16>
    %cst_133 = arith.constant dense<0.000000e+00> : vector<8x32xf32>
    %214 = tpu.matmul %212, %213, %cst_133 {dimension_numbers = #tpu.dot_dimension_numbers<[1], [0], [0], [1], [0, 0, 1, 1], [], []>} : vector<8x64xbf16>, vector<64x32xbf16>, vector<8x32xf32> -> vector<8x32xf32>
    %215 = arith.addf %192, %214 : vector<8x32xf32>
    %c0_134 = arith.constant 0 : index
    %c0_135 = arith.constant 0 : index
    %216 = vector.load %arg5[%c0_134, %c0_135] : memref<1x32xf32, #tpu.memory_space<vmem>>, vector<1x32xf32>
    %217 = vector.broadcast %216 : vector<1x32xf32> to vector<8x32xf32>
    %218 = arith.addf %215, %217 : vector<8x32xf32>
    %c0_136 = arith.constant 0 : index
    %c0_137 = arith.constant 0 : index
    %c0_138 = arith.constant 0 : index
    %c0_139 = arith.constant 0 : index
    %219 = vector.load %arg1[%c0_136, %c0_137, %c0_138, %c0_139] : memref<1x8x8x32xf32, #tpu.memory_space<vmem>>, vector<1x1x8x32xf32>
    %220 = vector.shape_cast %219 : vector<1x1x8x32xf32> to vector<8x32xf32>
    %cst_140 = arith.constant 2.500000e-01 : f32
    %221 = vector.broadcast %cst_140 : f32 to vector<8x8xf32>
    %222 = arith.mulf %208, %221 : vector<8x8xf32>
    %223 = arith.truncf %222 : vector<8x8xf32> to vector<8x8xbf16>
    %224 = arith.truncf %220 : vector<8x32xf32> to vector<8x32xbf16>
    %cst_141 = arith.constant dense<0.000000e+00> : vector<8x32xf32>
    %225 = tpu.matmul %223, %224, %cst_141 {dimension_numbers = #tpu.dot_dimension_numbers<[1], [0], [0], [1], [0, 0, 1, 1], [], []>} : vector<8x8xbf16>, vector<8x32xbf16>, vector<8x32xf32> -> vector<8x32xf32>
    %226 = arith.addf %225, %220 : vector<8x32xf32>
    %c0_142 = arith.constant 0 : index
    %c0_143 = arith.constant 0 : index
    %227 = vector.load %arg6[%c0_142, %c0_143] : memref<1x32xf32, #tpu.memory_space<vmem>>, vector<1x32xf32>
    %c0_144 = arith.constant 0 : index
    %c0_145 = arith.constant 0 : index
    %228 = vector.load %arg7[%c0_144, %c0_145] : memref<1x32xf32, #tpu.memory_space<vmem>>, vector<1x32xf32>
    %cst_146 = arith.constant dense<0.000000e+00> : vector<8xf32>
    %229 = vector.multi_reduction <add>, %226, %cst_146 [1] : vector<8x32xf32> to vector<8xf32>
    %230 = vector.shape_cast %229 : vector<8xf32> to vector<8x1xf32>
    %cst_147 = arith.constant 3.200000e+01 : f32
    %231 = vector.broadcast %cst_147 : f32 to vector<8x1xf32>
    %232 = arith.divf %230, %231 : vector<8x1xf32>
    %233 = vector.broadcast %232 : vector<8x1xf32> to vector<8x32xf32>
    %234 = arith.subf %226, %233 : vector<8x32xf32>
    %235 = arith.mulf %234, %234 : vector<8x32xf32>
    %cst_148 = arith.constant dense<0.000000e+00> : vector<8xf32>
    %236 = vector.multi_reduction <add>, %235, %cst_148 [1] : vector<8x32xf32> to vector<8xf32>
    %237 = vector.shape_cast %236 : vector<8xf32> to vector<8x1xf32>
    %cst_149 = arith.constant 3.200000e+01 : f32
    %238 = vector.broadcast %cst_149 : f32 to vector<8x1xf32>
    %239 = arith.divf %237, %238 : vector<8x1xf32>
    %cst_150 = arith.constant 9.99999974E-6 : f32
    %240 = vector.broadcast %cst_150 : f32 to vector<8x1xf32>
    %241 = arith.addf %239, %240 : vector<8x1xf32>
    %242 = math.rsqrt %241 : vector<8x1xf32>
    %243 = vector.broadcast %242 : vector<8x1xf32> to vector<8x32xf32>
    %244 = arith.mulf %234, %243 : vector<8x32xf32>
    %245 = vector.broadcast %227 : vector<1x32xf32> to vector<8x32xf32>
    %246 = arith.mulf %244, %245 : vector<8x32xf32>
    %247 = vector.broadcast %228 : vector<1x32xf32> to vector<8x32xf32>
    %248 = arith.addf %246, %247 : vector<8x32xf32>
    %c0_151 = arith.constant 0 : index
    %c0_152 = arith.constant 0 : index
    %249 = vector.load %arg8[%c0_151, %c0_152] : memref<32x32xbf16, #tpu.memory_space<vmem>>, vector<32x32xbf16>
    %c0_153 = arith.constant 0 : index
    %c0_154 = arith.constant 0 : index
    %250 = vector.load %arg9[%c0_153, %c0_154] : memref<1x32xf32, #tpu.memory_space<vmem>>, vector<1x32xf32>
    %c0_155 = arith.constant 0 : index
    %c0_156 = arith.constant 0 : index
    %251 = vector.load %arg10[%c0_155, %c0_156] : memref<1x32xf32, #tpu.memory_space<vmem>>, vector<1x32xf32>
    %c0_157 = arith.constant 0 : index
    %c0_158 = arith.constant 0 : index
    %252 = vector.load %arg11[%c0_157, %c0_158] : memref<1x32xf32, #tpu.memory_space<vmem>>, vector<1x32xf32>
    %cst_159 = arith.constant 0.000000e+00 : f32
    %253 = vector.broadcast %cst_159 : f32 to vector<8x32xf32>
    %c0_160 = arith.constant 0 : index
    %c0_161 = arith.constant 0 : index
    %c0_162 = arith.constant 0 : index
    %c0_163 = arith.constant 0 : index
    %254 = vector.load %arg1[%c0_160, %c0_161, %c0_162, %c0_163] : memref<1x8x8x32xf32, #tpu.memory_space<vmem>>, vector<1x1x8x32xf32>
    %255 = vector.shape_cast %254 : vector<1x1x8x32xf32> to vector<8x32xf32>
    %256 = arith.addf %255, %218 : vector<8x32xf32>
    %257 = arith.truncf %256 : vector<8x32xf32> to vector<8x32xbf16>
    %cst_164 = arith.constant dense<0.000000e+00> : vector<8x32xf32>
    %258 = tpu.matmul %257, %249, %cst_164 {dimension_numbers = #tpu.dot_dimension_numbers<[1], [0], [0], [1], [0, 0, 1, 1], [], []>} : vector<8x32xbf16>, vector<32x32xbf16>, vector<8x32xf32> -> vector<8x32xf32>
    %259 = vector.broadcast %250 : vector<1x32xf32> to vector<8x32xf32>
    %260 = arith.addf %258, %259 : vector<8x32xf32>
    %261 = arith.addf %260, %256 : vector<8x32xf32>
    %cst_165 = arith.constant dense<0.000000e+00> : vector<8xf32>
    %262 = vector.multi_reduction <add>, %261, %cst_165 [1] : vector<8x32xf32> to vector<8xf32>
    %263 = vector.shape_cast %262 : vector<8xf32> to vector<8x1xf32>
    %cst_166 = arith.constant 3.200000e+01 : f32
    %264 = vector.broadcast %cst_166 : f32 to vector<8x1xf32>
    %265 = arith.divf %263, %264 : vector<8x1xf32>
    %266 = vector.broadcast %265 : vector<8x1xf32> to vector<8x32xf32>
    %267 = arith.subf %261, %266 : vector<8x32xf32>
    %268 = arith.mulf %267, %267 : vector<8x32xf32>
    %cst_167 = arith.constant dense<0.000000e+00> : vector<8xf32>
    %269 = vector.multi_reduction <add>, %268, %cst_167 [1] : vector<8x32xf32> to vector<8xf32>
    %270 = vector.shape_cast %269 : vector<8xf32> to vector<8x1xf32>
    %cst_168 = arith.constant 3.200000e+01 : f32
    %271 = vector.broadcast %cst_168 : f32 to vector<8x1xf32>
    %272 = arith.divf %270, %271 : vector<8x1xf32>
    %cst_169 = arith.constant 9.99999974E-6 : f32
    %273 = vector.broadcast %cst_169 : f32 to vector<8x1xf32>
    %274 = arith.addf %272, %273 : vector<8x1xf32>
    %275 = math.rsqrt %274 : vector<8x1xf32>
    %276 = vector.broadcast %275 : vector<8x1xf32> to vector<8x32xf32>
    %277 = arith.mulf %267, %276 : vector<8x32xf32>
    %278 = vector.broadcast %251 : vector<1x32xf32> to vector<8x32xf32>
    %279 = arith.mulf %277, %278 : vector<8x32xf32>
    %280 = vector.broadcast %252 : vector<1x32xf32> to vector<8x32xf32>
    %281 = arith.addf %279, %280 : vector<8x32xf32>
    %282 = arith.addf %253, %281 : vector<8x32xf32>
    %c0_170 = arith.constant 0 : index
    %c1_171 = arith.constant 1 : index
    %c0_172 = arith.constant 0 : index
    %c0_173 = arith.constant 0 : index
    %283 = vector.load %arg1[%c0_170, %c1_171, %c0_172, %c0_173] : memref<1x8x8x32xf32, #tpu.memory_space<vmem>>, vector<1x1x8x32xf32>
    %284 = vector.shape_cast %283 : vector<1x1x8x32xf32> to vector<8x32xf32>
    %285 = arith.addf %284, %218 : vector<8x32xf32>
    %286 = arith.truncf %285 : vector<8x32xf32> to vector<8x32xbf16>
    %cst_174 = arith.constant dense<0.000000e+00> : vector<8x32xf32>
    %287 = tpu.matmul %286, %249, %cst_174 {dimension_numbers = #tpu.dot_dimension_numbers<[1], [0], [0], [1], [0, 0, 1, 1], [], []>} : vector<8x32xbf16>, vector<32x32xbf16>, vector<8x32xf32> -> vector<8x32xf32>
    %288 = vector.broadcast %250 : vector<1x32xf32> to vector<8x32xf32>
    %289 = arith.addf %287, %288 : vector<8x32xf32>
    %290 = arith.addf %289, %285 : vector<8x32xf32>
    %cst_175 = arith.constant dense<0.000000e+00> : vector<8xf32>
    %291 = vector.multi_reduction <add>, %290, %cst_175 [1] : vector<8x32xf32> to vector<8xf32>
    %292 = vector.shape_cast %291 : vector<8xf32> to vector<8x1xf32>
    %cst_176 = arith.constant 3.200000e+01 : f32
    %293 = vector.broadcast %cst_176 : f32 to vector<8x1xf32>
    %294 = arith.divf %292, %293 : vector<8x1xf32>
    %295 = vector.broadcast %294 : vector<8x1xf32> to vector<8x32xf32>
    %296 = arith.subf %290, %295 : vector<8x32xf32>
    %297 = arith.mulf %296, %296 : vector<8x32xf32>
    %cst_177 = arith.constant dense<0.000000e+00> : vector<8xf32>
    %298 = vector.multi_reduction <add>, %297, %cst_177 [1] : vector<8x32xf32> to vector<8xf32>
    %299 = vector.shape_cast %298 : vector<8xf32> to vector<8x1xf32>
    %cst_178 = arith.constant 3.200000e+01 : f32
    %300 = vector.broadcast %cst_178 : f32 to vector<8x1xf32>
    %301 = arith.divf %299, %300 : vector<8x1xf32>
    %cst_179 = arith.constant 9.99999974E-6 : f32
    %302 = vector.broadcast %cst_179 : f32 to vector<8x1xf32>
    %303 = arith.addf %301, %302 : vector<8x1xf32>
    %304 = math.rsqrt %303 : vector<8x1xf32>
    %305 = vector.broadcast %304 : vector<8x1xf32> to vector<8x32xf32>
    %306 = arith.mulf %296, %305 : vector<8x32xf32>
    %307 = vector.broadcast %251 : vector<1x32xf32> to vector<8x32xf32>
    %308 = arith.mulf %306, %307 : vector<8x32xf32>
    %309 = vector.broadcast %252 : vector<1x32xf32> to vector<8x32xf32>
    %310 = arith.addf %308, %309 : vector<8x32xf32>
    %311 = arith.addf %282, %310 : vector<8x32xf32>
    %c0_180 = arith.constant 0 : index
    %c2_181 = arith.constant 2 : index
    %c0_182 = arith.constant 0 : index
    %c0_183 = arith.constant 0 : index
    %312 = vector.load %arg1[%c0_180, %c2_181, %c0_182, %c0_183] : memref<1x8x8x32xf32, #tpu.memory_space<vmem>>, vector<1x1x8x32xf32>
    %313 = vector.shape_cast %312 : vector<1x1x8x32xf32> to vector<8x32xf32>
    %314 = arith.addf %313, %218 : vector<8x32xf32>
    %315 = arith.truncf %314 : vector<8x32xf32> to vector<8x32xbf16>
    %cst_184 = arith.constant dense<0.000000e+00> : vector<8x32xf32>
    %316 = tpu.matmul %315, %249, %cst_184 {dimension_numbers = #tpu.dot_dimension_numbers<[1], [0], [0], [1], [0, 0, 1, 1], [], []>} : vector<8x32xbf16>, vector<32x32xbf16>, vector<8x32xf32> -> vector<8x32xf32>
    %317 = vector.broadcast %250 : vector<1x32xf32> to vector<8x32xf32>
    %318 = arith.addf %316, %317 : vector<8x32xf32>
    %319 = arith.addf %318, %314 : vector<8x32xf32>
    %cst_185 = arith.constant dense<0.000000e+00> : vector<8xf32>
    %320 = vector.multi_reduction <add>, %319, %cst_185 [1] : vector<8x32xf32> to vector<8xf32>
    %321 = vector.shape_cast %320 : vector<8xf32> to vector<8x1xf32>
    %cst_186 = arith.constant 3.200000e+01 : f32
    %322 = vector.broadcast %cst_186 : f32 to vector<8x1xf32>
    %323 = arith.divf %321, %322 : vector<8x1xf32>
    %324 = vector.broadcast %323 : vector<8x1xf32> to vector<8x32xf32>
    %325 = arith.subf %319, %324 : vector<8x32xf32>
    %326 = arith.mulf %325, %325 : vector<8x32xf32>
    %cst_187 = arith.constant dense<0.000000e+00> : vector<8xf32>
    %327 = vector.multi_reduction <add>, %326, %cst_187 [1] : vector<8x32xf32> to vector<8xf32>
    %328 = vector.shape_cast %327 : vector<8xf32> to vector<8x1xf32>
    %cst_188 = arith.constant 3.200000e+01 : f32
    %329 = vector.broadcast %cst_188 : f32 to vector<8x1xf32>
    %330 = arith.divf %328, %329 : vector<8x1xf32>
    %cst_189 = arith.constant 9.99999974E-6 : f32
    %331 = vector.broadcast %cst_189 : f32 to vector<8x1xf32>
    %332 = arith.addf %330, %331 : vector<8x1xf32>
    %333 = math.rsqrt %332 : vector<8x1xf32>
    %334 = vector.broadcast %333 : vector<8x1xf32> to vector<8x32xf32>
    %335 = arith.mulf %325, %334 : vector<8x32xf32>
    %336 = vector.broadcast %251 : vector<1x32xf32> to vector<8x32xf32>
    %337 = arith.mulf %335, %336 : vector<8x32xf32>
    %338 = vector.broadcast %252 : vector<1x32xf32> to vector<8x32xf32>
    %339 = arith.addf %337, %338 : vector<8x32xf32>
    %340 = arith.addf %311, %339 : vector<8x32xf32>
    %c0_190 = arith.constant 0 : index
    %c3_191 = arith.constant 3 : index
    %c0_192 = arith.constant 0 : index
    %c0_193 = arith.constant 0 : index
    %341 = vector.load %arg1[%c0_190, %c3_191, %c0_192, %c0_193] : memref<1x8x8x32xf32, #tpu.memory_space<vmem>>, vector<1x1x8x32xf32>
    %342 = vector.shape_cast %341 : vector<1x1x8x32xf32> to vector<8x32xf32>
    %343 = arith.addf %342, %218 : vector<8x32xf32>
    %344 = arith.truncf %343 : vector<8x32xf32> to vector<8x32xbf16>
    %cst_194 = arith.constant dense<0.000000e+00> : vector<8x32xf32>
    %345 = tpu.matmul %344, %249, %cst_194 {dimension_numbers = #tpu.dot_dimension_numbers<[1], [0], [0], [1], [0, 0, 1, 1], [], []>} : vector<8x32xbf16>, vector<32x32xbf16>, vector<8x32xf32> -> vector<8x32xf32>
    %346 = vector.broadcast %250 : vector<1x32xf32> to vector<8x32xf32>
    %347 = arith.addf %345, %346 : vector<8x32xf32>
    %348 = arith.addf %347, %343 : vector<8x32xf32>
    %cst_195 = arith.constant dense<0.000000e+00> : vector<8xf32>
    %349 = vector.multi_reduction <add>, %348, %cst_195 [1] : vector<8x32xf32> to vector<8xf32>
    %350 = vector.shape_cast %349 : vector<8xf32> to vector<8x1xf32>
    %cst_196 = arith.constant 3.200000e+01 : f32
    %351 = vector.broadcast %cst_196 : f32 to vector<8x1xf32>
    %352 = arith.divf %350, %351 : vector<8x1xf32>
    %353 = vector.broadcast %352 : vector<8x1xf32> to vector<8x32xf32>
    %354 = arith.subf %348, %353 : vector<8x32xf32>
    %355 = arith.mulf %354, %354 : vector<8x32xf32>
    %cst_197 = arith.constant dense<0.000000e+00> : vector<8xf32>
    %356 = vector.multi_reduction <add>, %355, %cst_197 [1] : vector<8x32xf32> to vector<8xf32>
    %357 = vector.shape_cast %356 : vector<8xf32> to vector<8x1xf32>
    %cst_198 = arith.constant 3.200000e+01 : f32
    %358 = vector.broadcast %cst_198 : f32 to vector<8x1xf32>
    %359 = arith.divf %357, %358 : vector<8x1xf32>
    %cst_199 = arith.constant 9.99999974E-6 : f32
    %360 = vector.broadcast %cst_199 : f32 to vector<8x1xf32>
    %361 = arith.addf %359, %360 : vector<8x1xf32>
    %362 = math.rsqrt %361 : vector<8x1xf32>
    %363 = vector.broadcast %362 : vector<8x1xf32> to vector<8x32xf32>
    %364 = arith.mulf %354, %363 : vector<8x32xf32>
    %365 = vector.broadcast %251 : vector<1x32xf32> to vector<8x32xf32>
    %366 = arith.mulf %364, %365 : vector<8x32xf32>
    %367 = vector.broadcast %252 : vector<1x32xf32> to vector<8x32xf32>
    %368 = arith.addf %366, %367 : vector<8x32xf32>
    %369 = arith.addf %340, %368 : vector<8x32xf32>
    %c0_200 = arith.constant 0 : index
    %c4_201 = arith.constant 4 : index
    %c0_202 = arith.constant 0 : index
    %c0_203 = arith.constant 0 : index
    %370 = vector.load %arg1[%c0_200, %c4_201, %c0_202, %c0_203] : memref<1x8x8x32xf32, #tpu.memory_space<vmem>>, vector<1x1x8x32xf32>
    %371 = vector.shape_cast %370 : vector<1x1x8x32xf32> to vector<8x32xf32>
    %372 = arith.addf %371, %218 : vector<8x32xf32>
    %373 = arith.truncf %372 : vector<8x32xf32> to vector<8x32xbf16>
    %cst_204 = arith.constant dense<0.000000e+00> : vector<8x32xf32>
    %374 = tpu.matmul %373, %249, %cst_204 {dimension_numbers = #tpu.dot_dimension_numbers<[1], [0], [0], [1], [0, 0, 1, 1], [], []>} : vector<8x32xbf16>, vector<32x32xbf16>, vector<8x32xf32> -> vector<8x32xf32>
    %375 = vector.broadcast %250 : vector<1x32xf32> to vector<8x32xf32>
    %376 = arith.addf %374, %375 : vector<8x32xf32>
    %377 = arith.addf %376, %372 : vector<8x32xf32>
    %cst_205 = arith.constant dense<0.000000e+00> : vector<8xf32>
    %378 = vector.multi_reduction <add>, %377, %cst_205 [1] : vector<8x32xf32> to vector<8xf32>
    %379 = vector.shape_cast %378 : vector<8xf32> to vector<8x1xf32>
    %cst_206 = arith.constant 3.200000e+01 : f32
    %380 = vector.broadcast %cst_206 : f32 to vector<8x1xf32>
    %381 = arith.divf %379, %380 : vector<8x1xf32>
    %382 = vector.broadcast %381 : vector<8x1xf32> to vector<8x32xf32>
    %383 = arith.subf %377, %382 : vector<8x32xf32>
    %384 = arith.mulf %383, %383 : vector<8x32xf32>
    %cst_207 = arith.constant dense<0.000000e+00> : vector<8xf32>
    %385 = vector.multi_reduction <add>, %384, %cst_207 [1] : vector<8x32xf32> to vector<8xf32>
    %386 = vector.shape_cast %385 : vector<8xf32> to vector<8x1xf32>
    %cst_208 = arith.constant 3.200000e+01 : f32
    %387 = vector.broadcast %cst_208 : f32 to vector<8x1xf32>
    %388 = arith.divf %386, %387 : vector<8x1xf32>
    %cst_209 = arith.constant 9.99999974E-6 : f32
    %389 = vector.broadcast %cst_209 : f32 to vector<8x1xf32>
    %390 = arith.addf %388, %389 : vector<8x1xf32>
    %391 = math.rsqrt %390 : vector<8x1xf32>
    %392 = vector.broadcast %391 : vector<8x1xf32> to vector<8x32xf32>
    %393 = arith.mulf %383, %392 : vector<8x32xf32>
    %394 = vector.broadcast %251 : vector<1x32xf32> to vector<8x32xf32>
    %395 = arith.mulf %393, %394 : vector<8x32xf32>
    %396 = vector.broadcast %252 : vector<1x32xf32> to vector<8x32xf32>
    %397 = arith.addf %395, %396 : vector<8x32xf32>
    %398 = arith.addf %369, %397 : vector<8x32xf32>
    %c0_210 = arith.constant 0 : index
    %c5_211 = arith.constant 5 : index
    %c0_212 = arith.constant 0 : index
    %c0_213 = arith.constant 0 : index
    %399 = vector.load %arg1[%c0_210, %c5_211, %c0_212, %c0_213] : memref<1x8x8x32xf32, #tpu.memory_space<vmem>>, vector<1x1x8x32xf32>
    %400 = vector.shape_cast %399 : vector<1x1x8x32xf32> to vector<8x32xf32>
    %401 = arith.addf %400, %218 : vector<8x32xf32>
    %402 = arith.truncf %401 : vector<8x32xf32> to vector<8x32xbf16>
    %cst_214 = arith.constant dense<0.000000e+00> : vector<8x32xf32>
    %403 = tpu.matmul %402, %249, %cst_214 {dimension_numbers = #tpu.dot_dimension_numbers<[1], [0], [0], [1], [0, 0, 1, 1], [], []>} : vector<8x32xbf16>, vector<32x32xbf16>, vector<8x32xf32> -> vector<8x32xf32>
    %404 = vector.broadcast %250 : vector<1x32xf32> to vector<8x32xf32>
    %405 = arith.addf %403, %404 : vector<8x32xf32>
    %406 = arith.addf %405, %401 : vector<8x32xf32>
    %cst_215 = arith.constant dense<0.000000e+00> : vector<8xf32>
    %407 = vector.multi_reduction <add>, %406, %cst_215 [1] : vector<8x32xf32> to vector<8xf32>
    %408 = vector.shape_cast %407 : vector<8xf32> to vector<8x1xf32>
    %cst_216 = arith.constant 3.200000e+01 : f32
    %409 = vector.broadcast %cst_216 : f32 to vector<8x1xf32>
    %410 = arith.divf %408, %409 : vector<8x1xf32>
    %411 = vector.broadcast %410 : vector<8x1xf32> to vector<8x32xf32>
    %412 = arith.subf %406, %411 : vector<8x32xf32>
    %413 = arith.mulf %412, %412 : vector<8x32xf32>
    %cst_217 = arith.constant dense<0.000000e+00> : vector<8xf32>
    %414 = vector.multi_reduction <add>, %413, %cst_217 [1] : vector<8x32xf32> to vector<8xf32>
    %415 = vector.shape_cast %414 : vector<8xf32> to vector<8x1xf32>
    %cst_218 = arith.constant 3.200000e+01 : f32
    %416 = vector.broadcast %cst_218 : f32 to vector<8x1xf32>
    %417 = arith.divf %415, %416 : vector<8x1xf32>
    %cst_219 = arith.constant 9.99999974E-6 : f32
    %418 = vector.broadcast %cst_219 : f32 to vector<8x1xf32>
    %419 = arith.addf %417, %418 : vector<8x1xf32>
    %420 = math.rsqrt %419 : vector<8x1xf32>
    %421 = vector.broadcast %420 : vector<8x1xf32> to vector<8x32xf32>
    %422 = arith.mulf %412, %421 : vector<8x32xf32>
    %423 = vector.broadcast %251 : vector<1x32xf32> to vector<8x32xf32>
    %424 = arith.mulf %422, %423 : vector<8x32xf32>
    %425 = vector.broadcast %252 : vector<1x32xf32> to vector<8x32xf32>
    %426 = arith.addf %424, %425 : vector<8x32xf32>
    %427 = arith.addf %398, %426 : vector<8x32xf32>
    %c0_220 = arith.constant 0 : index
    %c6_221 = arith.constant 6 : index
    %c0_222 = arith.constant 0 : index
    %c0_223 = arith.constant 0 : index
    %428 = vector.load %arg1[%c0_220, %c6_221, %c0_222, %c0_223] : memref<1x8x8x32xf32, #tpu.memory_space<vmem>>, vector<1x1x8x32xf32>
    %429 = vector.shape_cast %428 : vector<1x1x8x32xf32> to vector<8x32xf32>
    %430 = arith.addf %429, %218 : vector<8x32xf32>
    %431 = arith.truncf %430 : vector<8x32xf32> to vector<8x32xbf16>
    %cst_224 = arith.constant dense<0.000000e+00> : vector<8x32xf32>
    %432 = tpu.matmul %431, %249, %cst_224 {dimension_numbers = #tpu.dot_dimension_numbers<[1], [0], [0], [1], [0, 0, 1, 1], [], []>} : vector<8x32xbf16>, vector<32x32xbf16>, vector<8x32xf32> -> vector<8x32xf32>
    %433 = vector.broadcast %250 : vector<1x32xf32> to vector<8x32xf32>
    %434 = arith.addf %432, %433 : vector<8x32xf32>
    %435 = arith.addf %434, %430 : vector<8x32xf32>
    %cst_225 = arith.constant dense<0.000000e+00> : vector<8xf32>
    %436 = vector.multi_reduction <add>, %435, %cst_225 [1] : vector<8x32xf32> to vector<8xf32>
    %437 = vector.shape_cast %436 : vector<8xf32> to vector<8x1xf32>
    %cst_226 = arith.constant 3.200000e+01 : f32
    %438 = vector.broadcast %cst_226 : f32 to vector<8x1xf32>
    %439 = arith.divf %437, %438 : vector<8x1xf32>
    %440 = vector.broadcast %439 : vector<8x1xf32> to vector<8x32xf32>
    %441 = arith.subf %435, %440 : vector<8x32xf32>
    %442 = arith.mulf %441, %441 : vector<8x32xf32>
    %cst_227 = arith.constant dense<0.000000e+00> : vector<8xf32>
    %443 = vector.multi_reduction <add>, %442, %cst_227 [1] : vector<8x32xf32> to vector<8xf32>
    %444 = vector.shape_cast %443 : vector<8xf32> to vector<8x1xf32>
    %cst_228 = arith.constant 3.200000e+01 : f32
    %445 = vector.broadcast %cst_228 : f32 to vector<8x1xf32>
    %446 = arith.divf %444, %445 : vector<8x1xf32>
    %cst_229 = arith.constant 9.99999974E-6 : f32
    %447 = vector.broadcast %cst_229 : f32 to vector<8x1xf32>
    %448 = arith.addf %446, %447 : vector<8x1xf32>
    %449 = math.rsqrt %448 : vector<8x1xf32>
    %450 = vector.broadcast %449 : vector<8x1xf32> to vector<8x32xf32>
    %451 = arith.mulf %441, %450 : vector<8x32xf32>
    %452 = vector.broadcast %251 : vector<1x32xf32> to vector<8x32xf32>
    %453 = arith.mulf %451, %452 : vector<8x32xf32>
    %454 = vector.broadcast %252 : vector<1x32xf32> to vector<8x32xf32>
    %455 = arith.addf %453, %454 : vector<8x32xf32>
    %456 = arith.addf %427, %455 : vector<8x32xf32>
    %c0_230 = arith.constant 0 : index
    %c7_231 = arith.constant 7 : index
    %c0_232 = arith.constant 0 : index
    %c0_233 = arith.constant 0 : index
    %457 = vector.load %arg1[%c0_230, %c7_231, %c0_232, %c0_233] : memref<1x8x8x32xf32, #tpu.memory_space<vmem>>, vector<1x1x8x32xf32>
    %458 = vector.shape_cast %457 : vector<1x1x8x32xf32> to vector<8x32xf32>
    %459 = arith.addf %458, %218 : vector<8x32xf32>
    %460 = arith.truncf %459 : vector<8x32xf32> to vector<8x32xbf16>
    %cst_234 = arith.constant dense<0.000000e+00> : vector<8x32xf32>
    %461 = tpu.matmul %460, %249, %cst_234 {dimension_numbers = #tpu.dot_dimension_numbers<[1], [0], [0], [1], [0, 0, 1, 1], [], []>} : vector<8x32xbf16>, vector<32x32xbf16>, vector<8x32xf32> -> vector<8x32xf32>
    %462 = vector.broadcast %250 : vector<1x32xf32> to vector<8x32xf32>
    %463 = arith.addf %461, %462 : vector<8x32xf32>
    %464 = arith.addf %463, %459 : vector<8x32xf32>
    %cst_235 = arith.constant dense<0.000000e+00> : vector<8xf32>
    %465 = vector.multi_reduction <add>, %464, %cst_235 [1] : vector<8x32xf32> to vector<8xf32>
    %466 = vector.shape_cast %465 : vector<8xf32> to vector<8x1xf32>
    %cst_236 = arith.constant 3.200000e+01 : f32
    %467 = vector.broadcast %cst_236 : f32 to vector<8x1xf32>
    %468 = arith.divf %466, %467 : vector<8x1xf32>
    %469 = vector.broadcast %468 : vector<8x1xf32> to vector<8x32xf32>
    %470 = arith.subf %464, %469 : vector<8x32xf32>
    %471 = arith.mulf %470, %470 : vector<8x32xf32>
    %cst_237 = arith.constant dense<0.000000e+00> : vector<8xf32>
    %472 = vector.multi_reduction <add>, %471, %cst_237 [1] : vector<8x32xf32> to vector<8xf32>
    %473 = vector.shape_cast %472 : vector<8xf32> to vector<8x1xf32>
    %cst_238 = arith.constant 3.200000e+01 : f32
    %474 = vector.broadcast %cst_238 : f32 to vector<8x1xf32>
    %475 = arith.divf %473, %474 : vector<8x1xf32>
    %cst_239 = arith.constant 9.99999974E-6 : f32
    %476 = vector.broadcast %cst_239 : f32 to vector<8x1xf32>
    %477 = arith.addf %475, %476 : vector<8x1xf32>
    %478 = math.rsqrt %477 : vector<8x1xf32>
    %479 = vector.broadcast %478 : vector<8x1xf32> to vector<8x32xf32>
    %480 = arith.mulf %470, %479 : vector<8x32xf32>
    %481 = vector.broadcast %251 : vector<1x32xf32> to vector<8x32xf32>
    %482 = arith.mulf %480, %481 : vector<8x32xf32>
    %483 = vector.broadcast %252 : vector<1x32xf32> to vector<8x32xf32>
    %484 = arith.addf %482, %483 : vector<8x32xf32>
    %485 = arith.addf %456, %484 : vector<8x32xf32>
    %cst_240 = arith.constant 1.250000e-01 : f32
    %486 = vector.broadcast %cst_240 : f32 to vector<8x32xf32>
    %487 = arith.mulf %485, %486 : vector<8x32xf32>
    %488 = arith.truncf %248 : vector<8x32xf32> to vector<8x32xbf16>
    %c0_241 = arith.constant 0 : index
    %c0_242 = arith.constant 0 : index
    %489 = vector.load %arg12[%c0_241, %c0_242] : memref<32x96xbf16, #tpu.memory_space<vmem>>, vector<32x96xbf16>
    %cst_243 = arith.constant dense<0.000000e+00> : vector<8x96xf32>
    %490 = tpu.matmul %488, %489, %cst_243 {dimension_numbers = #tpu.dot_dimension_numbers<[1], [0], [0], [1], [0, 0, 1, 1], [], []>} : vector<8x32xbf16>, vector<32x96xbf16>, vector<8x96xf32> -> vector<8x96xf32>
    %c0_244 = arith.constant 0 : index
    %c0_245 = arith.constant 0 : index
    %491 = vector.load %arg13[%c0_244, %c0_245] : memref<1x96xf32, #tpu.memory_space<vmem>>, vector<1x96xf32>
    %492 = vector.broadcast %491 : vector<1x96xf32> to vector<8x96xf32>
    %493 = arith.addf %490, %492 : vector<8x96xf32>
    %494 = arith.truncf %493 : vector<8x96xf32> to vector<8x96xbf16>
    %c0_246 = arith.constant 0 : index
    %c0_247 = arith.constant 0 : index
    %495 = vector.load %arg29[%c0_246, %c0_247] : memref<8x96xbf16, #tpu.memory_space<vmem>>, vector<8x96xbf16>
    tpu.vector_store %arg29[%c0_246, %c0_247], %494 {strides = array<i32>} : memref<8x96xbf16, #tpu.memory_space<vmem>>, vector<8x96xbf16>,
    %cst_248 = arith.constant 0.000000e+00 : f32
    %496 = vector.broadcast %cst_248 : f32 to vector<8x32xf32>
    %c0_249 = arith.constant 0 : index
    %c0_250 = arith.constant 0 : index
    %497 = vector.load %arg29[%c0_249, %c0_250] : memref<8x96xbf16, #tpu.memory_space<vmem>>, vector<8x8xbf16>
    %c0_251 = arith.constant 0 : index
    %c32_252 = arith.constant 32 : index
    %498 = vector.load %arg29[%c0_251, %c32_252] : memref<8x96xbf16, #tpu.memory_space<vmem>>, vector<8x8xbf16>
    %cst_253 = arith.constant dense<0.000000e+00> : vector<8x8xf32>
    %499 = tpu.matmul %497, %498, %cst_253 {dimension_numbers = #tpu.dot_dimension_numbers<[1], [1], [0], [0], [0, 0, 1, 0], [], []>} : vector<8x8xbf16>, vector<8x8xbf16>, vector<8x8xf32> -> vector<8x8xf32>
    %cst_254 = arith.constant 0.353553385 : f32
    %500 = vector.broadcast %cst_254 : f32 to vector<8x8xf32>
    %501 = arith.mulf %499, %500 : vector<8x8xf32>
    %cst_255 = arith.constant dense<0xFF800000> : vector<8xf32>
    %502 = vector.multi_reduction <maximumf>, %501, %cst_255 [1] : vector<8x8xf32> to vector<8xf32>
    %503 = vector.shape_cast %502 : vector<8xf32> to vector<8x1xf32>
    %504 = vector.broadcast %503 : vector<8x1xf32> to vector<8x8xf32>
    %505 = arith.subf %501, %504 : vector<8x8xf32>
    %506 = math.exp %505 : vector<8x8xf32>
    %cst_256 = arith.constant dense<0.000000e+00> : vector<8xf32>
    %507 = vector.multi_reduction <add>, %506, %cst_256 [1] : vector<8x8xf32> to vector<8xf32>
    %508 = vector.shape_cast %507 : vector<8xf32> to vector<8x1xf32>
    %509 = tpu.reciprocal %508 {approx = true} : vector<8x1xf32> -> vector<8x1xf32>
    %510 = vector.broadcast %509 : vector<8x1xf32> to vector<8x8xf32>
    %511 = arith.mulf %506, %510 : vector<8x8xf32>
    %512 = arith.truncf %511 : vector<8x8xf32> to vector<8x8xbf16>
    %c0_257 = arith.constant 0 : index
    %c64_258 = arith.constant 64 : index
    %513 = vector.load %arg29[%c0_257, %c64_258] : memref<8x96xbf16, #tpu.memory_space<vmem>>, vector<8x8xbf16>
    %cst_259 = arith.constant dense<0.000000e+00> : vector<8x8xf32>
    %514 = tpu.matmul %512, %513, %cst_259 {dimension_numbers = #tpu.dot_dimension_numbers<[1], [0], [0], [1], [0, 0, 1, 1], [], []>} : vector<8x8xbf16>, vector<8x8xbf16>, vector<8x8xf32> -> vector<8x8xf32>
    %515 = arith.truncf %514 : vector<8x8xf32> to vector<8x8xbf16>
    %c0_260 = arith.constant 0 : index
    %c0_261 = arith.constant 0 : index
    %516 = vector.load %arg14[%c0_260, %c0_261] : memref<32x32xbf16, #tpu.memory_space<vmem>>, vector<8x32xbf16>
    %cst_262 = arith.constant dense<0.000000e+00> : vector<8x32xf32>
    %517 = tpu.matmul %515, %516, %cst_262 {dimension_numbers = #tpu.dot_dimension_numbers<[1], [0], [0], [1], [0, 0, 1, 1], [], []>} : vector<8x8xbf16>, vector<8x32xbf16>, vector<8x32xf32> -> vector<8x32xf32>
    %518 = arith.addf %496, %517 : vector<8x32xf32>
    %c0_263 = arith.constant 0 : index
    %c8 = arith.constant 8 : index
    %519 = vector.load %arg29[%c0_263, %c8] : memref<8x96xbf16, #tpu.memory_space<vmem>>, vector<8x8xbf16>
    %c0_264 = arith.constant 0 : index
    %c40 = arith.constant 40 : index
    %520 = vector.load %arg29[%c0_264, %c40] : memref<8x96xbf16, #tpu.memory_space<vmem>>, vector<8x8xbf16>
    %cst_265 = arith.constant dense<0.000000e+00> : vector<8x8xf32>
    %521 = tpu.matmul %519, %520, %cst_265 {dimension_numbers = #tpu.dot_dimension_numbers<[1], [1], [0], [0], [0, 0, 1, 0], [], []>} : vector<8x8xbf16>, vector<8x8xbf16>, vector<8x8xf32> -> vector<8x8xf32>
    %cst_266 = arith.constant 0.353553385 : f32
    %522 = vector.broadcast %cst_266 : f32 to vector<8x8xf32>
    %523 = arith.mulf %521, %522 : vector<8x8xf32>
    %cst_267 = arith.constant dense<0xFF800000> : vector<8xf32>
    %524 = vector.multi_reduction <maximumf>, %523, %cst_267 [1] : vector<8x8xf32> to vector<8xf32>
    %525 = vector.shape_cast %524 : vector<8xf32> to vector<8x1xf32>
    %526 = vector.broadcast %525 : vector<8x1xf32> to vector<8x8xf32>
    %527 = arith.subf %523, %526 : vector<8x8xf32>
    %528 = math.exp %527 : vector<8x8xf32>
    %cst_268 = arith.constant dense<0.000000e+00> : vector<8xf32>
    %529 = vector.multi_reduction <add>, %528, %cst_268 [1] : vector<8x8xf32> to vector<8xf32>
    %530 = vector.shape_cast %529 : vector<8xf32> to vector<8x1xf32>
    %531 = tpu.reciprocal %530 {approx = true} : vector<8x1xf32> -> vector<8x1xf32>
    %532 = vector.broadcast %531 : vector<8x1xf32> to vector<8x8xf32>
    %533 = arith.mulf %528, %532 : vector<8x8xf32>
    %534 = arith.truncf %533 : vector<8x8xf32> to vector<8x8xbf16>
    %c0_269 = arith.constant 0 : index
    %c72 = arith.constant 72 : index
    %535 = vector.load %arg29[%c0_269, %c72] : memref<8x96xbf16, #tpu.memory_space<vmem>>, vector<8x8xbf16>
    %cst_270 = arith.constant dense<0.000000e+00> : vector<8x8xf32>
    %536 = tpu.matmul %534, %535, %cst_270 {dimension_numbers = #tpu.dot_dimension_numbers<[1], [0], [0], [1], [0, 0, 1, 1], [], []>} : vector<8x8xbf16>, vector<8x8xbf16>, vector<8x8xf32> -> vector<8x8xf32>
    %537 = arith.truncf %536 : vector<8x8xf32> to vector<8x8xbf16>
    %c8_271 = arith.constant 8 : index
    %c0_272 = arith.constant 0 : index
    %538 = vector.load %arg14[%c8_271, %c0_272] : memref<32x32xbf16, #tpu.memory_space<vmem>>, vector<8x32xbf16>
    %cst_273 = arith.constant dense<0.000000e+00> : vector<8x32xf32>
    %539 = tpu.matmul %537, %538, %cst_273 {dimension_numbers = #tpu.dot_dimension_numbers<[1], [0], [0], [1], [0, 0, 1, 1], [], []>} : vector<8x8xbf16>, vector<8x32xbf16>, vector<8x32xf32> -> vector<8x32xf32>
    %540 = arith.addf %518, %539 : vector<8x32xf32>
    %c0_274 = arith.constant 0 : index
    %c16 = arith.constant 16 : index
    %541 = vector.load %arg29[%c0_274, %c16] : memref<8x96xbf16, #tpu.memory_space<vmem>>, vector<8x8xbf16>
    %c0_275 = arith.constant 0 : index
    %c48 = arith.constant 48 : index
    %542 = vector.load %arg29[%c0_275, %c48] : memref<8x96xbf16, #tpu.memory_space<vmem>>, vector<8x8xbf16>
    %cst_276 = arith.constant dense<0.000000e+00> : vector<8x8xf32>
    %543 = tpu.matmul %541, %542, %cst_276 {dimension_numbers = #tpu.dot_dimension_numbers<[1], [1], [0], [0], [0, 0, 1, 0], [], []>} : vector<8x8xbf16>, vector<8x8xbf16>, vector<8x8xf32> -> vector<8x8xf32>
    %cst_277 = arith.constant 0.353553385 : f32
    %544 = vector.broadcast %cst_277 : f32 to vector<8x8xf32>
    %545 = arith.mulf %543, %544 : vector<8x8xf32>
    %cst_278 = arith.constant dense<0xFF800000> : vector<8xf32>
    %546 = vector.multi_reduction <maximumf>, %545, %cst_278 [1] : vector<8x8xf32> to vector<8xf32>
    %547 = vector.shape_cast %546 : vector<8xf32> to vector<8x1xf32>
    %548 = vector.broadcast %547 : vector<8x1xf32> to vector<8x8xf32>
    %549 = arith.subf %545, %548 : vector<8x8xf32>
    %550 = math.exp %549 : vector<8x8xf32>
    %cst_279 = arith.constant dense<0.000000e+00> : vector<8xf32>
    %551 = vector.multi_reduction <add>, %550, %cst_279 [1] : vector<8x8xf32> to vector<8xf32>
    %552 = vector.shape_cast %551 : vector<8xf32> to vector<8x1xf32>
    %553 = tpu.reciprocal %552 {approx = true} : vector<8x1xf32> -> vector<8x1xf32>
    %554 = vector.broadcast %553 : vector<8x1xf32> to vector<8x8xf32>
    %555 = arith.mulf %550, %554 : vector<8x8xf32>
    %556 = arith.truncf %555 : vector<8x8xf32> to vector<8x8xbf16>
    %c0_280 = arith.constant 0 : index
    %c80 = arith.constant 80 : index
    %557 = vector.load %arg29[%c0_280, %c80] : memref<8x96xbf16, #tpu.memory_space<vmem>>, vector<8x8xbf16>
    %cst_281 = arith.constant dense<0.000000e+00> : vector<8x8xf32>
    %558 = tpu.matmul %556, %557, %cst_281 {dimension_numbers = #tpu.dot_dimension_numbers<[1], [0], [0], [1], [0, 0, 1, 1], [], []>} : vector<8x8xbf16>, vector<8x8xbf16>, vector<8x8xf32> -> vector<8x8xf32>
    %559 = arith.truncf %558 : vector<8x8xf32> to vector<8x8xbf16>
    %c16_282 = arith.constant 16 : index
    %c0_283 = arith.constant 0 : index
    %560 = vector.load %arg14[%c16_282, %c0_283] : memref<32x32xbf16, #tpu.memory_space<vmem>>, vector<8x32xbf16>
    %cst_284 = arith.constant dense<0.000000e+00> : vector<8x32xf32>
    %561 = tpu.matmul %559, %560, %cst_284 {dimension_numbers = #tpu.dot_dimension_numbers<[1], [0], [0], [1], [0, 0, 1, 1], [], []>} : vector<8x8xbf16>, vector<8x32xbf16>, vector<8x32xf32> -> vector<8x32xf32>
    %562 = arith.addf %540, %561 : vector<8x32xf32>
    %c0_285 = arith.constant 0 : index
    %c24 = arith.constant 24 : index
    %563 = vector.load %arg29[%c0_285, %c24] : memref<8x96xbf16, #tpu.memory_space<vmem>>, vector<8x8xbf16>
    %c0_286 = arith.constant 0 : index
    %c56 = arith.constant 56 : index
    %564 = vector.load %arg29[%c0_286, %c56] : memref<8x96xbf16, #tpu.memory_space<vmem>>, vector<8x8xbf16>
    %cst_287 = arith.constant dense<0.000000e+00> : vector<8x8xf32>
    %565 = tpu.matmul %563, %564, %cst_287 {dimension_numbers = #tpu.dot_dimension_numbers<[1], [1], [0], [0], [0, 0, 1, 0], [], []>} : vector<8x8xbf16>, vector<8x8xbf16>, vector<8x8xf32> -> vector<8x8xf32>
    %cst_288 = arith.constant 0.353553385 : f32
    %566 = vector.broadcast %cst_288 : f32 to vector<8x8xf32>
    %567 = arith.mulf %565, %566 : vector<8x8xf32>
    %cst_289 = arith.constant dense<0xFF800000> : vector<8xf32>
    %568 = vector.multi_reduction <maximumf>, %567, %cst_289 [1] : vector<8x8xf32> to vector<8xf32>
    %569 = vector.shape_cast %568 : vector<8xf32> to vector<8x1xf32>
    %570 = vector.broadcast %569 : vector<8x1xf32> to vector<8x8xf32>
    %571 = arith.subf %567, %570 : vector<8x8xf32>
    %572 = math.exp %571 : vector<8x8xf32>
    %cst_290 = arith.constant dense<0.000000e+00> : vector<8xf32>
    %573 = vector.multi_reduction <add>, %572, %cst_290 [1] : vector<8x8xf32> to vector<8xf32>
    %574 = vector.shape_cast %573 : vector<8xf32> to vector<8x1xf32>
    %575 = tpu.reciprocal %574 {approx = true} : vector<8x1xf32> -> vector<8x1xf32>
    %576 = vector.broadcast %575 : vector<8x1xf32> to vector<8x8xf32>
    %577 = arith.mulf %572, %576 : vector<8x8xf32>
    %578 = arith.truncf %577 : vector<8x8xf32> to vector<8x8xbf16>
    %c0_291 = arith.constant 0 : index
    %c88 = arith.constant 88 : index
    %579 = vector.load %arg29[%c0_291, %c88] : memref<8x96xbf16, #tpu.memory_space<vmem>>, vector<8x8xbf16>
    %cst_292 = arith.constant dense<0.000000e+00> : vector<8x8xf32>
    %580 = tpu.matmul %578, %579, %cst_292 {dimension_numbers = #tpu.dot_dimension_numbers<[1], [0], [0], [1], [0, 0, 1, 1], [], []>} : vector<8x8xbf16>, vector<8x8xbf16>, vector<8x8xf32> -> vector<8x8xf32>
    %581 = arith.truncf %580 : vector<8x8xf32> to vector<8x8xbf16>
    %c24_293 = arith.constant 24 : index
    %c0_294 = arith.constant 0 : index
    %582 = vector.load %arg14[%c24_293, %c0_294] : memref<32x32xbf16, #tpu.memory_space<vmem>>, vector<8x32xbf16>
    %cst_295 = arith.constant dense<0.000000e+00> : vector<8x32xf32>
    %583 = tpu.matmul %581, %582, %cst_295 {dimension_numbers = #tpu.dot_dimension_numbers<[1], [0], [0], [1], [0, 0, 1, 1], [], []>} : vector<8x8xbf16>, vector<8x32xbf16>, vector<8x32xf32> -> vector<8x32xf32>
    %584 = arith.addf %562, %583 : vector<8x32xf32>
    %c0_296 = arith.constant 0 : index
    %c0_297 = arith.constant 0 : index
    %585 = vector.load %arg15[%c0_296, %c0_297] : memref<1x32xf32, #tpu.memory_space<vmem>>, vector<1x32xf32>
    %586 = vector.broadcast %585 : vector<1x32xf32> to vector<8x32xf32>
    %587 = arith.addf %584, %586 : vector<8x32xf32>
    %588 = arith.addf %587, %248 : vector<8x32xf32>
    %c0_298 = arith.constant 0 : index
    %c0_299 = arith.constant 0 : index
    %589 = vector.load %arg16[%c0_298, %c0_299] : memref<1x32xf32, #tpu.memory_space<vmem>>, vector<1x32xf32>
    %c0_300 = arith.constant 0 : index
    %c0_301 = arith.constant 0 : index
    %590 = vector.load %arg17[%c0_300, %c0_301] : memref<1x32xf32, #tpu.memory_space<vmem>>, vector<1x32xf32>
    %cst_302 = arith.constant dense<0.000000e+00> : vector<8xf32>
    %591 = vector.multi_reduction <add>, %588, %cst_302 [1] : vector<8x32xf32> to vector<8xf32>
    %592 = vector.shape_cast %591 : vector<8xf32> to vector<8x1xf32>
    %cst_303 = arith.constant 3.200000e+01 : f32
    %593 = vector.broadcast %cst_303 : f32 to vector<8x1xf32>
    %594 = arith.divf %592, %593 : vector<8x1xf32>
    %595 = vector.broadcast %594 : vector<8x1xf32> to vector<8x32xf32>
    %596 = arith.subf %588, %595 : vector<8x32xf32>
    %597 = arith.mulf %596, %596 : vector<8x32xf32>
    %cst_304 = arith.constant dense<0.000000e+00> : vector<8xf32>
    %598 = vector.multi_reduction <add>, %597, %cst_304 [1] : vector<8x32xf32> to vector<8xf32>
    %599 = vector.shape_cast %598 : vector<8xf32> to vector<8x1xf32>
    %cst_305 = arith.constant 3.200000e+01 : f32
    %600 = vector.broadcast %cst_305 : f32 to vector<8x1xf32>
    %601 = arith.divf %599, %600 : vector<8x1xf32>
    %cst_306 = arith.constant 9.99999974E-6 : f32
    %602 = vector.broadcast %cst_306 : f32 to vector<8x1xf32>
    %603 = arith.addf %601, %602 : vector<8x1xf32>
    %604 = math.rsqrt %603 : vector<8x1xf32>
    %605 = vector.broadcast %604 : vector<8x1xf32> to vector<8x32xf32>
    %606 = arith.mulf %596, %605 : vector<8x32xf32>
    %607 = vector.broadcast %589 : vector<1x32xf32> to vector<8x32xf32>
    %608 = arith.mulf %606, %607 : vector<8x32xf32>
    %609 = vector.broadcast %590 : vector<1x32xf32> to vector<8x32xf32>
    %610 = arith.addf %608, %609 : vector<8x32xf32>
    %611 = arith.truncf %610 : vector<8x32xf32> to vector<8x32xbf16>
    %c0_307 = arith.constant 0 : index
    %c0_308 = arith.constant 0 : index
    %612 = vector.load %arg18[%c0_307, %c0_308] : memref<32x32xbf16, #tpu.memory_space<vmem>>, vector<32x32xbf16>
    %cst_309 = arith.constant dense<0.000000e+00> : vector<8x32xf32>
    %613 = tpu.matmul %611, %612, %cst_309 {dimension_numbers = #tpu.dot_dimension_numbers<[1], [0], [0], [1], [0, 0, 1, 1], [], []>} : vector<8x32xbf16>, vector<32x32xbf16>, vector<8x32xf32> -> vector<8x32xf32>
    %614 = arith.addf %610, %613 : vector<8x32xf32>
    %c0_310 = arith.constant 0 : index
    %c0_311 = arith.constant 0 : index
    %615 = vector.load %arg19[%c0_310, %c0_311] : memref<1x32xf32, #tpu.memory_space<vmem>>, vector<1x32xf32>
    %616 = vector.broadcast %615 : vector<1x32xf32> to vector<8x32xf32>
    %617 = arith.addf %614, %616 : vector<8x32xf32>
    %c0_312 = arith.constant 0 : index
    %c0_313 = arith.constant 0 : index
    %618 = vector.load %arg20[%c0_312, %c0_313] : memref<1x32xf32, #tpu.memory_space<vmem>>, vector<1x32xf32>
    %c0_314 = arith.constant 0 : index
    %c0_315 = arith.constant 0 : index
    %619 = vector.load %arg21[%c0_314, %c0_315] : memref<1x32xf32, #tpu.memory_space<vmem>>, vector<1x32xf32>
    %cst_316 = arith.constant dense<0.000000e+00> : vector<8xf32>
    %620 = vector.multi_reduction <add>, %617, %cst_316 [1] : vector<8x32xf32> to vector<8xf32>
    %621 = vector.shape_cast %620 : vector<8xf32> to vector<8x1xf32>
    %cst_317 = arith.constant 3.200000e+01 : f32
    %622 = vector.broadcast %cst_317 : f32 to vector<8x1xf32>
    %623 = arith.divf %621, %622 : vector<8x1xf32>
    %624 = vector.broadcast %623 : vector<8x1xf32> to vector<8x32xf32>
    %625 = arith.subf %617, %624 : vector<8x32xf32>
    %626 = arith.mulf %625, %625 : vector<8x32xf32>
    %cst_318 = arith.constant dense<0.000000e+00> : vector<8xf32>
    %627 = vector.multi_reduction <add>, %626, %cst_318 [1] : vector<8x32xf32> to vector<8xf32>
    %628 = vector.shape_cast %627 : vector<8xf32> to vector<8x1xf32>
    %cst_319 = arith.constant 3.200000e+01 : f32
    %629 = vector.broadcast %cst_319 : f32 to vector<8x1xf32>
    %630 = arith.divf %628, %629 : vector<8x1xf32>
    %cst_320 = arith.constant 9.99999974E-6 : f32
    %631 = vector.broadcast %cst_320 : f32 to vector<8x1xf32>
    %632 = arith.addf %630, %631 : vector<8x1xf32>
    %633 = math.rsqrt %632 : vector<8x1xf32>
    %634 = vector.broadcast %633 : vector<8x1xf32> to vector<8x32xf32>
    %635 = arith.mulf %625, %634 : vector<8x32xf32>
    %636 = vector.broadcast %618 : vector<1x32xf32> to vector<8x32xf32>
    %637 = arith.mulf %635, %636 : vector<8x32xf32>
    %638 = vector.broadcast %619 : vector<1x32xf32> to vector<8x32xf32>
    %639 = arith.addf %637, %638 : vector<8x32xf32>
    %640 = arith.truncf %639 : vector<8x32xf32> to vector<8x32xbf16>
    %c0_321 = arith.constant 0 : index
    %c0_322 = arith.constant 0 : index
    %641 = vector.load %arg22[%c0_321, %c0_322] : memref<32x32xbf16, #tpu.memory_space<vmem>>, vector<32x32xbf16>
    %cst_323 = arith.constant dense<0.000000e+00> : vector<8x32xf32>
    %642 = tpu.matmul %640, %641, %cst_323 {dimension_numbers = #tpu.dot_dimension_numbers<[1], [0], [0], [1], [0, 0, 1, 1], [], []>} : vector<8x32xbf16>, vector<32x32xbf16>, vector<8x32xf32> -> vector<8x32xf32>
    %643 = arith.truncf %487 : vector<8x32xf32> to vector<8x32xbf16>
    %c0_324 = arith.constant 0 : index
    %c0_325 = arith.constant 0 : index
    %644 = vector.load %arg23[%c0_324, %c0_325] : memref<32x32xbf16, #tpu.memory_space<vmem>>, vector<32x32xbf16>
    %cst_326 = arith.constant dense<0.000000e+00> : vector<8x32xf32>
    %645 = tpu.matmul %643, %644, %cst_326 {dimension_numbers = #tpu.dot_dimension_numbers<[1], [0], [0], [1], [0, 0, 1, 1], [], []>} : vector<8x32xbf16>, vector<32x32xbf16>, vector<8x32xf32> -> vector<8x32xf32>
    %646 = arith.addf %642, %645 : vector<8x32xf32>
    %c0_327 = arith.constant 0 : index
    %c0_328 = arith.constant 0 : index
    %647 = vector.load %arg24[%c0_327, %c0_328] : memref<1x32xf32, #tpu.memory_space<vmem>>, vector<1x32xf32>
    %648 = vector.broadcast %647 : vector<1x32xf32> to vector<8x32xf32>
    %649 = arith.addf %646, %648 : vector<8x32xf32>
    %c0_329 = arith.constant 0 : index
    %c0_330 = arith.constant 0 : index
    %c0_331 = arith.constant 0 : index
    %650 = vector.load %arg25[%c0_329, %c0_330, %c0_331] : memref<1x8x32xf32, #tpu.memory_space<vmem>>, vector<1x8x32xf32>
    %651 = vector.shape_cast %650 : vector<1x8x32xf32> to vector<8x32xf32>
    %652 = vector.shape_cast %649 : vector<8x32xf32> to vector<1x8x32xf32>
    tpu.vector_store %arg25[%c0_329, %c0_330, %c0_331], %652 {strides = array<i32>} : memref<1x8x32xf32, #tpu.memory_space<vmem>>, vector<1x8x32xf32>,
    return
  }
  func.func @transform_0(%arg0: i32) -> (i32, i32, i32, i32) {
    %c0_i32 = arith.constant 0 : i32
    %c0_i32_0 = arith.constant 0 : i32
    %c0_i32_1 = arith.constant 0 : i32
    %c0_i32_2 = arith.constant 0 : i32
    return %arg0, %c0_i32, %c0_i32_0, %c0_i32_1 : i32, i32, i32, i32
  }
  func.func @transform_1(%arg0: i32) -> (i32, i32) {
    %c0_i32 = arith.constant 0 : i32
    %c0_i32_0 = arith.constant 0 : i32
    %c0_i32_1 = arith.constant 0 : i32
    return %c0_i32, %c0_i32_0 : i32, i32
  }
  func.func @transform_2(%arg0: i32) -> (i32, i32) {
    %c0_i32 = arith.constant 0 : i32
    %c0_i32_0 = arith.constant 0 : i32
    %c0_i32_1 = arith.constant 0 : i32
    return %c0_i32, %c0_i32_0 : i32, i32
  }
  func.func @transform_3(%arg0: i32) -> (i32, i32) {
    %c0_i32 = arith.constant 0 : i32
    %c0_i32_0 = arith.constant 0 : i32
    %c0_i32_1 = arith.constant 0 : i32
    return %c0_i32, %c0_i32_0 : i32, i32
  }
  func.func @transform_4(%arg0: i32) -> (i32, i32) {
    %c0_i32 = arith.constant 0 : i32
    %c0_i32_0 = arith.constant 0 : i32
    %c0_i32_1 = arith.constant 0 : i32
    return %c0_i32, %c0_i32_0 : i32, i32
  }
  func.func @transform_5(%arg0: i32) -> (i32, i32) {
    %c0_i32 = arith.constant 0 : i32
    %c0_i32_0 = arith.constant 0 : i32
    %c0_i32_1 = arith.constant 0 : i32
    return %c0_i32, %c0_i32_0 : i32, i32
  }
  func.func @transform_6(%arg0: i32) -> (i32, i32) {
    %c0_i32 = arith.constant 0 : i32
    %c0_i32_0 = arith.constant 0 : i32
    %c0_i32_1 = arith.constant 0 : i32
    return %c0_i32, %c0_i32_0 : i32, i32
  }
  func.func @transform_7(%arg0: i32) -> (i32, i32) {
    %c0_i32 = arith.constant 0 : i32
    %c0_i32_0 = arith.constant 0 : i32
    %c0_i32_1 = arith.constant 0 : i32
    return %c0_i32, %c0_i32_0 : i32, i32
  }
  func.func @transform_8(%arg0: i32) -> (i32, i32) {
    %c0_i32 = arith.constant 0 : i32
    %c0_i32_0 = arith.constant 0 : i32
    %c0_i32_1 = arith.constant 0 : i32
    return %c0_i32, %c0_i32_0 : i32, i32
  }
  func.func @transform_9(%arg0: i32) -> (i32, i32) {
    %c0_i32 = arith.constant 0 : i32
    %c0_i32_0 = arith.constant 0 : i32
    %c0_i32_1 = arith.constant 0 : i32
    return %c0_i32, %c0_i32_0 : i32, i32
  }
  func.func @transform_10(%arg0: i32) -> (i32, i32) {
    %c0_i32 = arith.constant 0 : i32
    %c0_i32_0 = arith.constant 0 : i32
    %c0_i32_1 = arith.constant 0 : i32
    return %c0_i32, %c0_i32_0 : i32, i32
  }
  func.func @transform_11(%arg0: i32) -> (i32, i32) {
    %c0_i32 = arith.constant 0 : i32
    %c0_i32_0 = arith.constant 0 : i32
    %c0_i32_1 = arith.constant 0 : i32
    return %c0_i32, %c0_i32_0 : i32, i32
  }
  func.func @transform_12(%arg0: i32) -> (i32, i32) {
    %c0_i32 = arith.constant 0 : i32
    %c0_i32_0 = arith.constant 0 : i32
    %c0_i32_1 = arith.constant 0 : i32
    return %c0_i32, %c0_i32_0 : i32, i32
  }
  func.func @transform_13(%arg0: i32) -> (i32, i32) {
    %c0_i32 = arith.constant 0 : i32
    %c0_i32_0 = arith.constant 0 : i32
    %c0_i32_1 = arith.constant 0 : i32
    return %c0_i32, %c0_i32_0 : i32, i32
  }
  func.func @transform_14(%arg0: i32) -> (i32, i32) {
    %c0_i32 = arith.constant 0 : i32
    %c0_i32_0 = arith.constant 0 : i32
    %c0_i32_1 = arith.constant 0 : i32
    return %c0_i32, %c0_i32_0 : i32, i32
  }
  func.func @transform_15(%arg0: i32) -> (i32, i32) {
    %c0_i32 = arith.constant 0 : i32
    %c0_i32_0 = arith.constant 0 : i32
    %c0_i32_1 = arith.constant 0 : i32
    return %c0_i32, %c0_i32_0 : i32, i32
  }
  func.func @transform_16(%arg0: i32) -> (i32, i32) {
    %c0_i32 = arith.constant 0 : i32
    %c0_i32_0 = arith.constant 0 : i32
    %c0_i32_1 = arith.constant 0 : i32
    return %c0_i32, %c0_i32_0 : i32, i32
  }
  func.func @transform_17(%arg0: i32) -> (i32, i32) {
    %c0_i32 = arith.constant 0 : i32
    %c0_i32_0 = arith.constant 0 : i32
    %c0_i32_1 = arith.constant 0 : i32
    return %c0_i32, %c0_i32_0 : i32, i32
  }
  func.func @transform_18(%arg0: i32) -> (i32, i32) {
    %c0_i32 = arith.constant 0 : i32
    %c0_i32_0 = arith.constant 0 : i32
    %c0_i32_1 = arith.constant 0 : i32
    return %c0_i32, %c0_i32_0 : i32, i32
  }
  func.func @transform_19(%arg0: i32) -> (i32, i32) {
    %c0_i32 = arith.constant 0 : i32
    %c0_i32_0 = arith.constant 0 : i32
    %c0_i32_1 = arith.constant 0 : i32
    return %c0_i32, %c0_i32_0 : i32, i32
  }
  func.func @transform_20(%arg0: i32) -> (i32, i32) {
    %c0_i32 = arith.constant 0 : i32
    %c0_i32_0 = arith.constant 0 : i32
    %c0_i32_1 = arith.constant 0 : i32
    return %c0_i32, %c0_i32_0 : i32, i32
  }
  func.func @transform_21(%arg0: i32) -> (i32, i32) {
    %c0_i32 = arith.constant 0 : i32
    %c0_i32_0 = arith.constant 0 : i32
    %c0_i32_1 = arith.constant 0 : i32
    return %c0_i32, %c0_i32_0 : i32, i32
  }
  func.func @transform_22(%arg0: i32) -> (i32, i32) {
    %c0_i32 = arith.constant 0 : i32
    %c0_i32_0 = arith.constant 0 : i32
    %c0_i32_1 = arith.constant 0 : i32
    return %c0_i32, %c0_i32_0 : i32, i32
  }
  func.func @transform_23(%arg0: i32) -> (i32, i32) {
    %c0_i32 = arith.constant 0 : i32
    %c0_i32_0 = arith.constant 0 : i32
    %c0_i32_1 = arith.constant 0 : i32
    return %c0_i32, %c0_i32_0 : i32, i32
  }
  func.func @transform_24(%arg0: i32) -> (i32, i32, i32) {
    %c0_i32 = arith.constant 0 : i32
    %c0_i32_0 = arith.constant 0 : i32
    %c0_i32_1 = arith.constant 0 : i32
    return %arg0, %c0_i32, %c0_i32_0 : i32, i32, i32
  }
}

</mosaic_0001>

<llo_original>
// kernel: coattention_forward.1
$region0: #{coattention_forward.1}
  #allocation0 [shape = 'u32[]', space=smem, size = 0x4, offset = 0x4, fixed_abs, tag = 'smem constant byte address 0x4 - core index']
  #allocation1 [shape = 'u32[144,128]{1,0:T(1,128)}', space=vmem, size = 0x12000, scoped, tag = 'internal scratch']
  #allocation2 [shape = 'bf16[8,256]{1,0:T(8,128)(2,1)}', space=vmem, size = 0x1000, scoped, tag = 'scratch operand']
  #allocation3 [shape = 'bf16[8,256]{1,0:T(8,128)(2,1)}', space=vmem, size = 0x1000, scoped, tag = 'scratch operand']
  #allocation4 [shape = 'bf16[8,256]{1,0:T(8,128)(2,1)}', space=vmem, size = 0x1000, scoped, tag = 'scratch operand']
  #allocation5 [shape = 'bf16[8,96]{1,0:T(8,128)(2,1)}', space=vmem, size = 0x800, scoped, tag = 'scratch operand']
  %s0 = inlined_call_operand.vmem [shape: f32[2,8,8,32], index: 0, kind: input, shape index: {}]
  %s1 = inlined_call_operand.vmem [shape: bf16[32,96], index: 1, kind: input, shape index: {}]
  %s2 = inlined_call_operand.vmem [shape: f32[1,96], index: 2, kind: input, shape index: {}]
  %s3 = inlined_call_operand.vmem [shape: bf16[256,32], index: 3, kind: input, shape index: {}]
  %s4 = inlined_call_operand.vmem [shape: f32[1,32], index: 4, kind: input, shape index: {}]
  %s5 = inlined_call_operand.vmem [shape: f32[1,32], index: 5, kind: input, shape index: {}]
  %s6 = inlined_call_operand.vmem [shape: f32[1,32], index: 6, kind: input, shape index: {}]
  %s7 = inlined_call_operand.vmem [shape: bf16[32,32], index: 7, kind: input, shape index: {}]
  %s8 = inlined_call_operand.vmem [shape: f32[1,32], index: 8, kind: input, shape index: {}]
  %s9 = inlined_call_operand.vmem [shape: f32[1,32], index: 9, kind: input, shape index: {}]
  %s10 = inlined_call_operand.vmem [shape: f32[1,32], index: 10, kind: input, shape index: {}]
  %s11 = inlined_call_operand.vmem [shape: bf16[32,96], index: 11, kind: input, shape index: {}]
  %s12 = inlined_call_operand.vmem [shape: f32[1,96], index: 12, kind: input, shape index: {}]
  %s13 = inlined_call_operand.vmem [shape: bf16[32,32], index: 13, kind: input, shape index: {}]
  %s14 = inlined_call_operand.vmem [shape: f32[1,32], index: 14, kind: input, shape index: {}]
  %s15 = inlined_call_operand.vmem [shape: f32[1,32], index: 15, kind: input, shape index: {}]
  %s16 = inlined_call_operand.hbm [shape: f32[1,32], index: 16, kind: input, shape index: {}]
  %s17 = inlined_call_operand.hbm [shape: bf16[32,32], index: 17, kind: input, shape index: {}]
  %s18 = inlined_call_operand.hbm [shape: f32[1,32], index: 18, kind: input, shape index: {}]
  %s19 = inlined_call_operand.hbm [shape: f32[1,32], index: 19, kind: input, shape index: {}]
  %s20 = inlined_call_operand.hbm [shape: f32[1,32], index: 20, kind: input, shape index: {}]
  %s21 = inlined_call_operand.hbm [shape: bf16[32,32], index: 21, kind: input, shape index: {}]
  %s22 = inlined_call_operand.hbm [shape: bf16[32,32], index: 22, kind: input, shape index: {}]
  %s23 = inlined_call_operand.hbm [shape: f32[1,32], index: 23, kind: input, shape index: {}]
  %s24 = inlined_call_operand.hbm [shape: f32[2,8,32], index: 24, kind: output, shape index: {}]
  %s25 = sld [smem:[#allocation0]]
  $region161: #{coattention_forward.1} parent=0
    _
  %s27 = ssub.s32 1, %s25
  %s28 = scalar_select 0, %s27, %s25
  $region1: #{coattention_forward.1} parent=0
    #allocation6 [shape = 'u8[512]{0}', space=vmem, size = 0x400, scoped, tag = 'input window, operand 16, single buffered']
    #allocation7 [shape = 's32[2]{0}', space=sflag, size = 0x8, scoped, tag = 'scoped memory for coattention_forward.1']
    #allocation8 [shape = 's32[2]{0}', space=sflag, size = 0x8, scoped, tag = 'scoped memory for coattention_forward.1']
    #allocation9 [shape = 'u8[8192]{0}', space=vmem, size = 0x2000, scoped, tag = 'input window, operand 17, single buffered']
    #allocation10 [shape = 's32[1]{0}', space=sflag, size = 0x4, scoped, tag = 'scoped memory for coattention_forward.1']
    #allocation11 [shape = 'u8[512]{0}', space=vmem, size = 0x400, scoped, tag = 'input window, operand 18, single buffered']
    #allocation12 [shape = 'u8[512]{0}', space=vmem, size = 0x400, scoped, tag = 'input window, operand 19, single buffered']
    #allocation13 [shape = 's32[1]{0}', space=sflag, size = 0x4, scoped, tag = 'scoped memory for coattention_forward.1']
    #allocation14 [shape = 'u8[512]{0}', space=vmem, size = 0x400, scoped, tag = 'input window, operand 20, single buffered']
    #allocation15 [shape = 'u8[8192]{0}', space=vmem, size = 0x2000, scoped, tag = 'input window, operand 21, single buffered']
    #allocation16 [shape = 's32[1]{0}', space=sflag, size = 0x4, scoped, tag = 'scoped memory for coattention_forward.1']
    #allocation17 [shape = 'u8[8192]{0}', space=vmem, size = 0x2000, scoped, tag = 'input window, operand 22, single buffered']
    #allocation18 [shape = 'u8[512]{0}', space=vmem, size = 0x400, scoped, tag = 'input window, operand 23, single buffered']
    #allocation19 [shape = 's32[1]{0}', space=sflag, size = 0x4, scoped, tag = 'scoped memory for coattention_forward.1']
    #allocation20 [shape = 'u8[8192]{0}', space=vmem, size = 0x2000, scoped, tag = 'output window, operand 0']
    %29 = vsyncpa [#allocation7], 0
    %30 = vsyncpa [#allocation10], 0
    %31 = vsyncpa [#allocation13], 0
    %32 = vsyncpa [#allocation16], 0
    %33 = vsyncpa [#allocation19], 0
    %34 = vsyncpa [#allocation8], 0
    %s35 = scalar_lea.sflag [#allocation8], 1
    %36 = vsyncpa %s35, 0
    loop: start=0, step=1, limit=4
    $region2: #{coattention_forward.1} parent=1 // loop_pre_header
      _
    $region3: #{coattention_forward.1} parent=1 // loop_header
      %s38 = sphi 0, %s42
      %p39 = scmp.ge.s32.totalorder %s38, 4
      %s48 = sphi 0, %s50
      %s51 = sphi 0, %s48
      %s52 = sphi 0, %s51
      %s68 = sphi 0, %s52
      %s72 = sphi 0, %s72
      %s74 = sphi 0, %s72
      %s75 = sphi 0, %s74
      %s89 = sphi 0, %s75
      %s93 = sphi 0, %s93
      %s95 = sphi 0, %s93
      %s96 = sphi 0, %s95
      %s110 = sphi 0, %s96
      %s114 = sphi 0, %s114
      %s116 = sphi 0, %s114
      %s117 = sphi 0, %s116
      %s131 = sphi 0, %s117
      %s135 = sphi 0, %s135
      %s137 = sphi 0, %s135
      %s138 = sphi 0, %s137
      %s152 = sphi 0, %s138
      %s156 = sphi 0, %s156
      %s158 = sphi 0, %s156
      %s159 = sphi 0, %s158
      %s173 = sphi 0, %s159
      %s177 = sphi 0, %s177
      %s179 = sphi 0, %s177
      %s180 = sphi 0, %s179
      %s194 = sphi 0, %s180
      %s198 = sphi 0, %s198
      %s200 = sphi 0, %s198
      %s201 = sphi 0, %s200
      %s215 = sphi 0, %s201
      %s219 = sphi 0, %s219
      %s221 = sphi 0, %s219
      %s222 = sphi 0, %s221
      %s236 = sphi 0, %s222
      %s240 = sphi 0, %s240
      %s242 = sphi 0, %s240
      %s243 = sphi 0, %s242
      %s257 = sphi 0, %s243
      %s261 = sphi 0, %s261
      %s263 = sphi 0, %s261
      %s264 = sphi 0, %s263
      %s278 = sphi 0, %s264
      %s282 = sphi 0, %s282
      %s284 = sphi 0, %s282
      %s285 = sphi 0, %s284
      %s299 = sphi 0, %s285
      %s303 = sphi 0, %s303
      %s305 = sphi 0, %s303
      %s306 = sphi 0, %s305
      %s320 = sphi 0, %s306
      %s324 = sphi 0, %s324
      %s326 = sphi 0, %s324
      %s327 = sphi 0, %s326
      %s341 = sphi 0, %s327
      %s345 = sphi 0, %s345
      %s347 = sphi 0, %s345
      %s348 = sphi 0, %s347
      %s362 = sphi 0, %s348
      %s366 = sphi 0, %s366
      %s368 = sphi 0, %s366
      %s369 = sphi 0, %s368
      %s383 = sphi 0, %s369
      %s387 = sphi 0, %s387
      %s389 = sphi 0, %s387
      %s390 = sphi 0, %s389
      %s404 = sphi 0, %s390
      %s408 = sphi 0, %s408
      %s410 = sphi 0, %s408
      %s411 = sphi 0, %s410
      %s425 = sphi 0, %s411
      %s429 = sphi 0, %s429
      %s431 = sphi 0, %s429
      %s432 = sphi 0, %s431
      %s446 = sphi 0, %s432
      %s450 = sphi 0, %s450
      %s452 = sphi 0, %s450
      %s453 = sphi 0, %s452
      %s467 = sphi 0, %s453
      %s471 = sphi 0, %s471
      %s473 = sphi 0, %s471
      %s474 = sphi 0, %s473
      %s488 = sphi 0, %s474
      %s492 = sphi 0, %s492
      %s494 = sphi 0, %s492
      %s495 = sphi 0, %s494
      %s509 = sphi 0, %s495
      %s513 = sphi 0, %s513
      %s515 = sphi 0, %s513
      %s516 = sphi 0, %s515
      %s530 = sphi 0, %s516
      %s534 = sphi 0, %s534
      %s536 = sphi 0, %s534
      %s537 = sphi 0, %s536
      %s551 = sphi 0, %s537
      %s557 = sphi 0, %s559
      %s560 = sphi 0, %s557
      %s561 = sphi 0, %s560
      %s577 = sphi 0, %s561
    $region4: #{coattention_forward.1} parent=1 // loop_header_branch
      %41 = sbr.rel (%p39) target = $region8
    $region5: #{coattention_forward.1} parent=1 // loop_body
      %s43 = ssub.s32 %s38, 1
      %s44 = ssub.s32 %s38, 2
      %s45 = sadd.s32 %s38, 1
      %s46 = ssub.s32 %s38, %s45
      %p47 = scmp.eq.s32.totalorder %s46, 0
      %s49 = sadd.s32 %s48, 1
      %s50 = scalar_select %p47, %s48, %s49
      %p53 = pneg %p47
      %p54 = scmp.eq.s32.totalorder %s38, 1
      %p55 = por %p53, %p54
      %p56 = scmp.ne.s32.totalorder %s48, %s51
      %p57 = scmp.eq.s32.totalorder %s38, 0
      %p58 = por %p56, %p57
      %p59 = scmp.ne.s32.totalorder %s48, %s51
      %p60 = scmp.eq.s32.totalorder %s43, 1
      %p61 = por %p59, %p60
      %p62 = scmp.ne.s32.totalorder %s51, %s52
      %p63 = scmp.eq.s32.totalorder %s43, 0
      %p64 = por %p62, %p63
      %p65 = scmp.ne.s32.totalorder %s51, %s52
      %p66 = scmp.eq.s32.totalorder %s44, 1
      %p67 = por %p65, %p66
      %p69 = scmp.ne.s32.totalorder %s52, %s68
      %p70 = scmp.eq.s32.totalorder %s44, 0
      %p71 = por %p69, %p70
      %s73 = sadd.s32 %s72, 1
      %p76 = scmp.eq.s32.totalorder %s38, 1
      %p77 = scmp.ne.s32.totalorder %s72, %s74
      %p78 = scmp.eq.s32.totalorder %s38, 0
      %p79 = por %p77, %p78
      %p80 = scmp.ne.s32.totalorder %s72, %s74
      %p81 = scmp.eq.s32.totalorder %s43, 1
      %p82 = por %p80, %p81
      %p83 = scmp.ne.s32.totalorder %s74, %s75
      %p84 = scmp.eq.s32.totalorder %s43, 0
      %p85 = por %p83, %p84
      %p86 = scmp.ne.s32.totalorder %s74, %s75
      %p87 = scmp.eq.s32.totalorder %s44, 1
      %p88 = por %p86, %p87
      %p90 = scmp.ne.s32.totalorder %s75, %s89
      %p91 = scmp.eq.s32.totalorder %s44, 0
      %p92 = por %p90, %p91
      %s94 = sadd.s32 %s93, 1
      %p97 = scmp.eq.s32.totalorder %s38, 1
      %p98 = scmp.ne.s32.totalorder %s93, %s95
      %p99 = scmp.eq.s32.totalorder %s38, 0
      %p100 = por %p98, %p99
      %p101 = scmp.ne.s32.totalorder %s93, %s95
      %p102 = scmp.eq.s32.totalorder %s43, 1
      %p103 = por %p101, %p102
      %p104 = scmp.ne.s32.totalorder %s95, %s96
      %p105 = scmp.eq.s32.totalorder %s43, 0
      %p106 = por %p104, %p105
      %p107 = scmp.ne.s32.totalorder %s95, %s96
      %p108 = scmp.eq.s32.totalorder %s44, 1
      %p109 = por %p107, %p108
      %p111 = scmp.ne.s32.totalorder %s96, %s110
      %p112 = scmp.eq.s32.totalorder %s44, 0
      %p113 = por %p111, %p112
      %s115 = sadd.s32 %s114, 1
      %p118 = scmp.eq.s32.totalorder %s38, 1
      %p119 = scmp.ne.s32.totalorder %s114, %s116
      %p120 = scmp.eq.s32.totalorder %s38, 0
      %p121 = por %p119, %p120
      %p122 = scmp.ne.s32.totalorder %s114, %s116
      %p123 = scmp.eq.s32.totalorder %s43, 1
      %p124 = por %p122, %p123
      %p125 = scmp.ne.s32.totalorder %s116, %s117
      %p126 = scmp.eq.s32.totalorder %s43, 0
      %p127 = por %p125, %p126
      %p128 = scmp.ne.s32.totalorder %s116, %s117
      %p129 = scmp.eq.s32.totalorder %s44, 1
      %p130 = por %p128, %p129
      %p132 = scmp.ne.s32.totalorder %s117, %s131
      %p133 = scmp.eq.s32.totalorder %s44, 0
      %p134 = por %p132, %p133
      %s136 = sadd.s32 %s135, 1
      %p139 = scmp.eq.s32.totalorder %s38, 1
      %p140 = scmp.ne.s32.totalorder %s135, %s137
      %p141 = scmp.eq.s32.totalorder %s38, 0
      %p142 = por %p140, %p141
      %p143 = scmp.ne.s32.totalorder %s135, %s137
      %p144 = scmp.eq.s32.totalorder %s43, 1
      %p145 = por %p143, %p144
      %p146 = scmp.ne.s32.totalorder %s137, %s138
      %p147 = scmp.eq.s32.totalorder %s43, 0
      %p148 = por %p146, %p147
      %p149 = scmp.ne.s32.totalorder %s137, %s138
      %p150 = scmp.eq.s32.totalorder %s44, 1
      %p151 = por %p149, %p150
      %p153 = scmp.ne.s32.totalorder %s138, %s152
      %p154 = scmp.eq.s32.totalorder %s44, 0
      %p155 = por %p153, %p154
      %s157 = sadd.s32 %s156, 1
      %p160 = scmp.eq.s32.totalorder %s38, 1
      %p161 = scmp.ne.s32.totalorder %s156, %s158
      %p162 = scmp.eq.s32.totalorder %s38, 0
      %p163 = por %p161, %p162
      %p164 = scmp.ne.s32.totalorder %s156, %s158
      %p165 = scmp.eq.s32.totalorder %s43, 1
      %p166 = por %p164, %p165
      %p167 = scmp.ne.s32.totalorder %s158, %s159
      %p168 = scmp.eq.s32.totalorder %s43, 0
      %p169 = por %p167, %p168
      %p170 = scmp.ne.s32.totalorder %s158, %s159
      %p171 = scmp.eq.s32.totalorder %s44, 1
      %p172 = por %p170, %p171
      %p174 = scmp.ne.s32.totalorder %s159, %s173
      %p175 = scmp.eq.s32.totalorder %s44, 0
      %p176 = por %p174, %p175
      %s178 = sadd.s32 %s177, 1
      %p181 = scmp.eq.s32.totalorder %s38, 1
      %p182 = scmp.ne.s32.totalorder %s177, %s179
      %p183 = scmp.eq.s32.totalorder %s38, 0
      %p184 = por %p182, %p183
      %p185 = scmp.ne.s32.totalorder %s177, %s179
      %p186 = scmp.eq.s32.totalorder %s43, 1
      %p187 = por %p185, %p186
      %p188 = scmp.ne.s32.totalorder %s179, %s180
      %p189 = scmp.eq.s32.totalorder %s43, 0
      %p190 = por %p188, %p189
      %p191 = scmp.ne.s32.totalorder %s179, %s180
      %p192 = scmp.eq.s32.totalorder %s44, 1
      %p193 = por %p191, %p192
      %p195 = scmp.ne.s32.totalorder %s180, %s194
      %p196 = scmp.eq.s32.totalorder %s44, 0
      %p197 = por %p195, %p196
      %s199 = sadd.s32 %s198, 1
      %p202 = scmp.eq.s32.totalorder %s38, 1
      %p203 = scmp.ne.s32.totalorder %s198, %s200
      %p204 = scmp.eq.s32.totalorder %s38, 0
      %p205 = por %p203, %p204
      %p206 = scmp.ne.s32.totalorder %s198, %s200
      %p207 = scmp.eq.s32.totalorder %s43, 1
      %p208 = por %p206, %p207
      %p209 = scmp.ne.s32.totalorder %s200, %s201
      %p210 = scmp.eq.s32.totalorder %s43, 0
      %p211 = por %p209, %p210
      %p212 = scmp.ne.s32.totalorder %s200, %s201
      %p213 = scmp.eq.s32.totalorder %s44, 1
      %p214 = por %p212, %p213
      %p216 = scmp.ne.s32.totalorder %s201, %s215
      %p217 = scmp.eq.s32.totalorder %s44, 0
      %p218 = por %p216, %p217
      %s220 = sadd.s32 %s219, 1
      %p223 = scmp.eq.s32.totalorder %s38, 1
      %p224 = scmp.ne.s32.totalorder %s219, %s221
      %p225 = scmp.eq.s32.totalorder %s38, 0
      %p226 = por %p224, %p225
      %p227 = scmp.ne.s32.totalorder %s219, %s221
      %p228 = scmp.eq.s32.totalorder %s43, 1
      %p229 = por %p227, %p228
      %p230 = scmp.ne.s32.totalorder %s221, %s222
      %p231 = scmp.eq.s32.totalorder %s43, 0
      %p232 = por %p230, %p231
      %p233 = scmp.ne.s32.totalorder %s221, %s222
      %p234 = scmp.eq.s32.totalorder %s44, 1
      %p235 = por %p233, %p234
      %p237 = scmp.ne.s32.totalorder %s222, %s236
      %p238 = scmp.eq.s32.totalorder %s44, 0
      %p239 = por %p237, %p238
      %s241 = sadd.s32 %s240, 1
      %p244 = scmp.eq.s32.totalorder %s38, 1
      %p245 = scmp.ne.s32.totalorder %s240, %s242
      %p246 = scmp.eq.s32.totalorder %s38, 0
      %p247 = por %p245, %p246
      %p248 = scmp.ne.s32.totalorder %s240, %s242
      %p249 = scmp.eq.s32.totalorder %s43, 1
      %p250 = por %p248, %p249
      %p251 = scmp.ne.s32.totalorder %s242, %s243
      %p252 = scmp.eq.s32.totalorder %s43, 0
      %p253 = por %p251, %p252
      %p254 = scmp.ne.s32.totalorder %s242, %s243
      %p255 = scmp.eq.s32.totalorder %s44, 1
      %p256 = por %p254, %p255
      %p258 = scmp.ne.s32.totalorder %s243, %s257
      %p259 = scmp.eq.s32.totalorder %s44, 0
      %p260 = por %p258, %p259
      %s262 = sadd.s32 %s261, 1
      %p265 = scmp.eq.s32.totalorder %s38, 1
      %p266 = scmp.ne.s32.totalorder %s261, %s263
      %p267 = scmp.eq.s32.totalorder %s38, 0
      %p268 = por %p266, %p267
      %p269 = scmp.ne.s32.totalorder %s261, %s263
      %p270 = scmp.eq.s32.totalorder %s43, 1
      %p271 = por %p269, %p270
      %p272 = scmp.ne.s32.totalorder %s263, %s264
      %p273 = scmp.eq.s32.totalorder %s43, 0
      %p274 = por %p272, %p273
      %p275 = scmp.ne.s32.totalorder %s263, %s264
      %p276 = scmp.eq.s32.totalorder %s44, 1
      %p277 = por %p275, %p276
      %p279 = scmp.ne.s32.totalorder %s264, %s278
      %p280 = scmp.eq.s32.totalorder %s44, 0
      %p281 = por %p279, %p280
      %s283 = sadd.s32 %s282, 1
      %p286 = scmp.eq.s32.totalorder %s38, 1
      %p287 = scmp.ne.s32.totalorder %s282, %s284
      %p288 = scmp.eq.s32.totalorder %s38, 0
      %p289 = por %p287, %p288
      %p290 = scmp.ne.s32.totalorder %s282, %s284
      %p291 = scmp.eq.s32.totalorder %s43, 1
      %p292 = por %p290, %p291
      %p293 = scmp.ne.s32.totalorder %s284, %s285
      %p294 = scmp.eq.s32.totalorder %s43, 0
      %p295 = por %p293, %p294
      %p296 = scmp.ne.s32.totalorder %s284, %s285
      %p297 = scmp.eq.s32.totalorder %s44, 1
      %p298 = por %p296, %p297
      %p300 = scmp.ne.s32.totalorder %s285, %s299
      %p301 = scmp.eq.s32.totalorder %s44, 0
      %p302 = por %p300, %p301
      %s304 = sadd.s32 %s303, 1
      %p307 = scmp.eq.s32.totalorder %s38, 1
      %p308 = scmp.ne.s32.totalorder %s303, %s305
      %p309 = scmp.eq.s32.totalorder %s38, 0
      %p310 = por %p308, %p309
      %p311 = scmp.ne.s32.totalorder %s303, %s305
      %p312 = scmp.eq.s32.totalorder %s43, 1
      %p313 = por %p311, %p312
      %p314 = scmp.ne.s32.totalorder %s305, %s306
      %p315 = scmp.eq.s32.totalorder %s43, 0
      %p316 = por %p314, %p315
      %p317 = scmp.ne.s32.totalorder %s305, %s306
      %p318 = scmp.eq.s32.totalorder %s44, 1
      %p319 = por %p317, %p318
      %p321 = scmp.ne.s32.totalorder %s306, %s320
      %p322 = scmp.eq.s32.totalorder %s44, 0
      %p323 = por %p321, %p322
      %s325 = sadd.s32 %s324, 1
      %p328 = scmp.eq.s32.totalorder %s38, 1
      %p329 = scmp.ne.s32.totalorder %s324, %s326
      %p330 = scmp.eq.s32.totalorder %s38, 0
      %p331 = por %p329, %p330
      %p332 = scmp.ne.s32.totalorder %s324, %s326
      %p333 = scmp.eq.s32.totalorder %s43, 1
      %p334 = por %p332, %p333
      %p335 = scmp.ne.s32.totalorder %s326, %s327
      %p336 = scmp.eq.s32.totalorder %s43, 0
      %p337 = por %p335, %p336
      %p338 = scmp.ne.s32.totalorder %s326, %s327
      %p339 = scmp.eq.s32.totalorder %s44, 1
      %p340 = por %p338, %p339
      %p342 = scmp.ne.s32.totalorder %s327, %s341
      %p343 = scmp.eq.s32.totalorder %s44, 0
      %p344 = por %p342, %p343
      %s346 = sadd.s32 %s345, 1
      %p349 = scmp.eq.s32.totalorder %s38, 1
      %p350 = scmp.ne.s32.totalorder %s345, %s347
      %p351 = scmp.eq.s32.totalorder %s38, 0
      %p352 = por %p350, %p351
      %p353 = scmp.ne.s32.totalorder %s345, %s347
      %p354 = scmp.eq.s32.totalorder %s43, 1
      %p355 = por %p353, %p354
      %p356 = scmp.ne.s32.totalorder %s347, %s348
      %p357 = scmp.eq.s32.totalorder %s43, 0
      %p358 = por %p356, %p357
      %p359 = scmp.ne.s32.totalorder %s347, %s348
      %p360 = scmp.eq.s32.totalorder %s44, 1
      %p361 = por %p359, %p360
      %p363 = scmp.ne.s32.totalorder %s348, %s362
      %p364 = scmp.eq.s32.totalorder %s44, 0
      %p365 = por %p363, %p364
      %s367 = sadd.s32 %s366, 1
      %p370 = scmp.eq.s32.totalorder %s38, 1
      %p371 = scmp.ne.s32.totalorder %s366, %s368
      %p372 = scmp.eq.s32.totalorder %s38, 0
      %p373 = por %p371, %p372
      %p374 = scmp.ne.s32.totalorder %s366, %s368
      %p375 = scmp.eq.s32.totalorder %s43, 1
      %p376 = por %p374, %p375
      %p377 = scmp.ne.s32.totalorder %s368, %s369
      %p378 = scmp.eq.s32.totalorder %s43, 0
      %p379 = por %p377, %p378
      %p380 = scmp.ne.s32.totalorder %s368, %s369
      %p381 = scmp.eq.s32.totalorder %s44, 1
      %p382 = por %p380, %p381
      %p384 = scmp.ne.s32.totalorder %s369, %s383
      %p385 = scmp.eq.s32.totalorder %s44, 0
      %p386 = por %p384, %p385
      %s388 = sadd.s32 %s387, 1
      %p391 = scmp.eq.s32.totalorder %s38, 1
      %p392 = scmp.ne.s32.totalorder %s387, %s389
      %p393 = scmp.eq.s32.totalorder %s38, 0
      %p394 = por %p392, %p393
      %p395 = scmp.ne.s32.totalorder %s387, %s389
      %p396 = scmp.eq.s32.totalorder %s43, 1
      %p397 = por %p395, %p396
      %p398 = scmp.ne.s32.totalorder %s389, %s390
      %p399 = scmp.eq.s32.totalorder %s43, 0
      %p400 = por %p398, %p399
      %p401 = scmp.ne.s32.totalorder %s389, %s390
      %p402 = scmp.eq.s32.totalorder %s44, 1
      %p403 = por %p401, %p402
      %p405 = scmp.ne.s32.totalorder %s390, %s404
      %p406 = scmp.eq.s32.totalorder %s44, 0
      %p407 = por %p405, %p406
      %s409 = sadd.s32 %s408, 1
      %p412 = scmp.eq.s32.totalorder %s38, 1
      %p413 = scmp.ne.s32.totalorder %s408, %s410
      %p414 = scmp.eq.s32.totalorder %s38, 0
      %p415 = por %p413, %p414
      %p416 = scmp.ne.s32.totalorder %s408, %s410
      %p417 = scmp.eq.s32.totalorder %s43, 1
      %p418 = por %p416, %p417
      %p419 = scmp.ne.s32.totalorder %s410, %s411
      %p420 = scmp.eq.s32.totalorder %s43, 0
      %p421 = por %p419, %p420
      %p422 = scmp.ne.s32.totalorder %s410, %s411
      %p423 = scmp.eq.s32.totalorder %s44, 1
      %p424 = por %p422, %p423
      %p426 = scmp.ne.s32.totalorder %s411, %s425
      %p427 = scmp.eq.s32.totalorder %s44, 0
      %p428 = por %p426, %p427
      %s430 = sadd.s32 %s429, 1
      %p433 = scmp.eq.s32.totalorder %s38, 1
      %p434 = scmp.ne.s32.totalorder %s429, %s431
      %p435 = scmp.eq.s32.totalorder %s38, 0
      %p436 = por %p434, %p435
      %p437 = scmp.ne.s32.totalorder %s429, %s431
      %p438 = scmp.eq.s32.totalorder %s43, 1
      %p439 = por %p437, %p438
      %p440 = scmp.ne.s32.totalorder %s431, %s432
      %p441 = scmp.eq.s32.totalorder %s43, 0
      %p442 = por %p440, %p441
      %p443 = scmp.ne.s32.totalorder %s431, %s432
      %p444 = scmp.eq.s32.totalorder %s44, 1
      %p445 = por %p443, %p444
      %p447 = scmp.ne.s32.totalorder %s432, %s446
      %p448 = scmp.eq.s32.totalorder %s44, 0
      %p449 = por %p447, %p448
      %s451 = sadd.s32 %s450, 1
      %p454 = scmp.eq.s32.totalorder %s38, 1
      %p455 = scmp.ne.s32.totalorder %s450, %s452
      %p456 = scmp.eq.s32.totalorder %s38, 0
      %p457 = por %p455, %p456
      %p458 = scmp.ne.s32.totalorder %s450, %s452
      %p459 = scmp.eq.s32.totalorder %s43, 1
      %p460 = por %p458, %p459
      %p461 = scmp.ne.s32.totalorder %s452, %s453
      %p462 = scmp.eq.s32.totalorder %s43, 0
      %p463 = por %p461, %p462
      %p464 = scmp.ne.s32.totalorder %s452, %s453
      %p465 = scmp.eq.s32.totalorder %s44, 1
      %p466 = por %p464, %p465
      %p468 = scmp.ne.s32.totalorder %s453, %s467
      %p469 = scmp.eq.s32.totalorder %s44, 0
      %p470 = por %p468, %p469
      %s472 = sadd.s32 %s471, 1
      %p475 = scmp.eq.s32.totalorder %s38, 1
      %p476 = scmp.ne.s32.totalorder %s471, %s473
      %p477 = scmp.eq.s32.totalorder %s38, 0
      %p478 = por %p476, %p477
      %p479 = scmp.ne.s32.totalorder %s471, %s473
      %p480 = scmp.eq.s32.totalorder %s43, 1
      %p481 = por %p479, %p480
      %p482 = scmp.ne.s32.totalorder %s473, %s474
      %p483 = scmp.eq.s32.totalorder %s43, 0
      %p484 = por %p482, %p483
      %p485 = scmp.ne.s32.totalorder %s473, %s474
      %p486 = scmp.eq.s32.totalorder %s44, 1
      %p487 = por %p485, %p486
      %p489 = scmp.ne.s32.totalorder %s474, %s488
      %p490 = scmp.eq.s32.totalorder %s44, 0
      %p491 = por %p489, %p490
      %s493 = sadd.s32 %s492, 1
      %p496 = scmp.eq.s32.totalorder %s38, 1
      %p497 = scmp.ne.s32.totalorder %s492, %s494
      %p498 = scmp.eq.s32.totalorder %s38, 0
      %p499 = por %p497, %p498
      %p500 = scmp.ne.s32.totalorder %s492, %s494
      %p501 = scmp.eq.s32.totalorder %s43, 1
      %p502 = por %p500, %p501
      %p503 = scmp.ne.s32.totalorder %s494, %s495
      %p504 = scmp.eq.s32.totalorder %s43, 0
      %p505 = por %p503, %p504
      %p506 = scmp.ne.s32.totalorder %s494, %s495
      %p507 = scmp.eq.s32.totalorder %s44, 1
      %p508 = por %p506, %p507
      %p510 = scmp.ne.s32.totalorder %s495, %s509
      %p511 = scmp.eq.s32.totalorder %s44, 0
      %p512 = por %p510, %p511
      %s514 = sadd.s32 %s513, 1
      %p517 = scmp.eq.s32.totalorder %s38, 1
      %p518 = scmp.ne.s32.totalorder %s513, %s515
      %p519 = scmp.eq.s32.totalorder %s38, 0
      %p520 = por %p518, %p519
      %p521 = scmp.ne.s32.totalorder %s513, %s515
      %p522 = scmp.eq.s32.totalorder %s43, 1
      %p523 = por %p521, %p522
      %p524 = scmp.ne.s32.totalorder %s515, %s516
      %p525 = scmp.eq.s32.totalorder %s43, 0
      %p526 = por %p524, %p525
      %p527 = scmp.ne.s32.totalorder %s515, %s516
      %p528 = scmp.eq.s32.totalorder %s44, 1
      %p529 = por %p527, %p528
      %p531 = scmp.ne.s32.totalorder %s516, %s530
      %p532 = scmp.eq.s32.totalorder %s44, 0
      %p533 = por %p531, %p532
      %s535 = sadd.s32 %s534, 1
      %p538 = scmp.eq.s32.totalorder %s38, 1
      %p539 = scmp.ne.s32.totalorder %s534, %s536
      %p540 = scmp.eq.s32.totalorder %s38, 0
      %p541 = por %p539, %p540
      %p542 = scmp.ne.s32.totalorder %s534, %s536
      %p543 = scmp.eq.s32.totalorder %s43, 1
      %p544 = por %p542, %p543
      %p545 = scmp.ne.s32.totalorder %s536, %s537
      %p546 = scmp.eq.s32.totalorder %s43, 0
      %p547 = por %p545, %p546
      %p548 = scmp.ne.s32.totalorder %s536, %s537
      %p549 = scmp.eq.s32.totalorder %s44, 1
      %p550 = por %p548, %p549
      %p552 = scmp.ne.s32.totalorder %s537, %s551
      %p553 = scmp.eq.s32.totalorder %s44, 0
      %p554 = por %p552, %p553
      %s555 = ssub.s32 %s38, %s45
      %p556 = scmp.eq.s32.totalorder %s555, 0
      %s558 = sadd.s32 %s557, 1
      %s559 = scalar_select %p556, %s557, %s558
      %p562 = pneg %p556
      %p563 = scmp.eq.s32.totalorder %s38, 1
      %p564 = por %p562, %p563
      %p565 = scmp.ne.s32.totalorder %s557, %s560
      %p566 = scmp.eq.s32.totalorder %s38, 0
      %p567 = por %p565, %p566
      %p568 = scmp.ne.s32.totalorder %s557, %s560
      %p569 = scmp.eq.s32.totalorder %s43, 1
      %p570 = por %p568, %p569
      %p571 = scmp.ne.s32.totalorder %s560, %s561
      %p572 = scmp.eq.s32.totalorder %s43, 0
      %p573 = por %p571, %p572
      %p574 = scmp.ne.s32.totalorder %s560, %s561
      %p575 = scmp.eq.s32.totalorder %s44, 1
      %p576 = por %p574, %p575
      %p578 = scmp.ne.s32.totalorder %s561, %s577
      %p579 = scmp.eq.s32.totalorder %s44, 0
      %p580 = por %p578, %p579
      %p581 = scmp.le.s32.totalorder 1, %s38
      %p582 = scmp.lt.s32.totalorder %s38, 3
      %p583 = pnand %p581, %p582
      %p584 = pneg %p583
      // Predicated region
      $region9: #{coattention_forward.1} parent=5 // pred_check
        _
      $region10: #{coattention_forward.1} parent=5 // pred_check_branch
        %586 = sbr.rel (%p583) target = $region12
      $region11: #{coattention_forward.1} parent=5 // pred_region
        %s587 = ssub.s32 %s38, 1
        // Predicated region
        $region13: #{coattention_forward.1} parent=11 // pred_check
          %p588 = pneg %p85
        $region14: #{coattention_forward.1} parent=11 // pred_check_branch
          %590 = sbr.rel (%p588) target = $region16
        $region15: #{coattention_forward.1} parent=11 // pred_region
          _
        $region16: #{coattention_forward.1} parent=11 // pred_fallthru
          _
        // Predicated region
        $region17: #{coattention_forward.1} parent=11 // pred_check
          %p591 = pneg %p106
        $region18: #{coattention_forward.1} parent=11 // pred_check_branch
          %593 = sbr.rel (%p591) target = $region20
        $region19: #{coattention_forward.1} parent=11 // pred_region
          _
        $region20: #{coattention_forward.1} parent=11 // pred_fallthru
          _
        // Predicated region
        $region21: #{coattention_forward.1} parent=11 // pred_check
          %p594 = pneg %p127
        $region22: #{coattention_forward.1} parent=11 // pred_check_branch
          %596 = sbr.rel (%p594) target = $region24
        $region23: #{coattention_forward.1} parent=11 // pred_region
          _
        $region24: #{coattention_forward.1} parent=11 // pred_fallthru
          _
        // Predicated region
        $region25: #{coattention_forward.1} parent=11 // pred_check
          %p597 = pneg %p148
        $region26: #{coattention_forward.1} parent=11 // pred_check_branch
          %599 = sbr.rel (%p597) target = $region28
        $region27: #{coattention_forward.1} parent=11 // pred_region
          _
        $region28: #{coattention_forward.1} parent=11 // pred_fallthru
          _
        // Predicated region
        $region29: #{coattention_forward.1} parent=11 // pred_check
          %p600 = pneg %p169
        $region30: #{coattention_forward.1} parent=11 // pred_check_branch
          %602 = sbr.rel (%p600) target = $region32
        $region31: #{coattention_forward.1} parent=11 // pred_region
          _
        $region32: #{coattention_forward.1} parent=11 // pred_fallthru
          _
        // Predicated region
        $region33: #{coattention_forward.1} parent=11 // pred_check
          %p603 = pneg %p190
        $region34: #{coattention_forward.1} parent=11 // pred_check_branch
          %605 = sbr.rel (%p603) target = $region36
        $region35: #{coattention_forward.1} parent=11 // pred_region
          _
        $region36: #{coattention_forward.1} parent=11 // pred_fallthru
          _
        // Predicated region
        $region37: #{coattention_forward.1} parent=11 // pred_check
          %p606 = pneg %p211
        $region38: #{coattention_forward.1} parent=11 // pred_check_branch
          %608 = sbr.rel (%p606) target = $region40
        $region39: #{coattention_forward.1} parent=11 // pred_region
          _
        $region40: #{coattention_forward.1} parent=11 // pred_fallthru
          _
        // Predicated region
        $region41: #{coattention_forward.1} parent=11 // pred_check
          %p609 = pneg %p232
        $region42: #{coattention_forward.1} parent=11 // pred_check_branch
          %611 = sbr.rel (%p609) target = $region44
        $region43: #{coattention_forward.1} parent=11 // pred_region
          _
        $region44: #{coattention_forward.1} parent=11 // pred_fallthru
          _
        // Predicated region
        $region45: #{coattention_forward.1} parent=11 // pred_check
          %p612 = pneg %p253
        $region46: #{coattention_forward.1} parent=11 // pred_check_branch
          %614 = sbr.rel (%p612) target = $region48
        $region47: #{coattention_forward.1} parent=11 // pred_region
          _
        $region48: #{coattention_forward.1} parent=11 // pred_fallthru
          _
        // Predicated region
        $region49: #{coattention_forward.1} parent=11 // pred_check
          %p615 = pneg %p274
        $region50: #{coattention_forward.1} parent=11 // pred_check_branch
          %617 = sbr.rel (%p615) target = $region52
        $region51: #{coattention_forward.1} parent=11 // pred_region
          _
        $region52: #{coattention_forward.1} parent=11 // pred_fallthru
          _
        // Predicated region
        $region53: #{coattention_forward.1} parent=11 // pred_check
          %p618 = pneg %p295
        $region54: #{coattention_forward.1} parent=11 // pred_check_branch
          %620 = sbr.rel (%p618) target = $region56
        $region55: #{coattention_forward.1} parent=11 // pred_region
          _
        $region56: #{coattention_forward.1} parent=11 // pred_fallthru
          _
        // Predicated region
        $region57: #{coattention_forward.1} parent=11 // pred_check
          %p621 = pneg %p316
        $region58: #{coattention_forward.1} parent=11 // pred_check_branch
          %623 = sbr.rel (%p621) target = $region60
        $region59: #{coattention_forward.1} parent=11 // pred_region
          _
        $region60: #{coattention_forward.1} parent=11 // pred_fallthru
          _
        // Predicated region
        $region61: #{coattention_forward.1} parent=11 // pred_check
          %p624 = pneg %p337
        $region62: #{coattention_forward.1} parent=11 // pred_check_branch
          %626 = sbr.rel (%p624) target = $region64
        $region63: #{coattention_forward.1} parent=11 // pred_region
          _
        $region64: #{coattention_forward.1} parent=11 // pred_fallthru
          _
        // Predicated region
        $region65: #{coattention_forward.1} parent=11 // pred_check
          %p627 = pneg %p358
        $region66: #{coattention_forward.1} parent=11 // pred_check_branch
          %629 = sbr.rel (%p627) target = $region68
        $region67: #{coattention_forward.1} parent=11 // pred_region
          _
        $region68: #{coattention_forward.1} parent=11 // pred_fallthru
          _
        // Predicated region
        $region69: #{coattention_forward.1} parent=11 // pred_check
          %p630 = pneg %p379
        $region70: #{coattention_forward.1} parent=11 // pred_check_branch
          %632 = sbr.rel (%p630) target = $region72
        $region71: #{coattention_forward.1} parent=11 // pred_region
          _
        $region72: #{coattention_forward.1} parent=11 // pred_fallthru
          _
        // Predicated region
        $region73: #{coattention_forward.1} parent=11 // pred_check
          %p633 = pneg %p400
        $region74: #{coattention_forward.1} parent=11 // pred_check_branch
          %635 = sbr.rel (%p633) target = $region76
        $region75: #{coattention_forward.1} parent=11 // pred_region
          %s637 = ssub.s32 16, 16
          %638 = vsyncadd [#allocation7], %s637
          %s640 = sshll.u32 [#allocation6], 4
          %s641 = int_to_ptr.vmem [resolvable:$true] %s640
          %643 = dma.hbm_to_vmem [thread:$0]  %s16, 16, %s641, [#allocation7]
        $region76: #{coattention_forward.1} parent=11 // pred_fallthru
          _
        // Predicated region
        $region77: #{coattention_forward.1} parent=11 // pred_check
          %p644 = pneg %p421
        $region78: #{coattention_forward.1} parent=11 // pred_check_branch
          %646 = sbr.rel (%p644) target = $region80
        $region79: #{coattention_forward.1} parent=11 // pred_region
          %s648 = ssub.s32 256, 256
          %649 = vsyncadd [#allocation10], %s648
          %s650 = sshll.u32 [#allocation9], 4
          %s651 = int_to_ptr.vmem [resolvable:$true] %s650
          %656 = dma.hbm_to_vmem [thread:$0]  %s17, 256, %s651, [#allocation10], 64, 64, 4
        $region80: #{coattention_forward.1} parent=11 // pred_fallthru
          _
        // Predicated region
        $region81: #{coattention_forward.1} parent=11 // pred_check
          %p657 = pneg %p442
        $region82: #{coattention_forward.1} parent=11 // pred_check_branch
          %659 = sbr.rel (%p657) target = $region84
        $region83: #{coattention_forward.1} parent=11 // pred_region
          %s661 = ssub.s32 16, 16
          %662 = vsyncadd [#allocation10], %s661
          %s664 = sshll.u32 [#allocation11], 4
          %s665 = int_to_ptr.vmem [resolvable:$true] %s664
          %667 = dma.hbm_to_vmem [thread:$0]  %s18, 16, %s665, [#allocation10]
        $region84: #{coattention_forward.1} parent=11 // pred_fallthru
          _
        // Predicated region
        $region85: #{coattention_forward.1} parent=11 // pred_check
          %p668 = pneg %p463
        $region86: #{coattention_forward.1} parent=11 // pred_check_branch
          %670 = sbr.rel (%p668) target = $region88
        $region87: #{coattention_forward.1} parent=11 // pred_region
          %s672 = ssub.s32 16, 16
          %673 = vsyncadd [#allocation13], %s672
          %s675 = sshll.u32 [#allocation12], 4
          %s676 = int_to_ptr.vmem [resolvable:$true] %s675
          %678 = dma.hbm_to_vmem [thread:$0]  %s19, 16, %s676, [#allocation13]
        $region88: #{coattention_forward.1} parent=11 // pred_fallthru
          _
        // Predicated region
        $region89: #{coattention_forward.1} parent=11 // pred_check
          %p679 = pneg %p484
        $region90: #{coattention_forward.1} parent=11 // pred_check_branch
          %681 = sbr.rel (%p679) target = $region92
        $region91: #{coattention_forward.1} parent=11 // pred_region
          %s683 = ssub.s32 16, 16
          %684 = vsyncadd [#allocation13], %s683
          %s686 = sshll.u32 [#allocation14], 4
          %s687 = int_to_ptr.vmem [resolvable:$true] %s686
          %689 = dma.hbm_to_vmem [thread:$0]  %s20, 16, %s687, [#allocation13]
        $region92: #{coattention_forward.1} parent=11 // pred_fallthru
          _
        // Predicated region
        $region93: #{coattention_forward.1} parent=11 // pred_check
          %p690 = pneg %p505
        $region94: #{coattention_forward.1} parent=11 // pred_check_branch
          %692 = sbr.rel (%p690) target = $region96
        $region95: #{coattention_forward.1} parent=11 // pred_region
          %s694 = ssub.s32 256, 256
          %695 = vsyncadd [#allocation16], %s694
          %s696 = sshll.u32 [#allocation15], 4
          %s697 = int_to_ptr.vmem [resolvable:$true] %s696
          %702 = dma.hbm_to_vmem [thread:$0]  %s21, 256, %s697, [#allocation16], 64, 64, 4
        $region96: #{coattention_forward.1} parent=11 // pred_fallthru
          _
        // Predicated region
        $region97: #{coattention_forward.1} parent=11 // pred_check
          %p703 = pneg %p526
        $region98: #{coattention_forward.1} parent=11 // pred_check_branch
          %705 = sbr.rel (%p703) target = $region100
        $region99: #{coattention_forward.1} parent=11 // pred_region
          %s707 = ssub.s32 256, 256
          %708 = vsyncadd [#allocation16], %s707
          %s709 = sshll.u32 [#allocation17], 4
          %s710 = int_to_ptr.vmem [resolvable:$true] %s709
          %715 = dma.hbm_to_vmem [thread:$0]  %s22, 256, %s710, [#allocation16], 64, 64, 4
        $region100: #{coattention_forward.1} parent=11 // pred_fallthru
          _
        // Predicated region
        $region101: #{coattention_forward.1} parent=11 // pred_check
          %p716 = pneg %p547
        $region102: #{coattention_forward.1} parent=11 // pred_check_branch
          %718 = sbr.rel (%p716) target = $region104
        $region103: #{coattention_forward.1} parent=11 // pred_region
          %s720 = ssub.s32 16, 16
          %721 = vsyncadd [#allocation19], %s720
          %s723 = sshll.u32 [#allocation18], 4
          %s724 = int_to_ptr.vmem [resolvable:$true] %s723
          %726 = dma.hbm_to_vmem [thread:$0]  %s23, 16, %s724, [#allocation19]
        $region104: #{coattention_forward.1} parent=11 // pred_fallthru
          _
      $region12: #{coattention_forward.1} parent=5 // pred_fallthru
        _
      %p727 = scmp.lt.s32.totalorder %s38, 2
      // Predicated region
      $region105: #{coattention_forward.1} parent=5 // pred_check
        %p728 = pneg %p727
      $region106: #{coattention_forward.1} parent=5 // pred_check_branch
        %730 = sbr.rel (%p728) target = $region108
      $region107: #{coattention_forward.1} parent=5 // pred_region
        // Predicated region
        $region109: #{coattention_forward.1} parent=107 // pred_check
          %p731 = pneg %p58
        $region110: #{coattention_forward.1} parent=107 // pred_check_branch
          %733 = sbr.rel (%p731) target = $region112
        $region111: #{coattention_forward.1} parent=107 // pred_region
          %p734 = scmp.lt.s32.totalorder %s38, 1
          %s735 = scalar_select %p734, %s38, 1
          %s736 = smul.addr %s735, 8
          %s737 = smul.addr %s736, 8
          %s738 = scalar_lea.vmem %s0, %s737
        $region112: #{coattention_forward.1} parent=107 // pred_fallthru
          _
      $region108: #{coattention_forward.1} parent=5 // pred_fallthru
        _
      %p739 = scmp.le.s32.totalorder 1, %s38
      %p740 = scmp.lt.s32.totalorder %s38, 3
      %p741 = pnand %p739, %p740
      %p742 = pneg %p741
      // Predicated region
      $region113: #{coattention_forward.1} parent=5 // pred_check
        _
      $region114: #{coattention_forward.1} parent=5 // pred_check_branch
        %744 = sbr.rel (%p741) target = $region116
      $region115: #{coattention_forward.1} parent=5 // pred_region
        %s745 = ssub.s32 %s38, 1
        // Predicated region
        $region117: #{coattention_forward.1} parent=115 // pred_check
          %p746 = pneg %p400
        $region118: #{coattention_forward.1} parent=115 // pred_check_branch
          %748 = sbr.rel (%p746) target = $region120
        $region119: #{coattention_forward.1} parent=115 // pred_region
          %749 = dma.done [#allocation7], 16
        $region120: #{coattention_forward.1} parent=115 // pred_fallthru
          _
        // Predicated region
        $region121: #{coattention_forward.1} parent=115 // pred_check
          %p750 = pneg %p421
        $region122: #{coattention_forward.1} parent=115 // pred_check_branch
          %752 = sbr.rel (%p750) target = $region124
        $region123: #{coattention_forward.1} parent=115 // pred_region
          %753 = dma.done [#allocation10], 256
        $region124: #{coattention_forward.1} parent=115 // pred_fallthru
          _
        // Predicated region
        $region125: #{coattention_forward.1} parent=115 // pred_check
          %p754 = pneg %p442
        $region126: #{coattention_forward.1} parent=115 // pred_check_branch
          %756 = sbr.rel (%p754) target = $region128
        $region127: #{coattention_forward.1} parent=115 // pred_region
          %757 = dma.done [#allocation10], 16
        $region128: #{coattention_forward.1} parent=115 // pred_fallthru
          _
        // Predicated region
        $region129: #{coattention_forward.1} parent=115 // pred_check
          %p758 = pneg %p463
        $region130: #{coattention_forward.1} parent=115 // pred_check_branch
          %760 = sbr.rel (%p758) target = $region132
        $region131: #{coattention_forward.1} parent=115 // pred_region
          %761 = dma.done [#allocation13], 16
        $region132: #{coattention_forward.1} parent=115 // pred_fallthru
          _
        // Predicated region
        $region133: #{coattention_forward.1} parent=115 // pred_check
          %p762 = pneg %p484
        $region134: #{coattention_forward.1} parent=115 // pred_check_branch
          %764 = sbr.rel (%p762) target = $region136
        $region135: #{coattention_forward.1} parent=115 // pred_region
          %765 = dma.done [#allocation13], 16
        $region136: #{coattention_forward.1} parent=115 // pred_fallthru
          _
        // Predicated region
        $region137: #{coattention_forward.1} parent=115 // pred_check
          %p766 = pneg %p505
        $region138: #{coattention_forward.1} parent=115 // pred_check_branch
          %768 = sbr.rel (%p766) target = $region140
        $region139: #{coattention_forward.1} parent=115 // pred_region
          %769 = dma.done [#allocation16], 256
        $region140: #{coattention_forward.1} parent=115 // pred_fallthru
          _
        // Predicated region
        $region141: #{coattention_forward.1} parent=115 // pred_check
          %p770 = pneg %p526
        $region142: #{coattention_forward.1} parent=115 // pred_check_branch
          %772 = sbr.rel (%p770) target = $region144
        $region143: #{coattention_forward.1} parent=115 // pred_region
          %773 = dma.done [#allocation16], 256
        $region144: #{coattention_forward.1} parent=115 // pred_fallthru
          _
        // Predicated region
        $region145: #{coattention_forward.1} parent=115 // pred_check
          %p774 = pneg %p547
        $region146: #{coattention_forward.1} parent=115 // pred_check_branch
          %776 = sbr.rel (%p774) target = $region148
        $region147: #{coattention_forward.1} parent=115 // pred_region
          %777 = dma.done [#allocation19], 16
        $region148: #{coattention_forward.1} parent=115 // pred_fallthru
          _
        %p778 = scmp.lt.s32.totalorder %s43, 1
        %s779 = scalar_select %p778, %s43, 1
        %s780 = smul.addr %s779, 8
        %s781 = smul.addr %s780, 8
        %s782 = scalar_lea.vmem %s0, %s781
        %p783 = pneg %p64
        %p784 = pneg %p61
        %p785 = pneg %p85
        %p786 = pneg %p82
        %p787 = pneg %p106
        %p788 = pneg %p103
        %p789 = pneg %p127
        %p790 = pneg %p124
        %p791 = pneg %p148
        %p792 = pneg %p145
        %p793 = pneg %p169
        %p794 = pneg %p166
        %p795 = pneg %p190
        %p796 = pneg %p187
        %p797 = pneg %p211
        %p798 = pneg %p208
        %p799 = pneg %p232
        %p800 = pneg %p229
        %p801 = pneg %p253
        %p802 = pneg %p250
        %p803 = pneg %p274
        %p804 = pneg %p271
        %p805 = pneg %p295
        %p806 = pneg %p292
        %p807 = pneg %p316
        %p808 = pneg %p313
        %p809 = pneg %p337
        %p810 = pneg %p334
        %p811 = pneg %p358
        %p812 = pneg %p355
        %p813 = pneg %p379
        %p814 = pneg %p376
        %p815 = pneg %p400
        %p816 = pneg %p397
        %p817 = pneg %p421
        %p818 = pneg %p418
        %p819 = pneg %p442
        %p820 = pneg %p439
        %p821 = pneg %p463
        %p822 = pneg %p460
        %p823 = pneg %p484
        %p824 = pneg %p481
        %p825 = pneg %p505
        %p826 = pneg %p502
        %p827 = pneg %p526
        %p828 = pneg %p523
        %p829 = pneg %p547
        %p830 = pneg %p544
        %p831 = pneg %p573
        %p832 = pneg %p570
        %s833 = sand.u32 %s560, 1
        %s834 = scalar_lea.sflag [#allocation8], %s833
        %s835 = sand.u32 %s560, 1
        %s836 = smul.addr %s835, 8
        %s837 = scalar_lea.vmem [#allocation20], %s836
        %p838 = scmp.lt.s32.totalorder %s43, 1
        %s839 = scalar_select %p838, %s43, 1
        %s840 = smul.addr %s839, 8
        %s841 = smul.addr %s840, 8
        %s842 = scalar_lea.vmem %s0, %s841
        %v844 = vld [vmem:[%s1] sm:$0xf]
        %v845 = vld [vmem:[%s1 + $0x4] sm:$0xf]
        %v846 = vld [vmem:[%s1 + $0x8] sm:$0xf]
        %v847 = vld [vmem:[%s1 + $0xc] sm:$0xf]
        %v848 = vld [vmem:[%s2] sm:$0x1]
        %v849 = vld [vmem:[%s842] sm:$0xff]
        %v850 = vpack.c.bf16 %v849, %v849
        %v852 = vlaneseq
        %v853 = vshrl.u32 %v852, 7
        %v854 = vsub.s32 0, %v853
        %v855 = vrot.slane %v848, %v854
        %v861 = vunpack.c.l.b16 %v844
        %v862 = vunpack.c.l.b16 %v845
        %v863 = vunpack.c.l.b16 %v846
        %v864 = vunpack.c.l.b16 %v847
        %v865 = vpack.c.b16 %v862, %v861
        %v866 = vpack.c.b16 %v864, %v863
        %vm869 = vcmask 261120
        %v871 = vsel %vm869, %v850, 0
        %873 = vmatprep.subr.bf16.mxu0 0
        %874 = vmatpush1.bf16.msra.mxu0 0
        %875 = vmatprep.subr.bf16.mxu0 0
        %876 = vmatpush1.bf16.msra.mxu0 0
        %877 = vmatprep.subr.bf16.mxu0 0
        %878 = vmatpush1.bf16.msra.mxu0 0
        %879 = vmatprep.subr.bf16.mxu0 0
        %880 = vmatpush1.bf16.msra.mxu0 0
        %881 = vmatprep.subr.bf16.mxu0 0
        %882 = vmatpush1.bf16.msra.mxu0 0
        %883 = vmatprep.subr.bf16.mxu0 0
        %884 = vmatpush1.bf16.msra.mxu0 0
        %885 = vmatprep.subr.bf16.mxu0 0
        %886 = vmatpush1.bf16.msra.mxu0 %v866
        %887 = vmatprep.subr.bf16.mxu0 0
        %888 = vmatpush1.bf16.msra.mxu0 %v865
        %889 = vmatprep.subr.bf16.mxu0 0
        %890 = vmatpush2.bf16.msra.mxu0 0
        %891 = vmatprep.subr.bf16.mxu0 0
        %892 = vmatpush2.bf16.msra.mxu0 0
        %893 = vmatprep.subr.bf16.mxu0 0
        %894 = vmatpush2.bf16.msra.mxu0 0
        %895 = vmatprep.subr.bf16.mxu0 0
        %896 = vmatpush2.bf16.msra.mxu0 0
        %897 = vmatprep.subr.bf16.mxu0 0
        %898 = vmatpush2.bf16.msra.mxu0 0
        %899 = vmatprep.subr.bf16.mxu0 0
        %900 = vmatpush2.bf16.msra.mxu0 0
        %901 = vmatprep.subr.bf16.mxu0 0
        %902 = vmatpush2.bf16.msra.mxu0 0
        %903 = vmatprep.subr.bf16.mxu0 0
        %904 = vmatpush2.bf16.msra.mxu0 0
        %905 = vmatprep.mubr.bf16.mxu0 0
        %906 = vmatmul.mubr.bf16.gmra.mxu0 %v871
        %v907 = vpop.f32.mrf.mxu0
        %v908 = vadd.f32 %v855, %v907
        %v909 = vpop.f32.mrf.mxu0
        %v910 = vpop.f32.mrf.mxu0
        %v911 = vpop.f32.mrf.mxu0
        %912 = vdwg.mxu0
        %v913 = vpack.c.bf16 %v908, %v908
        %vm914 = vcmask 257024
        %915 = vst.msk [vmem:[#allocation2] sm:$0xf] %vm914, %v913
        %v917 = vunpack.c.l.b16 %v913
        %v918 = vpack.c.b16 %v917, %v917
        %919 = vrot.lane.b32.xlu0 %v918, 96
        %v920 = vpop.permute.xlu0 %919
        %922 = vst.msk [vmem:[#allocation3] sm:$0xf] %vm914, %v920
        %923 = vrot.lane.b32.xlu0 %v918, 64
        %v924 = vpop.permute.xlu0 %923
        %926 = vst.msk [vmem:[#allocation4] sm:$0xf] %vm914, %v924
        %s927 = scalar_lea.vmem %s842, 8
        %v928 = vld [vmem:[%s927] sm:$0xff]
        %v929 = vpack.c.bf16 %v928, %v928
        %v931 = vsel %vm869, %v929, 0
        %933 = vmatprep.subr.bf16.mxu0 0
        %934 = vmatpush1.bf16.msra.mxu0 0
        %935 = vmatprep.subr.bf16.mxu0 0
        %936 = vmatpush1.bf16.msra.mxu0 0
        %937 = vmatprep.subr.bf16.mxu0 0
        %938 = vmatpush1.bf16.msra.mxu0 0
        %939 = vmatprep.subr.bf16.mxu0 0
        %940 = vmatpush1.bf16.msra.mxu0 0
        %941 = vmatprep.subr.bf16.mxu0 0
        %942 = vmatpush1.bf16.msra.mxu0 0
        %943 = vmatprep.subr.bf16.mxu0 0
        %944 = vmatpush1.bf16.msra.mxu0 0
        %945 = vmatprep.subr.bf16.mxu0 0
        %946 = vmatpush1.bf16.msra.mxu0 %v866
        %947 = vmatprep.subr.bf16.mxu0 0
        %948 = vmatpush1.bf16.msra.mxu0 %v865
        %949 = vmatprep.subr.bf16.mxu0 0
        %950 = vmatpush2.bf16.msra.mxu0 0
        %951 = vmatprep.subr.bf16.mxu0 0
        %952 = vmatpush2.bf16.msra.mxu0 0
        %953 = vmatprep.subr.bf16.mxu0 0
        %954 = vmatpush2.bf16.msra.mxu0 0
        %955 = vmatprep.subr.bf16.mxu0 0
        %956 = vmatpush2.bf16.msra.mxu0 0
        %957 = vmatprep.subr.bf16.mxu0 0
        %958 = vmatpush2.bf16.msra.mxu0 0
        %959 = vmatprep.subr.bf16.mxu0 0
        %960 = vmatpush2.bf16.msra.mxu0 0
        %961 = vmatprep.subr.bf16.mxu0 0
        %962 = vmatpush2.bf16.msra.mxu0 0
        %963 = vmatprep.subr.bf16.mxu0 0
        %964 = vmatpush2.bf16.msra.mxu0 0
        %965 = vmatprep.mubr.bf16.mxu0 0
        %966 = vmatmul.mubr.bf16.gmra.mxu0 %v931
        %v967 = vpop.f32.mrf.mxu0
        %v968 = vadd.f32 %v855, %v967
        %v969 = vpop.f32.mrf.mxu0
        %v970 = vpop.f32.mrf.mxu0
        %v971 = vpop.f32.mrf.mxu0
        %972 = vdwg.mxu0
        %v973 = vpack.c.bf16 %v968, %v968
        %v975 = vunpack.c.l.b16 %v973
        %v976 = vpack.c.b16 %v975, %v975
        %977 = vrot.lane.b32.xlu0 %v976, 32
        %v978 = vpop.permute.xlu0 %977
        %vm980 = vcmask 519424
        %981 = vst.msk [vmem:[#allocation2] sm:$0xf] %vm980, %v978
        %982 = vst.msk [vmem:[#allocation3] sm:$0xf] %vm980, %v973
        %983 = vrot.lane.b32.xlu0 %v976, 96
        %v984 = vpop.permute.xlu0 %983
        %986 = vst.msk [vmem:[#allocation4] sm:$0xf] %vm980, %v984
        %s987 = scalar_lea.vmem %s842, 16
        %v988 = vld [vmem:[%s987] sm:$0xff]
        %v989 = vpack.c.bf16 %v988, %v988
        %v991 = vsel %vm869, %v989, 0
        %993 = vmatprep.subr.bf16.mxu0 0
        %994 = vmatpush1.bf16.msra.mxu0 0
        %995 = vmatprep.subr.bf16.mxu0 0
        %996 = vmatpush1.bf16.msra.mxu0 0
        %997 = vmatprep.subr.bf16.mxu0 0
        %998 = vmatpush1.bf16.msra.mxu0 0
        %999 = vmatprep.subr.bf16.mxu0 0
        %1000 = vmatpush1.bf16.msra.mxu0 0
        %1001 = vmatprep.subr.bf16.mxu0 0
        %1002 = vmatpush1.bf16.msra.mxu0 0
        %1003 = vmatprep.subr.bf16.mxu0 0
        %1004 = vmatpush1.bf16.msra.mxu0 0
        %1005 = vmatprep.subr.bf16.mxu0 0
        %1006 = vmatpush1.bf16.msra.mxu0 %v866
        %1007 = vmatprep.subr.bf16.mxu0 0
        %1008 = vmatpush1.bf16.msra.mxu0 %v865
        %1009 = vmatprep.subr.bf16.mxu0 0
        %1010 = vmatpush2.bf16.msra.mxu0 0
        %1011 = vmatprep.subr.bf16.mxu0 0
        %1012 = vmatpush2.bf16.msra.mxu0 0
        %1013 = vmatprep.subr.bf16.mxu0 0
        %1014 = vmatpush2.bf16.msra.mxu0 0
        %1015 = vmatprep.subr.bf16.mxu0 0
        %1016 = vmatpush2.bf16.msra.mxu0 0
        %1017 = vmatprep.subr.bf16.mxu0 0
        %1018 = vmatpush2.bf16.msra.mxu0 0
        %1019 = vmatprep.subr.bf16.mxu0 0
        %1020 = vmatpush2.bf16.msra.mxu0 0
        %1021 = vmatprep.subr.bf16.mxu0 0
        %1022 = vmatpush2.bf16.msra.mxu0 0
        %1023 = vmatprep.subr.bf16.mxu0 0
        %1024 = vmatpush2.bf16.msra.mxu0 0
        %1025 = vmatprep.mubr.bf16.mxu0 0
        %1026 = vmatmul.mubr.bf16.gmra.mxu0 %v991
        %v1027 = vpop.f32.mrf.mxu0
        %v1028 = vadd.f32 %v855, %v1027
        %v1029 = vpop.f32.mrf.mxu0
        %v1030 = vpop.f32.mrf.mxu0
        %v1031 = vpop.f32.mrf.mxu0
        %1032 = vdwg.mxu0
        %v1033 = vpack.c.bf16 %v1028, %v1028
        %v1035 = vunpack.c.l.b16 %v1033
        %v1036 = vpack.c.b16 %v1035, %v1035
        %1037 = vrot.lane.b32.xlu0 %v1036, 64
        %v1038 = vpop.permute.xlu0 %1037
        %vm1040 = vcmask 781824
        %1041 = vst.msk [vmem:[#allocation2] sm:$0xf] %vm1040, %v1038
        %1042 = vrot.lane.b32.xlu0 %v1036, 32
        %v1043 = vpop.permute.xlu0 %1042
        %1045 = vst.msk [vmem:[#allocation3] sm:$0xf] %vm1040, %v1043
        %1046 = vst.msk [vmem:[#allocation4] sm:$0xf] %vm1040, %v1033
        %s1047 = scalar_lea.vmem %s842, 24
        %v1048 = vld [vmem:[%s1047] sm:$0xff]
        %v1049 = vpack.c.bf16 %v1048, %v1048
        %v1051 = vsel %vm869, %v1049, 0
        %1053 = vmatprep.subr.bf16.mxu0 0
        %1054 = vmatpush1.bf16.msra.mxu0 0
        %1055 = vmatprep.subr.bf16.mxu0 0
        %1056 = vmatpush1.bf16.msra.mxu0 0
        %1057 = vmatprep.subr.bf16.mxu0 0
        %1058 = vmatpush1.bf16.msra.mxu0 0
        %1059 = vmatprep.subr.bf16.mxu0 0
        %1060 = vmatpush1.bf16.msra.mxu0 0
        %1061 = vmatprep.subr.bf16.mxu0 0
        %1062 = vmatpush1.bf16.msra.mxu0 0
        %1063 = vmatprep.subr.bf16.mxu0 0
        %1064 = vmatpush1.bf16.msra.mxu0 0
        %1065 = vmatprep.subr.bf16.mxu0 0
        %1066 = vmatpush1.bf16.msra.mxu0 %v866
        %1067 = vmatprep.subr.bf16.mxu0 0
        %1068 = vmatpush1.bf16.msra.mxu0 %v865
        %1069 = vmatprep.subr.bf16.mxu0 0
        %1070 = vmatpush2.bf16.msra.mxu0 0
        %1071 = vmatprep.subr.bf16.mxu0 0
        %1072 = vmatpush2.bf16.msra.mxu0 0
        %1073 = vmatprep.subr.bf16.mxu0 0
        %1074 = vmatpush2.bf16.msra.mxu0 0
        %1075 = vmatprep.subr.bf16.mxu0 0
        %1076 = vmatpush2.bf16.msra.mxu0 0
        %1077 = vmatprep.subr.bf16.mxu0 0
        %1078 = vmatpush2.bf16.msra.mxu0 0
        %1079 = vmatprep.subr.bf16.mxu0 0
        %1080 = vmatpush2.bf16.msra.mxu0 0
        %1081 = vmatprep.subr.bf16.mxu0 0
        %1082 = vmatpush2.bf16.msra.mxu0 0
        %1083 = vmatprep.subr.bf16.mxu0 0
        %1084 = vmatpush2.bf16.msra.mxu0 0
        %1085 = vmatprep.mubr.bf16.mxu0 0
        %1086 = vmatmul.mubr.bf16.gmra.mxu0 %v1051
        %v1087 = vpop.f32.mrf.mxu0
        %v1088 = vadd.f32 %v855, %v1087
        %v1089 = vpop.f32.mrf.mxu0
        %v1090 = vpop.f32.mrf.mxu0
        %v1091 = vpop.f32.mrf.mxu0
        %1092 = vdwg.mxu0
        %v1093 = vpack.c.bf16 %v1088, %v1088
        %v1095 = vunpack.c.l.b16 %v1093
        %v1096 = vpack.c.b16 %v1095, %v1095
        %1097 = vrot.lane.b32.xlu0 %v1096, 96
        %v1098 = vpop.permute.xlu0 %1097
        %vm1100 = vcmask 1044224
        %1101 = vst.msk [vmem:[#allocation2] sm:$0xf] %vm1100, %v1098
        %1102 = vrot.lane.b32.xlu0 %v1096, 64
        %v1103 = vpop.permute.xlu0 %1102
        %1105 = vst.msk [vmem:[#allocation3] sm:$0xf] %vm1100, %v1103
        %1106 = vrot.lane.b32.xlu0 %v1096, 32
        %v1107 = vpop.permute.xlu0 %1106
        %1109 = vst.msk [vmem:[#allocation4] sm:$0xf] %vm1100, %v1107
        %s1110 = scalar_lea.vmem %s842, 32
        %v1111 = vld [vmem:[%s1110] sm:$0xff]
        %v1112 = vpack.c.bf16 %v1111, %v1111
        %v1114 = vsel %vm869, %v1112, 0
        %1116 = vmatprep.subr.bf16.mxu0 0
        %1117 = vmatpush1.bf16.msra.mxu0 0
        %1118 = vmatprep.subr.bf16.mxu0 0
        %1119 = vmatpush1.bf16.msra.mxu0 0
        %1120 = vmatprep.subr.bf16.mxu0 0
        %1121 = vmatpush1.bf16.msra.mxu0 0
        %1122 = vmatprep.subr.bf16.mxu0 0
        %1123 = vmatpush1.bf16.msra.mxu0 0
        %1124 = vmatprep.subr.bf16.mxu0 0
        %1125 = vmatpush1.bf16.msra.mxu0 0
        %1126 = vmatprep.subr.bf16.mxu0 0
        %1127 = vmatpush1.bf16.msra.mxu0 0
        %1128 = vmatprep.subr.bf16.mxu0 0
        %1129 = vmatpush1.bf16.msra.mxu0 %v866
        %1130 = vmatprep.subr.bf16.mxu0 0
        %1131 = vmatpush1.bf16.msra.mxu0 %v865
        %1132 = vmatprep.subr.bf16.mxu0 0
        %1133 = vmatpush2.bf16.msra.mxu0 0
        %1134 = vmatprep.subr.bf16.mxu0 0
        %1135 = vmatpush2.bf16.msra.mxu0 0
        %1136 = vmatprep.subr.bf16.mxu0 0
        %1137 = vmatpush2.bf16.msra.mxu0 0
        %1138 = vmatprep.subr.bf16.mxu0 0
        %1139 = vmatpush2.bf16.msra.mxu0 0
        %1140 = vmatprep.subr.bf16.mxu0 0
        %1141 = vmatpush2.bf16.msra.mxu0 0
        %1142 = vmatprep.subr.bf16.mxu0 0
        %1143 = vmatpush2.bf16.msra.mxu0 0
        %1144 = vmatprep.subr.bf16.mxu0 0
        %1145 = vmatpush2.bf16.msra.mxu0 0
        %1146 = vmatprep.subr.bf16.mxu0 0
        %1147 = vmatpush2.bf16.msra.mxu0 0
        %1148 = vmatprep.mubr.bf16.mxu0 0
        %1149 = vmatmul.mubr.bf16.gmra.mxu0 %v1114
        %v1150 = vpop.f32.mrf.mxu0
        %v1151 = vadd.f32 %v855, %v1150
        %v1152 = vpop.f32.mrf.mxu0
        %v1153 = vpop.f32.mrf.mxu0
        %v1154 = vpop.f32.mrf.mxu0
        %1155 = vdwg.mxu0
        %v1156 = vpack.c.bf16 %v1151, %v1151
        %1157 = vst.msk [vmem:[#allocation2 + $0x4] sm:$0xf] %vm914, %v1156
        %v1159 = vunpack.c.l.b16 %v1156
        %v1160 = vpack.c.b16 %v1159, %v1159
        %1161 = vrot.lane.b32.xlu0 %v1160, 96
        %v1162 = vpop.permute.xlu0 %1161
        %1164 = vst.msk [vmem:[#allocation3 + $0x4] sm:$0xf] %vm914, %v1162
        %1165 = vrot.lane.b32.xlu0 %v1160, 64
        %v1166 = vpop.permute.xlu0 %1165
        %1168 = vst.msk [vmem:[#allocation4 + $0x4] sm:$0xf] %vm914, %v1166
        %s1169 = scalar_lea.vmem %s842, 40
        %v1170 = vld [vmem:[%s1169] sm:$0xff]
        %v1171 = vpack.c.bf16 %v1170, %v1170
        %v1173 = vsel %vm869, %v1171, 0
        %1175 = vmatprep.subr.bf16.mxu0 0
        %1176 = vmatpush1.bf16.msra.mxu0 0
        %1177 = vmatprep.subr.bf16.mxu0 0
        %1178 = vmatpush1.bf16.msra.mxu0 0
        %1179 = vmatprep.subr.bf16.mxu0 0
        %1180 = vmatpush1.bf16.msra.mxu0 0
        %1181 = vmatprep.subr.bf16.mxu0 0
        %1182 = vmatpush1.bf16.msra.mxu0 0
        %1183 = vmatprep.subr.bf16.mxu0 0
        %1184 = vmatpush1.bf16.msra.mxu0 0
        %1185 = vmatprep.subr.bf16.mxu0 0
        %1186 = vmatpush1.bf16.msra.mxu0 0
        %1187 = vmatprep.subr.bf16.mxu0 0
        %1188 = vmatpush1.bf16.msra.mxu0 %v866
        %1189 = vmatprep.subr.bf16.mxu0 0
        %1190 = vmatpush1.bf16.msra.mxu0 %v865
        %1191 = vmatprep.subr.bf16.mxu0 0
        %1192 = vmatpush2.bf16.msra.mxu0 0
        %1193 = vmatprep.subr.bf16.mxu0 0
        %1194 = vmatpush2.bf16.msra.mxu0 0
        %1195 = vmatprep.subr.bf16.mxu0 0
        %1196 = vmatpush2.bf16.msra.mxu0 0
        %1197 = vmatprep.subr.bf16.mxu0 0
        %1198 = vmatpush2.bf16.msra.mxu0 0
        %1199 = vmatprep.subr.bf16.mxu0 0
        %1200 = vmatpush2.bf16.msra.mxu0 0
        %1201 = vmatprep.subr.bf16.mxu0 0
        %1202 = vmatpush2.bf16.msra.mxu0 0
        %1203 = vmatprep.subr.bf16.mxu0 0
        %1204 = vmatpush2.bf16.msra.mxu0 0
        %1205 = vmatprep.subr.bf16.mxu0 0
        %1206 = vmatpush2.bf16.msra.mxu0 0
        %1207 = vmatprep.mubr.bf16.mxu0 0
        %1208 = vmatmul.mubr.bf16.gmra.mxu0 %v1173
        %v1209 = vpop.f32.mrf.mxu0
        %v1210 = vadd.f32 %v855, %v1209
        %v1211 = vpop.f32.mrf.mxu0
        %v1212 = vpop.f32.mrf.mxu0
        %v1213 = vpop.f32.mrf.mxu0
        %1214 = vdwg.mxu0
        %v1215 = vpack.c.bf16 %v1210, %v1210
        %v1217 = vunpack.c.l.b16 %v1215
        %v1218 = vpack.c.b16 %v1217, %v1217
        %1219 = vrot.lane.b32.xlu0 %v1218, 32
        %v1220 = vpop.permute.xlu0 %1219
        %1222 = vst.msk [vmem:[#allocation2 + $0x4] sm:$0xf] %vm980, %v1220
        %1223 = vst.msk [vmem:[#allocation3 + $0x4] sm:$0xf] %vm980, %v1215
        %1224 = vrot.lane.b32.xlu0 %v1218, 96
        %v1225 = vpop.permute.xlu0 %1224
        %1227 = vst.msk [vmem:[#allocation4 + $0x4] sm:$0xf] %vm980, %v1225
        %s1228 = scalar_lea.vmem %s842, 48
        %v1229 = vld [vmem:[%s1228] sm:$0xff]
        %v1230 = vpack.c.bf16 %v1229, %v1229
        %v1232 = vsel %vm869, %v1230, 0
        %1234 = vmatprep.subr.bf16.mxu0 0
        %1235 = vmatpush1.bf16.msra.mxu0 0
        %1236 = vmatprep.subr.bf16.mxu0 0
        %1237 = vmatpush1.bf16.msra.mxu0 0
        %1238 = vmatprep.subr.bf16.mxu0 0
        %1239 = vmatpush1.bf16.msra.mxu0 0
        %1240 = vmatprep.subr.bf16.mxu0 0
        %1241 = vmatpush1.bf16.msra.mxu0 0
        %1242 = vmatprep.subr.bf16.mxu0 0
        %1243 = vmatpush1.bf16.msra.mxu0 0
        %1244 = vmatprep.subr.bf16.mxu0 0
        %1245 = vmatpush1.bf16.msra.mxu0 0
        %1246 = vmatprep.subr.bf16.mxu0 0
        %1247 = vmatpush1.bf16.msra.mxu0 %v866
        %1248 = vmatprep.subr.bf16.mxu0 0
        %1249 = vmatpush1.bf16.msra.mxu0 %v865
        %1250 = vmatprep.subr.bf16.mxu0 0
        %1251 = vmatpush2.bf16.msra.mxu0 0
        %1252 = vmatprep.subr.bf16.mxu0 0
        %1253 = vmatpush2.bf16.msra.mxu0 0
        %1254 = vmatprep.subr.bf16.mxu0 0
        %1255 = vmatpush2.bf16.msra.mxu0 0
        %1256 = vmatprep.subr.bf16.mxu0 0
        %1257 = vmatpush2.bf16.msra.mxu0 0
        %1258 = vmatprep.subr.bf16.mxu0 0
        %1259 = vmatpush2.bf16.msra.mxu0 0
        %1260 = vmatprep.subr.bf16.mxu0 0
        %1261 = vmatpush2.bf16.msra.mxu0 0
        %1262 = vmatprep.subr.bf16.mxu0 0
        %1263 = vmatpush2.bf16.msra.mxu0 0
        %1264 = vmatprep.subr.bf16.mxu0 0
        %1265 = vmatpush2.bf16.msra.mxu0 0
        %1266 = vmatprep.mubr.bf16.mxu0 0
        %1267 = vmatmul.mubr.bf16.gmra.mxu0 %v1232
        %v1268 = vpop.f32.mrf.mxu0
        %v1269 = vadd.f32 %v855, %v1268
        %v1270 = vpop.f32.mrf.mxu0
        %v1271 = vpop.f32.mrf.mxu0
        %v1272 = vpop.f32.mrf.mxu0
        %1273 = vdwg.mxu0
        %v1274 = vpack.c.bf16 %v1269, %v1269
        %v1276 = vunpack.c.l.b16 %v1274
        %v1277 = vpack.c.b16 %v1276, %v1276
        %1278 = vrot.lane.b32.xlu0 %v1277, 64
        %v1279 = vpop.permute.xlu0 %1278
        %1281 = vst.msk [vmem:[#allocation2 + $0x4] sm:$0xf] %vm1040, %v1279
        %1282 = vrot.lane.b32.xlu0 %v1277, 32
        %v1283 = vpop.permute.xlu0 %1282
        %1285 = vst.msk [vmem:[#allocation3 + $0x4] sm:$0xf] %vm1040, %v1283
        %1286 = vst.msk [vmem:[#allocation4 + $0x4] sm:$0xf] %vm1040, %v1274
        %s1287 = scalar_lea.vmem %s842, 56
        %v1288 = vld [vmem:[%s1287] sm:$0xff]
        %v1289 = vpack.c.bf16 %v1288, %v1288
        %v1291 = vsel %vm869, %v1289, 0
        %1293 = vmatprep.subr.bf16.mxu0 0
        %1294 = vmatpush1.bf16.msra.mxu0 0
        %1295 = vmatprep.subr.bf16.mxu0 0
        %1296 = vmatpush1.bf16.msra.mxu0 0
        %1297 = vmatprep.subr.bf16.mxu0 0
        %1298 = vmatpush1.bf16.msra.mxu0 0
        %1299 = vmatprep.subr.bf16.mxu0 0
        %1300 = vmatpush1.bf16.msra.mxu0 0
        %1301 = vmatprep.subr.bf16.mxu0 0
        %1302 = vmatpush1.bf16.msra.mxu0 0
        %1303 = vmatprep.subr.bf16.mxu0 0
        %1304 = vmatpush1.bf16.msra.mxu0 0
        %1305 = vmatprep.subr.bf16.mxu0 0
        %1306 = vmatpush1.bf16.msra.mxu0 %v866
        %1307 = vmatprep.subr.bf16.mxu0 0
        %1308 = vmatpush1.bf16.msra.mxu0 %v865
        %1309 = vmatprep.subr.bf16.mxu0 0
        %1310 = vmatpush2.bf16.msra.mxu0 0
        %1311 = vmatprep.subr.bf16.mxu0 0
        %1312 = vmatpush2.bf16.msra.mxu0 0
        %1313 = vmatprep.subr.bf16.mxu0 0
        %1314 = vmatpush2.bf16.msra.mxu0 0
        %1315 = vmatprep.subr.bf16.mxu0 0
        %1316 = vmatpush2.bf16.msra.mxu0 0
        %1317 = vmatprep.subr.bf16.mxu0 0
        %1318 = vmatpush2.bf16.msra.mxu0 0
        %1319 = vmatprep.subr.bf16.mxu0 0
        %1320 = vmatpush2.bf16.msra.mxu0 0
        %1321 = vmatprep.subr.bf16.mxu0 0
        %1322 = vmatpush2.bf16.msra.mxu0 0
        %1323 = vmatprep.subr.bf16.mxu0 0
        %1324 = vmatpush2.bf16.msra.mxu0 0
        %1325 = vmatprep.mubr.bf16.mxu0 0
        %1326 = vmatmul.mubr.bf16.gmra.mxu0 %v1291
        %v1327 = vpop.f32.mrf.mxu0
        %v1328 = vadd.f32 %v855, %v1327
        %v1329 = vpop.f32.mrf.mxu0
        %v1330 = vpop.f32.mrf.mxu0
        %v1331 = vpop.f32.mrf.mxu0
        %1332 = vdwg.mxu0
        %v1333 = vpack.c.bf16 %v1328, %v1328
        %v1335 = vunpack.c.l.b16 %v1333
        %v1336 = vpack.c.b16 %v1335, %v1335
        %1337 = vrot.lane.b32.xlu0 %v1336, 96
        %v1338 = vpop.permute.xlu0 %1337
        %1340 = vst.msk [vmem:[#allocation2 + $0x4] sm:$0xf] %vm1100, %v1338
        %1341 = vrot.lane.b32.xlu0 %v1336, 64
        %v1342 = vpop.permute.xlu0 %1341
        %1344 = vst.msk [vmem:[#allocation3 + $0x4] sm:$0xf] %vm1100, %v1342
        %1345 = vrot.lane.b32.xlu0 %v1336, 32
        %v1346 = vpop.permute.xlu0 %1345
        %1348 = vst.msk [vmem:[#allocation4 + $0x4] sm:$0xf] %vm1100, %v1346
        %v1349 = vld [vmem:[#allocation2] sm:$0xf]
        %v1350 = vld [vmem:[#allocation3] sm:$0xf]
        %vm1351 = vcmask 523264
        %v1353 = vsel %vm1351, %v1349, 0
        %v1356 = vsel %vm1351, %v1350, 0
        %1358 = vmatprep.subr.bf16.mxu0 0
        %1359 = vmatpush1.bf16.xpose.msra.mxu0 0
        %1360 = vmatprep.subr.bf16.mxu0 0
        %1361 = vmatpush1.bf16.xpose.msra.mxu0 0
        %1362 = vmatprep.subr.bf16.mxu0 0
        %1363 = vmatpush1.bf16.xpose.msra.mxu0 0
        %1364 = vmatprep.subr.bf16.mxu0 0
        %1365 = vmatpush1.bf16.xpose.msra.mxu0 0
        %1366 = vmatprep.subr.bf16.mxu0 0
        %1367 = vmatpush1.bf16.xpose.msra.mxu0 0
        %1368 = vmatprep.subr.bf16.mxu0 0
        %1369 = vmatpush1.bf16.xpose.msra.mxu0 0
        %1370 = vmatprep.subr.bf16.mxu0 0
        %1371 = vmatpush1.bf16.xpose.msra.mxu0 0
        %1372 = vmatprep.subr.bf16.mxu0 0
        %1373 = vmatpush1.bf16.xpose.msra.mxu0 %v1356
        %1374 = vmatprep.subr.bf16.mxu0 0
        %1375 = vmatpush2.bf16.xpose.msra.mxu0 0
        %1376 = vmatprep.subr.bf16.mxu0 0
        %1377 = vmatpush2.bf16.xpose.msra.mxu0 0
        %1378 = vmatprep.subr.bf16.mxu0 0
        %1379 = vmatpush2.bf16.xpose.msra.mxu0 0
        %1380 = vmatprep.subr.bf16.mxu0 0
        %1381 = vmatpush2.bf16.xpose.msra.mxu0 0
        %1382 = vmatprep.subr.bf16.mxu0 0
        %1383 = vmatpush2.bf16.xpose.msra.mxu0 0
        %1384 = vmatprep.subr.bf16.mxu0 0
        %1385 = vmatpush2.bf16.xpose.msra.mxu0 0
        %1386 = vmatprep.subr.bf16.mxu0 0
        %1387 = vmatpush2.bf16.xpose.msra.mxu0 0
        %1388 = vmatprep.subr.bf16.mxu0 0
        %1389 = vmatpush2.bf16.xpose.msra.mxu0 0
        %1390 = vmatprep.mubr.bf16.mxu0 0
        %1391 = vmatmul.mubr.bf16.gmra.mxu0 %v1353
        %v1392 = vpop.f32.mrf.mxu0
        %v1393 = vadd.f32 0.0, %v1392
        %v1394 = vpop.f32.mrf.mxu0
        %v1395 = vpop.f32.mrf.mxu0
        %v1396 = vpop.f32.mrf.mxu0
        %1397 = vdwg.mxu0
        %v1398 = vmul.f32 %v1393, 0.125
        %vm1399 = vcmask 64512
        %v1400 = vsel %vm1399, %v1398, -inf
        %1401 = vmax.xlane.f32.xlu0 %v1400
        %v1402 = vpop.xlane.xlu0 %1401
        %v1403 = vsub.f32 %v1398, %v1402
        %v1404 = vmul.f32 %v1403, 1.442695
        %v1405 = vpow.pop %v1404
        %v1406 = vsel %vm1399, %v1405, 0.0
        %1407 = vadd.xlane.f32.xlu0 %v1406
        %v1408 = vpop.xlane.xlu0 %1407
        %v1409 = vrcp.pop %v1408
        %v1410 = vmul.f32 %v1405, %v1409
        %v1411 = vadd.f32 %v1410, 0.0
        %v1412 = vpack.c.bf16 %v1410, %v1410
        %v1413 = vld [vmem:[#allocation4] sm:$0xf]
        %v1415 = vsel %vm1399, %v1412, 0
        %vm1417 = vcmask 1043456
        %v1419 = vsel %vm1417, %v1413, 0
        %1421 = vmatprep.subr.bf16.mxu0 0
        %1422 = vmatpush1.bf16.msra.mxu0 0
        %1423 = vmatprep.subr.bf16.mxu0 0
        %1424 = vmatpush1.bf16.msra.mxu0 0
        %1425 = vmatprep.subr.bf16.mxu0 0
        %1426 = vmatpush1.bf16.msra.mxu0 0
        %1427 = vmatprep.subr.bf16.mxu0 0
        %1428 = vmatpush1.bf16.msra.mxu0 0
        %1429 = vmatprep.subr.bf16.mxu0 0
        %1430 = vmatpush1.bf16.msra.mxu0 0
        %1431 = vmatprep.subr.bf16.mxu0 0
        %1432 = vmatpush1.bf16.msra.mxu0 0
        %1433 = vmatprep.subr.bf16.mxu0 0
        %1434 = vmatpush1.bf16.msra.mxu0 0
        %1435 = vmatprep.subr.bf16.mxu0 0
        %1436 = vmatpush1.bf16.msra.mxu0 %v1419
        %1437 = vmatprep.subr.bf16.mxu0 0
        %1438 = vmatpush2.bf16.msra.mxu0 0
        %1439 = vmatprep.subr.bf16.mxu0 0
        %1440 = vmatpush2.bf16.msra.mxu0 0
        %1441 = vmatprep.subr.bf16.mxu0 0
        %1442 = vmatpush2.bf16.msra.mxu0 0
        %1443 = vmatprep.subr.bf16.mxu0 0
        %1444 = vmatpush2.bf16.msra.mxu0 0
        %1445 = vmatprep.subr.bf16.mxu0 0
        %1446 = vmatpush2.bf16.msra.mxu0 0
        %1447 = vmatprep.subr.bf16.mxu0 0
        %1448 = vmatpush2.bf16.msra.mxu0 0
        %1449 = vmatprep.subr.bf16.mxu0 0
        %1450 = vmatpush2.bf16.msra.mxu0 0
        %1451 = vmatprep.subr.bf16.mxu0 0
        %1452 = vmatpush2.bf16.msra.mxu0 0
        %1453 = vmatprep.mubr.bf16.mxu0 0
        %1454 = vmatmul.mubr.bf16.gmra.mxu0 %v1415
        %v1455 = vpop.f32.mrf.mxu0
        %v1456 = vadd.f32 0.0, %v1455
        %v1457 = vpop.f32.mrf.mxu0
        %v1458 = vpop.f32.mrf.mxu0
        %v1459 = vpop.f32.mrf.mxu0
        %1460 = vdwg.mxu0
        %v1461 = vpack.c.bf16 %v1456, %v1456
        %v1462 = vld [vmem:[%s3] sm:$0xf]
        %v1463 = vld [vmem:[%s3 + $0x4] sm:$0xf]
        %v1464 = vld [vmem:[%s3 + $0x8] sm:$0xf]
        %v1465 = vld [vmem:[%s3 + $0xc] sm:$0xf]
        %v1466 = vld [vmem:[%s3 + $0x10] sm:$0xf]
        %v1467 = vld [vmem:[%s3 + $0x14] sm:$0xf]
        %v1468 = vld [vmem:[%s3 + $0x18] sm:$0xf]
        %v1469 = vld [vmem:[%s3 + $0x1c] sm:$0xf]
        %v1471 = vunpack.c.l.b16 %v1349
        %v1472 = vpack.c.b16 %v1471, %v1471
        %1473 = vrot.lane.b32.xlu0 %v1472, 64
        %v1474 = vpop.permute.xlu0 %1473
        %v1476 = vunpack.c.l.b16 %v1350
        %v1477 = vpack.c.b16 %v1476, %v1476
        %1478 = vrot.lane.b32.xlu0 %v1477, 64
        %v1479 = vpop.permute.xlu0 %1478
        %v1481 = vsel %vm1351, %v1474, 0
        %v1484 = vsel %vm1351, %v1479, 0
        %1486 = vmatprep.subr.bf16.mxu0 0
        %1487 = vmatpush1.bf16.xpose.msra.mxu0 0
        %1488 = vmatprep.subr.bf16.mxu0 0
        %1489 = vmatpush1.bf16.xpose.msra.mxu0 0
        %1490 = vmatprep.subr.bf16.mxu0 0
        %1491 = vmatpush1.bf16.xpose.msra.mxu0 0
        %1492 = vmatprep.subr.bf16.mxu0 0
        %1493 = vmatpush1.bf16.xpose.msra.mxu0 0
        %1494 = vmatprep.subr.bf16.mxu0 0
        %1495 = vmatpush1.bf16.xpose.msra.mxu0 0
        %1496 = vmatprep.subr.bf16.mxu0 0
        %1497 = vmatpush1.bf16.xpose.msra.mxu0 0
        %1498 = vmatprep.subr.bf16.mxu0 0
        %1499 = vmatpush1.bf16.xpose.msra.mxu0 0
        %1500 = vmatprep.subr.bf16.mxu0 0
        %1501 = vmatpush1.bf16.xpose.msra.mxu0 %v1484
        %1502 = vmatprep.subr.bf16.mxu0 0
        %1503 = vmatpush2.bf16.xpose.msra.mxu0 0
        %1504 = vmatprep.subr.bf16.mxu0 0
        %1505 = vmatpush2.bf16.xpose.msra.mxu0 0
        %1506 = vmatprep.subr.bf16.mxu0 0
        %1507 = vmatpush2.bf16.xpose.msra.mxu0 0
        %1508 = vmatprep.subr.bf16.mxu0 0
        %1509 = vmatpush2.bf16.xpose.msra.mxu0 0
        %1510 = vmatprep.subr.bf16.mxu0 0
        %1511 = vmatpush2.bf16.xpose.msra.mxu0 0
        %1512 = vmatprep.subr.bf16.mxu0 0
        %1513 = vmatpush2.bf16.xpose.msra.mxu0 0
        %1514 = vmatprep.subr.bf16.mxu0 0
        %1515 = vmatpush2.bf16.xpose.msra.mxu0 0
        %1516 = vmatprep.subr.bf16.mxu0 0
        %1517 = vmatpush2.bf16.xpose.msra.mxu0 0
        %1518 = vmatprep.mubr.bf16.mxu0 0
        %1519 = vmatmul.mubr.bf16.gmra.mxu0 %v1481
        %v1520 = vpop.f32.mrf.mxu0
        %v1521 = vadd.f32 0.0, %v1520
        %v1522 = vpop.f32.mrf.mxu0
        %v1523 = vpop.f32.mrf.mxu0
        %v1524 = vpop.f32.mrf.mxu0
        %1525 = vdwg.mxu0
        %v1526 = vmul.f32 %v1521, 0.125
        %v1527 = vsel %vm1399, %v1526, -inf
        %1528 = vmax.xlane.f32.xlu0 %v1527
        %v1529 = vpop.xlane.xlu0 %1528
        %v1530 = vsub.f32 %v1526, %v1529
        %v1531 = vmul.f32 %v1530, 1.442695
        %v1532 = vpow.pop %v1531
        %v1533 = vsel %vm1399, %v1532, 0.0
        %1534 = vadd.xlane.f32.xlu0 %v1533
        %v1535 = vpop.xlane.xlu0 %1534
        %v1536 = vrcp.pop %v1535
        %v1537 = vmul.f32 %v1532, %v1536
        %v1538 = vadd.f32 %v1411, %v1537
        %v1539 = vpack.c.bf16 %v1537, %v1537
        %v1541 = vunpack.c.l.b16 %v1413
        %v1542 = vpack.c.b16 %v1541, %v1541
        %1543 = vrot.lane.b32.xlu0 %v1542, 64
        %v1544 = vpop.permute.xlu0 %1543
        %v1546 = vsel %vm1399, %v1539, 0
        %v1549 = vsel %vm1417, %v1544, 0
        %1551 = vmatprep.subr.bf16.mxu0 0
        %1552 = vmatpush1.bf16.msra.mxu0 0
        %1553 = vmatprep.subr.bf16.mxu0 0
        %1554 = vmatpush1.bf16.msra.mxu0 0
        %1555 = vmatprep.subr.bf16.mxu0 0
        %1556 = vmatpush1.bf16.msra.mxu0 0
        %1557 = vmatprep.subr.bf16.mxu0 0
        %1558 = vmatpush1.bf16.msra.mxu0 0
        %1559 = vmatprep.subr.bf16.mxu0 0
        %1560 = vmatpush1.bf16.msra.mxu0 0
        %1561 = vmatprep.subr.bf16.mxu0 0
        %1562 = vmatpush1.bf16.msra.mxu0 0
        %1563 = vmatprep.subr.bf16.mxu0 0
        %1564 = vmatpush1.bf16.msra.mxu0 0
        %1565 = vmatprep.subr.bf16.mxu0 0
        %1566 = vmatpush1.bf16.msra.mxu0 %v1549
        %1567 = vmatprep.subr.bf16.mxu0 0
        %1568 = vmatpush2.bf16.msra.mxu0 0
        %1569 = vmatprep.subr.bf16.mxu0 0
        %1570 = vmatpush2.bf16.msra.mxu0 0
        %1571 = vmatprep.subr.bf16.mxu0 0
        %1572 = vmatpush2.bf16.msra.mxu0 0
        %1573 = vmatprep.subr.bf16.mxu0 0
        %1574 = vmatpush2.bf16.msra.mxu0 0
        %1575 = vmatprep.subr.bf16.mxu0 0
        %1576 = vmatpush2.bf16.msra.mxu0 0
        %1577 = vmatprep.subr.bf16.mxu0 0
        %1578 = vmatpush2.bf16.msra.mxu0 0
        %1579 = vmatprep.subr.bf16.mxu0 0
        %1580 = vmatpush2.bf16.msra.mxu0 0
        %1581 = vmatprep.subr.bf16.mxu0 0
        %1582 = vmatpush2.bf16.msra.mxu0 0
        %1583 = vmatprep.mubr.bf16.mxu0 0
        %1584 = vmatmul.mubr.bf16.gmra.mxu0 %v1546
        %v1585 = vpop.f32.mrf.mxu0
        %v1586 = vadd.f32 0.0, %v1585
        %v1587 = vpop.f32.mrf.mxu0
        %v1588 = vpop.f32.mrf.mxu0
        %v1589 = vpop.f32.mrf.mxu0
        %1590 = vdwg.mxu0
        %v1591 = vpack.c.bf16 %v1586, %v1586
        %v1592 = vld [vmem:[%s3 + $0x20] sm:$0xf]
        %v1593 = vld [vmem:[%s3 + $0x24] sm:$0xf]
        %v1594 = vld [vmem:[%s3 + $0x28] sm:$0xf]
        %v1595 = vld [vmem:[%s3 + $0x2c] sm:$0xf]
        %v1596 = vld [vmem:[%s3 + $0x30] sm:$0xf]
        %v1597 = vld [vmem:[%s3 + $0x34] sm:$0xf]
        %v1598 = vld [vmem:[%s3 + $0x38] sm:$0xf]
        %v1599 = vld [vmem:[%s3 + $0x3c] sm:$0xf]
        %v1608 = vunpack.c.l.b16 %v1592
        %v1609 = vunpack.c.l.b16 %v1593
        %v1610 = vunpack.c.l.b16 %v1594
        %v1611 = vunpack.c.l.b16 %v1595
        %v1612 = vunpack.c.l.b16 %v1596
        %v1613 = vunpack.c.l.b16 %v1597
        %v1614 = vunpack.c.l.b16 %v1598
        %v1615 = vunpack.c.l.b16 %v1599
        %v1616 = vpack.c.b16 %v1609, %v1608
        %v1617 = vpack.c.b16 %v1611, %v1610
        %v1618 = vpack.c.b16 %v1613, %v1612
        %v1619 = vpack.c.b16 %v1615, %v1614
        %v1625 = vsel %vm1351, %v1591, 0
        %1627 = vmatprep.subr.bf16.mxu0 0
        %1628 = vmatpush1.bf16.msra.mxu0 0
        %1629 = vmatprep.subr.bf16.mxu0 0
        %1630 = vmatpush1.bf16.msra.mxu0 0
        %1631 = vmatprep.subr.bf16.mxu0 0
        %1632 = vmatpush1.bf16.msra.mxu0 0
        %1633 = vmatprep.subr.bf16.mxu0 0
        %1634 = vmatpush1.bf16.msra.mxu0 0
        %1635 = vmatprep.subr.bf16.mxu0 0
        %1636 = vmatpush1.bf16.msra.mxu0 %v1619
        %1637 = vmatprep.subr.bf16.mxu0 0
        %1638 = vmatpush1.bf16.msra.mxu0 %v1618
        %1639 = vmatprep.subr.bf16.mxu0 0
        %1640 = vmatpush1.bf16.msra.mxu0 %v1617
        %1641 = vmatprep.subr.bf16.mxu0 0
        %1642 = vmatpush1.bf16.msra.mxu0 %v1616
        %1643 = vmatprep.subr.bf16.mxu0 0
        %1644 = vmatpush2.bf16.msra.mxu0 0
        %1645 = vmatprep.subr.bf16.mxu0 0
        %1646 = vmatpush2.bf16.msra.mxu0 0
        %1647 = vmatprep.subr.bf16.mxu0 0
        %1648 = vmatpush2.bf16.msra.mxu0 0
        %1649 = vmatprep.subr.bf16.mxu0 0
        %1650 = vmatpush2.bf16.msra.mxu0 0
        %1651 = vmatprep.subr.bf16.mxu0 0
        %1652 = vmatpush2.bf16.msra.mxu0 0
        %1653 = vmatprep.subr.bf16.mxu0 0
        %1654 = vmatpush2.bf16.msra.mxu0 0
        %1655 = vmatprep.subr.bf16.mxu0 0
        %1656 = vmatpush2.bf16.msra.mxu0 0
        %1657 = vmatprep.subr.bf16.mxu0 0
        %1658 = vmatpush2.bf16.msra.mxu0 0
        %1659 = vmatprep.mubr.bf16.mxu0 0
        %1660 = vmatmul.mubr.bf16.gmra.mxu0 %v1625
        %v1661 = vpop.f32.mrf.mxu0
        %v1662 = vadd.f32 0.0, %v1661
        %v1663 = vpop.f32.mrf.mxu0
        %v1664 = vpop.f32.mrf.mxu0
        %v1665 = vpop.f32.mrf.mxu0
        %1666 = vdwg.mxu0
        %v1675 = vunpack.c.l.b16 %v1462
        %v1676 = vunpack.c.l.b16 %v1463
        %v1677 = vunpack.c.l.b16 %v1464
        %v1678 = vunpack.c.l.b16 %v1465
        %v1679 = vunpack.c.l.b16 %v1466
        %v1680 = vunpack.c.l.b16 %v1467
        %v1681 = vunpack.c.l.b16 %v1468
        %v1682 = vunpack.c.l.b16 %v1469
        %v1683 = vpack.c.b16 %v1676, %v1675
        %v1684 = vpack.c.b16 %v1678, %v1677
        %v1685 = vpack.c.b16 %v1680, %v1679
        %v1686 = vpack.c.b16 %v1682, %v1681
        %v1692 = vsel %vm1351, %v1461, 0
        %1694 = vmatprep.subr.bf16.mxu0 0
        %1695 = vmatpush1.bf16.msra.mxu0 0
        %1696 = vmatprep.subr.bf16.mxu0 0
        %1697 = vmatpush1.bf16.msra.mxu0 0
        %1698 = vmatprep.subr.bf16.mxu0 0
        %1699 = vmatpush1.bf16.msra.mxu0 0
        %1700 = vmatprep.subr.bf16.mxu0 0
        %1701 = vmatpush1.bf16.msra.mxu0 0
        %1702 = vmatprep.subr.bf16.mxu0 0
        %1703 = vmatpush1.bf16.msra.mxu0 %v1686
        %1704 = vmatprep.subr.bf16.mxu0 0
        %1705 = vmatpush1.bf16.msra.mxu0 %v1685
        %1706 = vmatprep.subr.bf16.mxu0 0
        %1707 = vmatpush1.bf16.msra.mxu0 %v1684
        %1708 = vmatprep.subr.bf16.mxu0 0
        %1709 = vmatpush1.bf16.msra.mxu0 %v1683
        %1710 = vmatprep.subr.bf16.mxu0 0
        %1711 = vmatpush2.bf16.msra.mxu0 0
        %1712 = vmatprep.subr.bf16.mxu0 0
        %1713 = vmatpush2.bf16.msra.mxu0 0
        %1714 = vmatprep.subr.bf16.mxu0 0
        %1715 = vmatpush2.bf16.msra.mxu0 0
        %1716 = vmatprep.subr.bf16.mxu0 0
        %1717 = vmatpush2.bf16.msra.mxu0 0
        %1718 = vmatprep.subr.bf16.mxu0 0
        %1719 = vmatpush2.bf16.msra.mxu0 0
        %1720 = vmatprep.subr.bf16.mxu0 0
        %1721 = vmatpush2.bf16.msra.mxu0 0
        %1722 = vmatprep.subr.bf16.mxu0 0
        %1723 = vmatpush2.bf16.msra.mxu0 0
        %1724 = vmatprep.subr.bf16.mxu0 0
        %1725 = vmatpush2.bf16.msra.mxu0 0
        %1726 = vmatprep.mubr.bf16.mxu0 0
        %1727 = vmatmul.mubr.bf16.gmra.mxu0 %v1692
        %v1728 = vpop.f32.mrf.mxu0
        %v1729 = vadd.f32 %v1662, %v1728
        %v1730 = vpop.f32.mrf.mxu0
        %v1731 = vpop.f32.mrf.mxu0
        %v1732 = vpop.f32.mrf.mxu0
        %1733 = vdwg.mxu0
        %v1734 = vld [vmem:[#allocation2 + $0x4] sm:$0xf]
        %v1735 = vld [vmem:[#allocation3 + $0x4] sm:$0xf]
        %v1737 = vsel %vm1351, %v1734, 0
        %v1740 = vsel %vm1351, %v1735, 0
        %1742 = vmatprep.subr.bf16.mxu0 0
        %1743 = vmatpush1.bf16.xpose.msra.mxu0 0
        %1744 = vmatprep.subr.bf16.mxu0 0
        %1745 = vmatpush1.bf16.xpose.msra.mxu0 0
        %1746 = vmatprep.subr.bf16.mxu0 0
        %1747 = vmatpush1.bf16.xpose.msra.mxu0 0
        %1748 = vmatprep.subr.bf16.mxu0 0
        %1749 = vmatpush1.bf16.xpose.msra.mxu0 0
        %1750 = vmatprep.subr.bf16.mxu0 0
        %1751 = vmatpush1.bf16.xpose.msra.mxu0 0
        %1752 = vmatprep.subr.bf16.mxu0 0
        %1753 = vmatpush1.bf16.xpose.msra.mxu0 0
        %1754 = vmatprep.subr.bf16.mxu0 0
        %1755 = vmatpush1.bf16.xpose.msra.mxu0 0
        %1756 = vmatprep.subr.bf16.mxu0 0
        %1757 = vmatpush1.bf16.xpose.msra.mxu0 %v1740
        %1758 = vmatprep.subr.bf16.mxu0 0
        %1759 = vmatpush2.bf16.xpose.msra.mxu0 0
        %1760 = vmatprep.subr.bf16.mxu0 0
        %1761 = vmatpush2.bf16.xpose.msra.mxu0 0
        %1762 = vmatprep.subr.bf16.mxu0 0
        %1763 = vmatpush2.bf16.xpose.msra.mxu0 0
        %1764 = vmatprep.subr.bf16.mxu0 0
        %1765 = vmatpush2.bf16.xpose.msra.mxu0 0
        %1766 = vmatprep.subr.bf16.mxu0 0
        %1767 = vmatpush2.bf16.xpose.msra.mxu0 0
        %1768 = vmatprep.subr.bf16.mxu0 0
        %1769 = vmatpush2.bf16.xpose.msra.mxu0 0
        %1770 = vmatprep.subr.bf16.mxu0 0
        %1771 = vmatpush2.bf16.xpose.msra.mxu0 0
        %1772 = vmatprep.subr.bf16.mxu0 0
        %1773 = vmatpush2.bf16.xpose.msra.mxu0 0
        %1774 = vmatprep.mubr.bf16.mxu0 0
        %1775 = vmatmul.mubr.bf16.gmra.mxu0 %v1737
        %v1776 = vpop.f32.mrf.mxu0
        %v1777 = vadd.f32 0.0, %v1776
        %v1778 = vpop.f32.mrf.mxu0
        %v1779 = vpop.f32.mrf.mxu0
        %v1780 = vpop.f32.mrf.mxu0
        %1781 = vdwg.mxu0
        %v1782 = vmul.f32 %v1777, 0.125
        %v1783 = vsel %vm1399, %v1782, -inf
        %1784 = vmax.xlane.f32.xlu0 %v1783
        %v1785 = vpop.xlane.xlu0 %1784
        %v1786 = vsub.f32 %v1782, %v1785
        %v1787 = vmul.f32 %v1786, 1.442695
        %v1788 = vpow.pop %v1787
        %v1789 = vsel %vm1399, %v1788, 0.0
        %1790 = vadd.xlane.f32.xlu0 %v1789
        %v1791 = vpop.xlane.xlu0 %1790
        %v1792 = vrcp.pop %v1791
        %v1793 = vmul.f32 %v1788, %v1792
        %v1794 = vadd.f32 %v1538, %v1793
        %v1795 = vpack.c.bf16 %v1793, %v1793
        %v1796 = vld [vmem:[#allocation4 + $0x4] sm:$0xf]
        %v1798 = vsel %vm1399, %v1795, 0
        %v1801 = vsel %vm1417, %v1796, 0
        %1803 = vmatprep.subr.bf16.mxu0 0
        %1804 = vmatpush1.bf16.msra.mxu0 0
        %1805 = vmatprep.subr.bf16.mxu0 0
        %1806 = vmatpush1.bf16.msra.mxu0 0
        %1807 = vmatprep.subr.bf16.mxu0 0
        %1808 = vmatpush1.bf16.msra.mxu0 0
        %1809 = vmatprep.subr.bf16.mxu0 0
        %1810 = vmatpush1.bf16.msra.mxu0 0
        %1811 = vmatprep.subr.bf16.mxu0 0
        %1812 = vmatpush1.bf16.msra.mxu0 0
        %1813 = vmatprep.subr.bf16.mxu0 0
        %1814 = vmatpush1.bf16.msra.mxu0 0
        %1815 = vmatprep.subr.bf16.mxu0 0
        %1816 = vmatpush1.bf16.msra.mxu0 0
        %1817 = vmatprep.subr.bf16.mxu0 0
        %1818 = vmatpush1.bf16.msra.mxu0 %v1801
        %1819 = vmatprep.subr.bf16.mxu0 0
        %1820 = vmatpush2.bf16.msra.mxu0 0
        %1821 = vmatprep.subr.bf16.mxu0 0
        %1822 = vmatpush2.bf16.msra.mxu0 0
        %1823 = vmatprep.subr.bf16.mxu0 0
        %1824 = vmatpush2.bf16.msra.mxu0 0
        %1825 = vmatprep.subr.bf16.mxu0 0
        %1826 = vmatpush2.bf16.msra.mxu0 0
        %1827 = vmatprep.subr.bf16.mxu0 0
        %1828 = vmatpush2.bf16.msra.mxu0 0
        %1829 = vmatprep.subr.bf16.mxu0 0
        %1830 = vmatpush2.bf16.msra.mxu0 0
        %1831 = vmatprep.subr.bf16.mxu0 0
        %1832 = vmatpush2.bf16.msra.mxu0 0
        %1833 = vmatprep.subr.bf16.mxu0 0
        %1834 = vmatpush2.bf16.msra.mxu0 0
        %1835 = vmatprep.mubr.bf16.mxu0 0
        %1836 = vmatmul.mubr.bf16.gmra.mxu0 %v1798
        %v1837 = vpop.f32.mrf.mxu0
        %v1838 = vadd.f32 0.0, %v1837
        %v1839 = vpop.f32.mrf.mxu0
        %v1840 = vpop.f32.mrf.mxu0
        %v1841 = vpop.f32.mrf.mxu0
        %1842 = vdwg.mxu0
        %v1843 = vpack.c.bf16 %v1838, %v1838
        %v1844 = vld [vmem:[%s3 + $0x40] sm:$0xf]
        %v1845 = vld [vmem:[%s3 + $0x44] sm:$0xf]
        %v1846 = vld [vmem:[%s3 + $0x48] sm:$0xf]
        %v1847 = vld [vmem:[%s3 + $0x4c] sm:$0xf]
        %v1848 = vld [vmem:[%s3 + $0x50] sm:$0xf]
        %v1849 = vld [vmem:[%s3 + $0x54] sm:$0xf]
        %v1850 = vld [vmem:[%s3 + $0x58] sm:$0xf]
        %v1851 = vld [vmem:[%s3 + $0x5c] sm:$0xf]
        %v1860 = vunpack.c.l.b16 %v1844
        %v1861 = vunpack.c.l.b16 %v1845
        %v1862 = vunpack.c.l.b16 %v1846
        %v1863 = vunpack.c.l.b16 %v1847
        %v1864 = vunpack.c.l.b16 %v1848
        %v1865 = vunpack.c.l.b16 %v1849
        %v1866 = vunpack.c.l.b16 %v1850
        %v1867 = vunpack.c.l.b16 %v1851
        %v1868 = vpack.c.b16 %v1861, %v1860
        %v1869 = vpack.c.b16 %v1863, %v1862
        %v1870 = vpack.c.b16 %v1865, %v1864
        %v1871 = vpack.c.b16 %v1867, %v1866
        %v1877 = vsel %vm1351, %v1843, 0
        %1879 = vmatprep.subr.bf16.mxu0 0
        %1880 = vmatpush1.bf16.msra.mxu0 0
        %1881 = vmatprep.subr.bf16.mxu0 0
        %1882 = vmatpush1.bf16.msra.mxu0 0
        %1883 = vmatprep.subr.bf16.mxu0 0
        %1884 = vmatpush1.bf16.msra.mxu0 0
        %1885 = vmatprep.subr.bf16.mxu0 0
        %1886 = vmatpush1.bf16.msra.mxu0 0
        %1887 = vmatprep.subr.bf16.mxu0 0
        %1888 = vmatpush1.bf16.msra.mxu0 %v1871
        %1889 = vmatprep.subr.bf16.mxu0 0
        %1890 = vmatpush1.bf16.msra.mxu0 %v1870
        %1891 = vmatprep.subr.bf16.mxu0 0
        %1892 = vmatpush1.bf16.msra.mxu0 %v1869
        %1893 = vmatprep.subr.bf16.mxu0 0
        %1894 = vmatpush1.bf16.msra.mxu0 %v1868
        %1895 = vmatprep.subr.bf16.mxu0 0
        %1896 = vmatpush2.bf16.msra.mxu0 0
        %1897 = vmatprep.subr.bf16.mxu0 0
        %1898 = vmatpush2.bf16.msra.mxu0 0
        %1899 = vmatprep.subr.bf16.mxu0 0
        %1900 = vmatpush2.bf16.msra.mxu0 0
        %1901 = vmatprep.subr.bf16.mxu0 0
        %1902 = vmatpush2.bf16.msra.mxu0 0
        %1903 = vmatprep.subr.bf16.mxu0 0
        %1904 = vmatpush2.bf16.msra.mxu0 0
        %1905 = vmatprep.subr.bf16.mxu0 0
        %1906 = vmatpush2.bf16.msra.mxu0 0
        %1907 = vmatprep.subr.bf16.mxu0 0
        %1908 = vmatpush2.bf16.msra.mxu0 0
        %1909 = vmatprep.subr.bf16.mxu0 0
        %1910 = vmatpush2.bf16.msra.mxu0 0
        %1911 = vmatprep.mubr.bf16.mxu0 0
        %1912 = vmatmul.mubr.bf16.gmra.mxu0 %v1877
        %v1913 = vpop.f32.mrf.mxu0
        %v1914 = vadd.f32 0.0, %v1913
        %v1915 = vpop.f32.mrf.mxu0
        %v1916 = vpop.f32.mrf.mxu0
        %v1917 = vpop.f32.mrf.mxu0
        %1918 = vdwg.mxu0
        %v1919 = vadd.f32 %v1729, %v1914
        %v1921 = vunpack.c.l.b16 %v1734
        %v1922 = vpack.c.b16 %v1921, %v1921
        %1923 = vrot.lane.b32.xlu0 %v1922, 64
        %v1924 = vpop.permute.xlu0 %1923
        %v1926 = vunpack.c.l.b16 %v1735
        %v1927 = vpack.c.b16 %v1926, %v1926
        %1928 = vrot.lane.b32.xlu0 %v1927, 64
        %v1929 = vpop.permute.xlu0 %1928
        %v1931 = vsel %vm1351, %v1924, 0
        %v1934 = vsel %vm1351, %v1929, 0
        %1936 = vmatprep.subr.bf16.mxu0 0
        %1937 = vmatpush1.bf16.xpose.msra.mxu0 0
        %1938 = vmatprep.subr.bf16.mxu0 0
        %1939 = vmatpush1.bf16.xpose.msra.mxu0 0
        %1940 = vmatprep.subr.bf16.mxu0 0
        %1941 = vmatpush1.bf16.xpose.msra.mxu0 0
        %1942 = vmatprep.subr.bf16.mxu0 0
        %1943 = vmatpush1.bf16.xpose.msra.mxu0 0
        %1944 = vmatprep.subr.bf16.mxu0 0
        %1945 = vmatpush1.bf16.xpose.msra.mxu0 0
        %1946 = vmatprep.subr.bf16.mxu0 0
        %1947 = vmatpush1.bf16.xpose.msra.mxu0 0
        %1948 = vmatprep.subr.bf16.mxu0 0
        %1949 = vmatpush1.bf16.xpose.msra.mxu0 0
        %1950 = vmatprep.subr.bf16.mxu0 0
        %1951 = vmatpush1.bf16.xpose.msra.mxu0 %v1934
        %1952 = vmatprep.subr.bf16.mxu0 0
        %1953 = vmatpush2.bf16.xpose.msra.mxu0 0
        %1954 = vmatprep.subr.bf16.mxu0 0
        %1955 = vmatpush2.bf16.xpose.msra.mxu0 0
        %1956 = vmatprep.subr.bf16.mxu0 0
        %1957 = vmatpush2.bf16.xpose.msra.mxu0 0
        %1958 = vmatprep.subr.bf16.mxu0 0
        %1959 = vmatpush2.bf16.xpose.msra.mxu0 0
        %1960 = vmatprep.subr.bf16.mxu0 0
        %1961 = vmatpush2.bf16.xpose.msra.mxu0 0
        %1962 = vmatprep.subr.bf16.mxu0 0
        %1963 = vmatpush2.bf16.xpose.msra.mxu0 0
        %1964 = vmatprep.subr.bf16.mxu0 0
        %1965 = vmatpush2.bf16.xpose.msra.mxu0 0
        %1966 = vmatprep.subr.bf16.mxu0 0
        %1967 = vmatpush2.bf16.xpose.msra.mxu0 0
        %1968 = vmatprep.mubr.bf16.mxu0 0
        %1969 = vmatmul.mubr.bf16.gmra.mxu0 %v1931
        %v1970 = vpop.f32.mrf.mxu0
        %v1971 = vadd.f32 0.0, %v1970
        %v1972 = vpop.f32.mrf.mxu0
        %v1973 = vpop.f32.mrf.mxu0
        %v1974 = vpop.f32.mrf.mxu0
        %1975 = vdwg.mxu0
        %v1976 = vmul.f32 %v1971, 0.125
        %v1977 = vsel %vm1399, %v1976, -inf
        %1978 = vmax.xlane.f32.xlu0 %v1977
        %v1979 = vpop.xlane.xlu0 %1978
        %v1980 = vsub.f32 %v1976, %v1979
        %v1981 = vmul.f32 %v1980, 1.442695
        %v1982 = vpow.pop %v1981
        %v1983 = vsel %vm1399, %v1982, 0.0
        %1984 = vadd.xlane.f32.xlu0 %v1983
        %v1985 = vpop.xlane.xlu0 %1984
        %v1986 = vrcp.pop %v1985
        %v1987 = vmul.f32 %v1982, %v1986
        %v1988 = vadd.f32 %v1794, %v1987
        %v1989 = vpack.c.bf16 %v1987, %v1987
        %v1991 = vunpack.c.l.b16 %v1796
        %v1992 = vpack.c.b16 %v1991, %v1991
        %1993 = vrot.lane.b32.xlu0 %v1992, 64
        %v1994 = vpop.permute.xlu0 %1993
        %v1996 = vsel %vm1399, %v1989, 0
        %v1999 = vsel %vm1417, %v1994, 0
        %2001 = vmatprep.subr.bf16.mxu0 0
        %2002 = vmatpush1.bf16.msra.mxu0 0
        %2003 = vmatprep.subr.bf16.mxu0 0
        %2004 = vmatpush1.bf16.msra.mxu0 0
        %2005 = vmatprep.subr.bf16.mxu0 0
        %2006 = vmatpush1.bf16.msra.mxu0 0
        %2007 = vmatprep.subr.bf16.mxu0 0
        %2008 = vmatpush1.bf16.msra.mxu0 0
        %2009 = vmatprep.subr.bf16.mxu0 0
        %2010 = vmatpush1.bf16.msra.mxu0 0
        %2011 = vmatprep.subr.bf16.mxu0 0
        %2012 = vmatpush1.bf16.msra.mxu0 0
        %2013 = vmatprep.subr.bf16.mxu0 0
        %2014 = vmatpush1.bf16.msra.mxu0 0
        %2015 = vmatprep.subr.bf16.mxu0 0
        %2016 = vmatpush1.bf16.msra.mxu0 %v1999
        %2017 = vmatprep.subr.bf16.mxu0 0
        %2018 = vmatpush2.bf16.msra.mxu0 0
        %2019 = vmatprep.subr.bf16.mxu0 0
        %2020 = vmatpush2.bf16.msra.mxu0 0
        %2021 = vmatprep.subr.bf16.mxu0 0
        %2022 = vmatpush2.bf16.msra.mxu0 0
        %2023 = vmatprep.subr.bf16.mxu0 0
        %2024 = vmatpush2.bf16.msra.mxu0 0
        %2025 = vmatprep.subr.bf16.mxu0 0
        %2026 = vmatpush2.bf16.msra.mxu0 0
        %2027 = vmatprep.subr.bf16.mxu0 0
        %2028 = vmatpush2.bf16.msra.mxu0 0
        %2029 = vmatprep.subr.bf16.mxu0 0
        %2030 = vmatpush2.bf16.msra.mxu0 0
        %2031 = vmatprep.subr.bf16.mxu0 0
        %2032 = vmatpush2.bf16.msra.mxu0 0
        %2033 = vmatprep.mubr.bf16.mxu0 0
        %2034 = vmatmul.mubr.bf16.gmra.mxu0 %v1996
        %v2035 = vpop.f32.mrf.mxu0
        %v2036 = vadd.f32 0.0, %v2035
        %v2037 = vpop.f32.mrf.mxu0
        %v2038 = vpop.f32.mrf.mxu0
        %v2039 = vpop.f32.mrf.mxu0
        %2040 = vdwg.mxu0
        %v2041 = vpack.c.bf16 %v2036, %v2036
        %v2042 = vld [vmem:[%s3 + $0x60] sm:$0xf]
        %v2043 = vld [vmem:[%s3 + $0x64] sm:$0xf]
        %v2044 = vld [vmem:[%s3 + $0x68] sm:$0xf]
        %v2045 = vld [vmem:[%s3 + $0x6c] sm:$0xf]
        %v2046 = vld [vmem:[%s3 + $0x70] sm:$0xf]
        %v2047 = vld [vmem:[%s3 + $0x74] sm:$0xf]
        %v2048 = vld [vmem:[%s3 + $0x78] sm:$0xf]
        %v2049 = vld [vmem:[%s3 + $0x7c] sm:$0xf]
        %v2058 = vunpack.c.l.b16 %v2042
        %v2059 = vunpack.c.l.b16 %v2043
        %v2060 = vunpack.c.l.b16 %v2044
        %v2061 = vunpack.c.l.b16 %v2045
        %v2062 = vunpack.c.l.b16 %v2046
        %v2063 = vunpack.c.l.b16 %v2047
        %v2064 = vunpack.c.l.b16 %v2048
        %v2065 = vunpack.c.l.b16 %v2049
        %v2066 = vpack.c.b16 %v2059, %v2058
        %v2067 = vpack.c.b16 %v2061, %v2060
        %v2068 = vpack.c.b16 %v2063, %v2062
        %v2069 = vpack.c.b16 %v2065, %v2064
        %v2075 = vsel %vm1351, %v2041, 0
        %2077 = vmatprep.subr.bf16.mxu0 0
        %2078 = vmatpush1.bf16.msra.mxu0 0
        %2079 = vmatprep.subr.bf16.mxu0 0
        %2080 = vmatpush1.bf16.msra.mxu0 0
        %2081 = vmatprep.subr.bf16.mxu0 0
        %2082 = vmatpush1.bf16.msra.mxu0 0
        %2083 = vmatprep.subr.bf16.mxu0 0
        %2084 = vmatpush1.bf16.msra.mxu0 0
        %2085 = vmatprep.subr.bf16.mxu0 0
        %2086 = vmatpush1.bf16.msra.mxu0 %v2069
        %2087 = vmatprep.subr.bf16.mxu0 0
        %2088 = vmatpush1.bf16.msra.mxu0 %v2068
        %2089 = vmatprep.subr.bf16.mxu0 0
        %2090 = vmatpush1.bf16.msra.mxu0 %v2067
        %2091 = vmatprep.subr.bf16.mxu0 0
        %2092 = vmatpush1.bf16.msra.mxu0 %v2066
        %2093 = vmatprep.subr.bf16.mxu0 0
        %2094 = vmatpush2.bf16.msra.mxu0 0
        %2095 = vmatprep.subr.bf16.mxu0 0
        %2096 = vmatpush2.bf16.msra.mxu0 0
        %2097 = vmatprep.subr.bf16.mxu0 0
        %2098 = vmatpush2.bf16.msra.mxu0 0
        %2099 = vmatprep.subr.bf16.mxu0 0
        %2100 = vmatpush2.bf16.msra.mxu0 0
        %2101 = vmatprep.subr.bf16.mxu0 0
        %2102 = vmatpush2.bf16.msra.mxu0 0
        %2103 = vmatprep.subr.bf16.mxu0 0
        %2104 = vmatpush2.bf16.msra.mxu0 0
        %2105 = vmatprep.subr.bf16.mxu0 0
        %2106 = vmatpush2.bf16.msra.mxu0 0
        %2107 = vmatprep.subr.bf16.mxu0 0
        %2108 = vmatpush2.bf16.msra.mxu0 0
        %2109 = vmatprep.mubr.bf16.mxu0 0
        %2110 = vmatmul.mubr.bf16.gmra.mxu0 %v2075
        %v2111 = vpop.f32.mrf.mxu0
        %v2112 = vadd.f32 0.0, %v2111
        %v2113 = vpop.f32.mrf.mxu0
        %v2114 = vpop.f32.mrf.mxu0
        %v2115 = vpop.f32.mrf.mxu0
        %2116 = vdwg.mxu0
        %v2117 = vadd.f32 %v1919, %v2112
        %v2118 = vld [vmem:[%s4] sm:$0x1]
        %v2120 = vlaneseq
        %v2121 = vshrl.u32 %v2120, 7
        %v2122 = vsub.s32 0, %v2121
        %v2123 = vrot.slane %v2118, %v2122
        %v2125 = vadd.f32 %v2117, %v2123
        %v2126 = vld [vmem:[%s842] sm:$0xff]
        %v2127 = vmul.f32 %v1988, 0.25
        %v2128 = vpack.c.bf16 %v2127, %v2127
        %v2129 = vpack.c.bf16 %v2126, %v2126
        %v2131 = vsel %vm1399, %v2128, 0
        %v2134 = vsel %vm1417, %v2129, 0
        %2136 = vmatprep.subr.bf16.mxu0 0
        %2137 = vmatpush1.bf16.msra.mxu0 0
        %2138 = vmatprep.subr.bf16.mxu0 0
        %2139 = vmatpush1.bf16.msra.mxu0 0
        %2140 = vmatprep.subr.bf16.mxu0 0
        %2141 = vmatpush1.bf16.msra.mxu0 0
        %2142 = vmatprep.subr.bf16.mxu0 0
        %2143 = vmatpush1.bf16.msra.mxu0 0
        %2144 = vmatprep.subr.bf16.mxu0 0
        %2145 = vmatpush1.bf16.msra.mxu0 0
        %2146 = vmatprep.subr.bf16.mxu0 0
        %2147 = vmatpush1.bf16.msra.mxu0 0
        %2148 = vmatprep.subr.bf16.mxu0 0
        %2149 = vmatpush1.bf16.msra.mxu0 0
        %2150 = vmatprep.subr.bf16.mxu0 0
        %2151 = vmatpush1.bf16.msra.mxu0 %v2134
        %2152 = vmatprep.subr.bf16.mxu0 0
        %2153 = vmatpush2.bf16.msra.mxu0 0
        %2154 = vmatprep.subr.bf16.mxu0 0
        %2155 = vmatpush2.bf16.msra.mxu0 0
        %2156 = vmatprep.subr.bf16.mxu0 0
        %2157 = vmatpush2.bf16.msra.mxu0 0
        %2158 = vmatprep.subr.bf16.mxu0 0
        %2159 = vmatpush2.bf16.msra.mxu0 0
        %2160 = vmatprep.subr.bf16.mxu0 0
        %2161 = vmatpush2.bf16.msra.mxu0 0
        %2162 = vmatprep.subr.bf16.mxu0 0
        %2163 = vmatpush2.bf16.msra.mxu0 0
        %2164 = vmatprep.subr.bf16.mxu0 0
        %2165 = vmatpush2.bf16.msra.mxu0 0
        %2166 = vmatprep.subr.bf16.mxu0 0
        %2167 = vmatpush2.bf16.msra.mxu0 0
        %2168 = vmatprep.mubr.bf16.mxu0 0
        %2169 = vmatmul.mubr.bf16.gmra.mxu0 %v2131
        %v2170 = vpop.f32.mrf.mxu0
        %v2171 = vadd.f32 %v2126, %v2170
        %v2172 = vpop.f32.mrf.mxu0
        %v2173 = vpop.f32.mrf.mxu0
        %v2174 = vpop.f32.mrf.mxu0
        %2175 = vdwg.mxu0
        %v2176 = vld [vmem:[%s5] sm:$0x1]
        %v2177 = vld [vmem:[%s6] sm:$0x1]
        %v2178 = vsel %vm869, %v2171, 0.0
        %2179 = vadd.xlane.f32.xlu0 %v2178
        %v2180 = vpop.xlane.xlu0 %2179
        %v2181 = vrcp.pop 32.0
        %v2182 = vmul.f32 %v2180, %v2181
        %v2183 = vsub.f32 %v2171, %v2182
        %v2184 = vmul.f32 %v2183, %v2183
        %v2185 = vsel %vm869, %v2184, 0.0
        %2186 = vadd.xlane.f32.xlu0 %v2185
        %v2187 = vpop.xlane.xlu0 %2186
        %v2188 = vmul.f32 %v2187, %v2181
        %v2189 = vadd.f32 %v2188, 1e-05
        %v2190 = vrsqrt.pop %v2189
        %v2191 = vmul.f32 %v2183, %v2190
        %v2193 = vlaneseq
        %v2194 = vshrl.u32 %v2193, 7
        %v2195 = vsub.s32 0, %v2194
        %v2196 = vrot.slane %v2176, %v2195
        %v2198 = vmul.f32 %v2191, %v2196
        %v2200 = vlaneseq
        %v2201 = vshrl.u32 %v2200, 7
        %v2202 = vsub.s32 0, %v2201
        %v2203 = vrot.slane %v2177, %v2202
        %v2205 = vadd.f32 %v2198, %v2203
        %v2206 = vld [vmem:[%s7] sm:$0xf]
        %v2207 = vld [vmem:[%s7 + $0x4] sm:$0xf]
        %v2208 = vld [vmem:[%s7 + $0x8] sm:$0xf]
        %v2209 = vld [vmem:[%s7 + $0xc] sm:$0xf]
        %v2210 = vld [vmem:[%s8] sm:$0x1]
        %v2211 = vld [vmem:[%s9] sm:$0x1]
        %v2212 = vld [vmem:[%s10] sm:$0x1]
        %v2213 = vadd.f32 %v2126, %v2125
        %v2214 = vpack.c.bf16 %v2213, %v2213
        %v2216 = vlaneseq
        %v2217 = vshrl.u32 %v2216, 7
        %v2218 = vsub.s32 0, %v2217
        %v2219 = vrot.slane %v2210, %v2218
        %v2225 = vunpack.c.l.b16 %v2206
        %v2226 = vunpack.c.l.b16 %v2207
        %v2227 = vunpack.c.l.b16 %v2208
        %v2228 = vunpack.c.l.b16 %v2209
        %v2229 = vpack.c.b16 %v2226, %v2225
        %v2230 = vpack.c.b16 %v2228, %v2227
        %v2234 = vsel %vm869, %v2214, 0
        %2236 = vmatprep.subr.bf16.mxu0 0
        %2237 = vmatpush1.bf16.msra.mxu0 0
        %2238 = vmatprep.subr.bf16.mxu0 0
        %2239 = vmatpush1.bf16.msra.mxu0 0
        %2240 = vmatprep.subr.bf16.mxu0 0
        %2241 = vmatpush1.bf16.msra.mxu0 0
        %2242 = vmatprep.subr.bf16.mxu0 0
        %2243 = vmatpush1.bf16.msra.mxu0 0
        %2244 = vmatprep.subr.bf16.mxu0 0
        %2245 = vmatpush1.bf16.msra.mxu0 0
        %2246 = vmatprep.subr.bf16.mxu0 0
        %2247 = vmatpush1.bf16.msra.mxu0 0
        %2248 = vmatprep.subr.bf16.mxu0 0
        %2249 = vmatpush1.bf16.msra.mxu0 %v2230
        %2250 = vmatprep.subr.bf16.mxu0 0
        %2251 = vmatpush1.bf16.msra.mxu0 %v2229
        %2252 = vmatprep.subr.bf16.mxu0 0
        %2253 = vmatpush2.bf16.msra.mxu0 0
        %2254 = vmatprep.subr.bf16.mxu0 0
        %2255 = vmatpush2.bf16.msra.mxu0 0
        %2256 = vmatprep.subr.bf16.mxu0 0
        %2257 = vmatpush2.bf16.msra.mxu0 0
        %2258 = vmatprep.subr.bf16.mxu0 0
        %2259 = vmatpush2.bf16.msra.mxu0 0
        %2260 = vmatprep.subr.bf16.mxu0 0
        %2261 = vmatpush2.bf16.msra.mxu0 0
        %2262 = vmatprep.subr.bf16.mxu0 0
        %2263 = vmatpush2.bf16.msra.mxu0 0
        %2264 = vmatprep.subr.bf16.mxu0 0
        %2265 = vmatpush2.bf16.msra.mxu0 0
        %2266 = vmatprep.subr.bf16.mxu0 0
        %2267 = vmatpush2.bf16.msra.mxu0 0
        %2268 = vmatprep.mubr.bf16.mxu0 0
        %2269 = vmatmul.mubr.bf16.gmra.mxu0 %v2234
        %v2270 = vpop.f32.mrf.mxu0
        %v2271 = vadd.f32 %v2219, %v2270
        %v2272 = vpop.f32.mrf.mxu0
        %v2273 = vpop.f32.mrf.mxu0
        %v2274 = vpop.f32.mrf.mxu0
        %2275 = vdwg.mxu0
        %v2276 = vadd.f32 %v2271, %v2213
        %v2277 = vsel %vm869, %v2276, 0.0
        %2278 = vadd.xlane.f32.xlu0 %v2277
        %v2279 = vpop.xlane.xlu0 %2278
        %v2280 = vmul.f32 %v2279, %v2181
        %v2281 = vsub.f32 %v2276, %v2280
        %v2282 = vmul.f32 %v2281, %v2281
        %v2283 = vsel %vm869, %v2282, 0.0
        %2284 = vadd.xlane.f32.xlu0 %v2283
        %v2285 = vpop.xlane.xlu0 %2284
        %v2286 = vmul.f32 %v2285, %v2181
        %v2287 = vadd.f32 %v2286, 1e-05
        %v2288 = vrsqrt.pop %v2287
        %v2289 = vmul.f32 %v2281, %v2288
        %v2291 = vlaneseq
        %v2292 = vshrl.u32 %v2291, 7
        %v2293 = vsub.s32 0, %v2292
        %v2294 = vrot.slane %v2211, %v2293
        %v2296 = vmul.f32 %v2289, %v2294
        %v2298 = vlaneseq
        %v2299 = vshrl.u32 %v2298, 7
        %v2300 = vsub.s32 0, %v2299
        %v2301 = vrot.slane %v2212, %v2300
        %v2303 = vadd.f32 %v2296, %v2301
        %v2304 = vadd.f32 %v2303, 0.0
        %v2305 = vld [vmem:[%s927] sm:$0xff]
        %v2306 = vadd.f32 %v2305, %v2125
        %v2307 = vpack.c.bf16 %v2306, %v2306
        %v2309 = vsel %vm869, %v2307, 0
        %2311 = vmatprep.subr.bf16.mxu0 0
        %2312 = vmatpush1.bf16.msra.mxu0 0
        %2313 = vmatprep.subr.bf16.mxu0 0
        %2314 = vmatpush1.bf16.msra.mxu0 0
        %2315 = vmatprep.subr.bf16.mxu0 0
        %2316 = vmatpush1.bf16.msra.mxu0 0
        %2317 = vmatprep.subr.bf16.mxu0 0
        %2318 = vmatpush1.bf16.msra.mxu0 0
        %2319 = vmatprep.subr.bf16.mxu0 0
        %2320 = vmatpush1.bf16.msra.mxu0 0
        %2321 = vmatprep.subr.bf16.mxu0 0
        %2322 = vmatpush1.bf16.msra.mxu0 0
        %2323 = vmatprep.subr.bf16.mxu0 0
        %2324 = vmatpush1.bf16.msra.mxu0 %v2230
        %2325 = vmatprep.subr.bf16.mxu0 0
        %2326 = vmatpush1.bf16.msra.mxu0 %v2229
        %2327 = vmatprep.subr.bf16.mxu0 0
        %2328 = vmatpush2.bf16.msra.mxu0 0
        %2329 = vmatprep.subr.bf16.mxu0 0
        %2330 = vmatpush2.bf16.msra.mxu0 0
        %2331 = vmatprep.subr.bf16.mxu0 0
        %2332 = vmatpush2.bf16.msra.mxu0 0
        %2333 = vmatprep.subr.bf16.mxu0 0
        %2334 = vmatpush2.bf16.msra.mxu0 0
        %2335 = vmatprep.subr.bf16.mxu0 0
        %2336 = vmatpush2.bf16.msra.mxu0 0
        %2337 = vmatprep.subr.bf16.mxu0 0
        %2338 = vmatpush2.bf16.msra.mxu0 0
        %2339 = vmatprep.subr.bf16.mxu0 0
        %2340 = vmatpush2.bf16.msra.mxu0 0
        %2341 = vmatprep.subr.bf16.mxu0 0
        %2342 = vmatpush2.bf16.msra.mxu0 0
        %2343 = vmatprep.mubr.bf16.mxu0 0
        %2344 = vmatmul.mubr.bf16.gmra.mxu0 %v2309
        %v2345 = vpop.f32.mrf.mxu0
        %v2346 = vadd.f32 %v2219, %v2345
        %v2347 = vpop.f32.mrf.mxu0
        %v2348 = vpop.f32.mrf.mxu0
        %v2349 = vpop.f32.mrf.mxu0
        %2350 = vdwg.mxu0
        %v2351 = vadd.f32 %v2346, %v2306
        %v2352 = vsel %vm869, %v2351, 0.0
        %2353 = vadd.xlane.f32.xlu0 %v2352
        %v2354 = vpop.xlane.xlu0 %2353
        %v2355 = vmul.f32 %v2354, %v2181
        %v2356 = vsub.f32 %v2351, %v2355
        %v2357 = vmul.f32 %v2356, %v2356
        %v2358 = vsel %vm869, %v2357, 0.0
        %2359 = vadd.xlane.f32.xlu0 %v2358
        %v2360 = vpop.xlane.xlu0 %2359
        %v2361 = vmul.f32 %v2360, %v2181
        %v2362 = vadd.f32 %v2361, 1e-05
        %v2363 = vrsqrt.pop %v2362
        %v2364 = vmul.f32 %v2356, %v2363
        %v2365 = vmul.f32 %v2364, %v2294
        %v2366 = vadd.f32 %v2365, %v2301
        %v2367 = vadd.f32 %v2304, %v2366
        %v2368 = vld [vmem:[%s987] sm:$0xff]
        %v2369 = vadd.f32 %v2368, %v2125
        %v2370 = vpack.c.bf16 %v2369, %v2369
        %v2372 = vsel %vm869, %v2370, 0
        %2374 = vmatprep.subr.bf16.mxu0 0
        %2375 = vmatpush1.bf16.msra.mxu0 0
        %2376 = vmatprep.subr.bf16.mxu0 0
        %2377 = vmatpush1.bf16.msra.mxu0 0
        %2378 = vmatprep.subr.bf16.mxu0 0
        %2379 = vmatpush1.bf16.msra.mxu0 0
        %2380 = vmatprep.subr.bf16.mxu0 0
        %2381 = vmatpush1.bf16.msra.mxu0 0
        %2382 = vmatprep.subr.bf16.mxu0 0
        %2383 = vmatpush1.bf16.msra.mxu0 0
        %2384 = vmatprep.subr.bf16.mxu0 0
        %2385 = vmatpush1.bf16.msra.mxu0 0
        %2386 = vmatprep.subr.bf16.mxu0 0
        %2387 = vmatpush1.bf16.msra.mxu0 %v2230
        %2388 = vmatprep.subr.bf16.mxu0 0
        %2389 = vmatpush1.bf16.msra.mxu0 %v2229
        %2390 = vmatprep.subr.bf16.mxu0 0
        %2391 = vmatpush2.bf16.msra.mxu0 0
        %2392 = vmatprep.subr.bf16.mxu0 0
        %2393 = vmatpush2.bf16.msra.mxu0 0
        %2394 = vmatprep.subr.bf16.mxu0 0
        %2395 = vmatpush2.bf16.msra.mxu0 0
        %2396 = vmatprep.subr.bf16.mxu0 0
        %2397 = vmatpush2.bf16.msra.mxu0 0
        %2398 = vmatprep.subr.bf16.mxu0 0
        %2399 = vmatpush2.bf16.msra.mxu0 0
        %2400 = vmatprep.subr.bf16.mxu0 0
        %2401 = vmatpush2.bf16.msra.mxu0 0
        %2402 = vmatprep.subr.bf16.mxu0 0
        %2403 = vmatpush2.bf16.msra.mxu0 0
        %2404 = vmatprep.subr.bf16.mxu0 0
        %2405 = vmatpush2.bf16.msra.mxu0 0
        %2406 = vmatprep.mubr.bf16.mxu0 0
        %2407 = vmatmul.mubr.bf16.gmra.mxu0 %v2372
        %v2408 = vpop.f32.mrf.mxu0
        %v2409 = vadd.f32 %v2219, %v2408
        %v2410 = vpop.f32.mrf.mxu0
        %v2411 = vpop.f32.mrf.mxu0
        %v2412 = vpop.f32.mrf.mxu0
        %2413 = vdwg.mxu0
        %v2414 = vadd.f32 %v2409, %v2369
        %v2415 = vsel %vm869, %v2414, 0.0
        %2416 = vadd.xlane.f32.xlu0 %v2415
        %v2417 = vpop.xlane.xlu0 %2416
        %v2418 = vmul.f32 %v2417, %v2181
        %v2419 = vsub.f32 %v2414, %v2418
        %v2420 = vmul.f32 %v2419, %v2419
        %v2421 = vsel %vm869, %v2420, 0.0
        %2422 = vadd.xlane.f32.xlu0 %v2421
        %v2423 = vpop.xlane.xlu0 %2422
        %v2424 = vmul.f32 %v2423, %v2181
        %v2425 = vadd.f32 %v2424, 1e-05
        %v2426 = vrsqrt.pop %v2425
        %v2427 = vmul.f32 %v2419, %v2426
        %v2428 = vmul.f32 %v2427, %v2294
        %v2429 = vadd.f32 %v2428, %v2301
        %v2430 = vadd.f32 %v2367, %v2429
        %v2431 = vld [vmem:[%s1047] sm:$0xff]
        %v2432 = vadd.f32 %v2431, %v2125
        %v2433 = vpack.c.bf16 %v2432, %v2432
        %v2435 = vsel %vm869, %v2433, 0
        %2437 = vmatprep.subr.bf16.mxu0 0
        %2438 = vmatpush1.bf16.msra.mxu0 0
        %2439 = vmatprep.subr.bf16.mxu0 0
        %2440 = vmatpush1.bf16.msra.mxu0 0
        %2441 = vmatprep.subr.bf16.mxu0 0
        %2442 = vmatpush1.bf16.msra.mxu0 0
        %2443 = vmatprep.subr.bf16.mxu0 0
        %2444 = vmatpush1.bf16.msra.mxu0 0
        %2445 = vmatprep.subr.bf16.mxu0 0
        %2446 = vmatpush1.bf16.msra.mxu0 0
        %2447 = vmatprep.subr.bf16.mxu0 0
        %2448 = vmatpush1.bf16.msra.mxu0 0
        %2449 = vmatprep.subr.bf16.mxu0 0
        %2450 = vmatpush1.bf16.msra.mxu0 %v2230
        %2451 = vmatprep.subr.bf16.mxu0 0
        %2452 = vmatpush1.bf16.msra.mxu0 %v2229
        %2453 = vmatprep.subr.bf16.mxu0 0
        %2454 = vmatpush2.bf16.msra.mxu0 0
        %2455 = vmatprep.subr.bf16.mxu0 0
        %2456 = vmatpush2.bf16.msra.mxu0 0
        %2457 = vmatprep.subr.bf16.mxu0 0
        %2458 = vmatpush2.bf16.msra.mxu0 0
        %2459 = vmatprep.subr.bf16.mxu0 0
        %2460 = vmatpush2.bf16.msra.mxu0 0
        %2461 = vmatprep.subr.bf16.mxu0 0
        %2462 = vmatpush2.bf16.msra.mxu0 0
        %2463 = vmatprep.subr.bf16.mxu0 0
        %2464 = vmatpush2.bf16.msra.mxu0 0
        %2465 = vmatprep.subr.bf16.mxu0 0
        %2466 = vmatpush2.bf16.msra.mxu0 0
        %2467 = vmatprep.subr.bf16.mxu0 0
        %2468 = vmatpush2.bf16.msra.mxu0 0
        %2469 = vmatprep.mubr.bf16.mxu0 0
        %2470 = vmatmul.mubr.bf16.gmra.mxu0 %v2435
        %v2471 = vpop.f32.mrf.mxu0
        %v2472 = vadd.f32 %v2219, %v2471
        %v2473 = vpop.f32.mrf.mxu0
        %v2474 = vpop.f32.mrf.mxu0
        %v2475 = vpop.f32.mrf.mxu0
        %2476 = vdwg.mxu0
        %v2477 = vadd.f32 %v2472, %v2432
        %v2478 = vsel %vm869, %v2477, 0.0
        %2479 = vadd.xlane.f32.xlu0 %v2478
        %v2480 = vpop.xlane.xlu0 %2479
        %v2481 = vmul.f32 %v2480, %v2181
        %v2482 = vsub.f32 %v2477, %v2481
        %v2483 = vmul.f32 %v2482, %v2482
        %v2484 = vsel %vm869, %v2483, 0.0
        %2485 = vadd.xlane.f32.xlu0 %v2484
        %v2486 = vpop.xlane.xlu0 %2485
        %v2487 = vmul.f32 %v2486, %v2181
        %v2488 = vadd.f32 %v2487, 1e-05
        %v2489 = vrsqrt.pop %v2488
        %v2490 = vmul.f32 %v2482, %v2489
        %v2491 = vmul.f32 %v2490, %v2294
        %v2492 = vadd.f32 %v2491, %v2301
        %v2493 = vadd.f32 %v2430, %v2492
        %v2494 = vld [vmem:[%s1110] sm:$0xff]
        %v2495 = vadd.f32 %v2494, %v2125
        %v2496 = vpack.c.bf16 %v2495, %v2495
        %v2498 = vsel %vm869, %v2496, 0
        %2500 = vmatprep.subr.bf16.mxu0 0
        %2501 = vmatpush1.bf16.msra.mxu0 0
        %2502 = vmatprep.subr.bf16.mxu0 0
        %2503 = vmatpush1.bf16.msra.mxu0 0
        %2504 = vmatprep.subr.bf16.mxu0 0
        %2505 = vmatpush1.bf16.msra.mxu0 0
        %2506 = vmatprep.subr.bf16.mxu0 0
        %2507 = vmatpush1.bf16.msra.mxu0 0
        %2508 = vmatprep.subr.bf16.mxu0 0
        %2509 = vmatpush1.bf16.msra.mxu0 0
        %2510 = vmatprep.subr.bf16.mxu0 0
        %2511 = vmatpush1.bf16.msra.mxu0 0
        %2512 = vmatprep.subr.bf16.mxu0 0
        %2513 = vmatpush1.bf16.msra.mxu0 %v2230
        %2514 = vmatprep.subr.bf16.mxu0 0
        %2515 = vmatpush1.bf16.msra.mxu0 %v2229
        %2516 = vmatprep.subr.bf16.mxu0 0
        %2517 = vmatpush2.bf16.msra.mxu0 0
        %2518 = vmatprep.subr.bf16.mxu0 0
        %2519 = vmatpush2.bf16.msra.mxu0 0
        %2520 = vmatprep.subr.bf16.mxu0 0
        %2521 = vmatpush2.bf16.msra.mxu0 0
        %2522 = vmatprep.subr.bf16.mxu0 0
        %2523 = vmatpush2.bf16.msra.mxu0 0
        %2524 = vmatprep.subr.bf16.mxu0 0
        %2525 = vmatpush2.bf16.msra.mxu0 0
        %2526 = vmatprep.subr.bf16.mxu0 0
        %2527 = vmatpush2.bf16.msra.mxu0 0
        %2528 = vmatprep.subr.bf16.mxu0 0
        %2529 = vmatpush2.bf16.msra.mxu0 0
        %2530 = vmatprep.subr.bf16.mxu0 0
        %2531 = vmatpush2.bf16.msra.mxu0 0
        %2532 = vmatprep.mubr.bf16.mxu0 0
        %2533 = vmatmul.mubr.bf16.gmra.mxu0 %v2498
        %v2534 = vpop.f32.mrf.mxu0
        %v2535 = vadd.f32 %v2219, %v2534
        %v2536 = vpop.f32.mrf.mxu0
        %v2537 = vpop.f32.mrf.mxu0
        %v2538 = vpop.f32.mrf.mxu0
        %2539 = vdwg.mxu0
        %v2540 = vadd.f32 %v2535, %v2495
        %v2541 = vsel %vm869, %v2540, 0.0
        %2542 = vadd.xlane.f32.xlu0 %v2541
        %v2543 = vpop.xlane.xlu0 %2542
        %v2544 = vmul.f32 %v2543, %v2181
        %v2545 = vsub.f32 %v2540, %v2544
        %v2546 = vmul.f32 %v2545, %v2545
        %v2547 = vsel %vm869, %v2546, 0.0
        %2548 = vadd.xlane.f32.xlu0 %v2547
        %v2549 = vpop.xlane.xlu0 %2548
        %v2550 = vmul.f32 %v2549, %v2181
        %v2551 = vadd.f32 %v2550, 1e-05
        %v2552 = vrsqrt.pop %v2551
        %v2553 = vmul.f32 %v2545, %v2552
        %v2554 = vmul.f32 %v2553, %v2294
        %v2555 = vadd.f32 %v2554, %v2301
        %v2556 = vadd.f32 %v2493, %v2555
        %v2557 = vld [vmem:[%s1169] sm:$0xff]
        %v2558 = vadd.f32 %v2557, %v2125
        %v2559 = vpack.c.bf16 %v2558, %v2558
        %v2561 = vsel %vm869, %v2559, 0
        %2563 = vmatprep.subr.bf16.mxu0 0
        %2564 = vmatpush1.bf16.msra.mxu0 0
        %2565 = vmatprep.subr.bf16.mxu0 0
        %2566 = vmatpush1.bf16.msra.mxu0 0
        %2567 = vmatprep.subr.bf16.mxu0 0
        %2568 = vmatpush1.bf16.msra.mxu0 0
        %2569 = vmatprep.subr.bf16.mxu0 0
        %2570 = vmatpush1.bf16.msra.mxu0 0
        %2571 = vmatprep.subr.bf16.mxu0 0
        %2572 = vmatpush1.bf16.msra.mxu0 0
        %2573 = vmatprep.subr.bf16.mxu0 0
        %2574 = vmatpush1.bf16.msra.mxu0 0
        %2575 = vmatprep.subr.bf16.mxu0 0
        %2576 = vmatpush1.bf16.msra.mxu0 %v2230
        %2577 = vmatprep.subr.bf16.mxu0 0
        %2578 = vmatpush1.bf16.msra.mxu0 %v2229
        %2579 = vmatprep.subr.bf16.mxu0 0
        %2580 = vmatpush2.bf16.msra.mxu0 0
        %2581 = vmatprep.subr.bf16.mxu0 0
        %2582 = vmatpush2.bf16.msra.mxu0 0
        %2583 = vmatprep.subr.bf16.mxu0 0
        %2584 = vmatpush2.bf16.msra.mxu0 0
        %2585 = vmatprep.subr.bf16.mxu0 0
        %2586 = vmatpush2.bf16.msra.mxu0 0
        %2587 = vmatprep.subr.bf16.mxu0 0
        %2588 = vmatpush2.bf16.msra.mxu0 0
        %2589 = vmatprep.subr.bf16.mxu0 0
        %2590 = vmatpush2.bf16.msra.mxu0 0
        %2591 = vmatprep.subr.bf16.mxu0 0
        %2592 = vmatpush2.bf16.msra.mxu0 0
        %2593 = vmatprep.subr.bf16.mxu0 0
        %2594 = vmatpush2.bf16.msra.mxu0 0
        %2595 = vmatprep.mubr.bf16.mxu0 0
        %2596 = vmatmul.mubr.bf16.gmra.mxu0 %v2561
        %v2597 = vpop.f32.mrf.mxu0
        %v2598 = vadd.f32 %v2219, %v2597
        %v2599 = vpop.f32.mrf.mxu0
        %v2600 = vpop.f32.mrf.mxu0
        %v2601 = vpop.f32.mrf.mxu0
        %2602 = vdwg.mxu0
        %v2603 = vadd.f32 %v2598, %v2558
        %v2604 = vsel %vm869, %v2603, 0.0
        %2605 = vadd.xlane.f32.xlu0 %v2604
        %v2606 = vpop.xlane.xlu0 %2605
        %v2607 = vmul.f32 %v2606, %v2181
        %v2608 = vsub.f32 %v2603, %v2607
        %v2609 = vmul.f32 %v2608, %v2608
        %v2610 = vsel %vm869, %v2609, 0.0
        %2611 = vadd.xlane.f32.xlu0 %v2610
        %v2612 = vpop.xlane.xlu0 %2611
        %v2613 = vmul.f32 %v2612, %v2181
        %v2614 = vadd.f32 %v2613, 1e-05
        %v2615 = vrsqrt.pop %v2614
        %v2616 = vmul.f32 %v2608, %v2615
        %v2617 = vmul.f32 %v2616, %v2294
        %v2618 = vadd.f32 %v2617, %v2301
        %v2619 = vadd.f32 %v2556, %v2618
        %v2620 = vld [vmem:[%s1228] sm:$0xff]
        %v2621 = vadd.f32 %v2620, %v2125
        %v2622 = vpack.c.bf16 %v2621, %v2621
        %v2624 = vsel %vm869, %v2622, 0
        %2626 = vmatprep.subr.bf16.mxu0 0
        %2627 = vmatpush1.bf16.msra.mxu0 0
        %2628 = vmatprep.subr.bf16.mxu0 0
        %2629 = vmatpush1.bf16.msra.mxu0 0
        %2630 = vmatprep.subr.bf16.mxu0 0
        %2631 = vmatpush1.bf16.msra.mxu0 0
        %2632 = vmatprep.subr.bf16.mxu0 0
        %2633 = vmatpush1.bf16.msra.mxu0 0
        %2634 = vmatprep.subr.bf16.mxu0 0
        %2635 = vmatpush1.bf16.msra.mxu0 0
        %2636 = vmatprep.subr.bf16.mxu0 0
        %2637 = vmatpush1.bf16.msra.mxu0 0
        %2638 = vmatprep.subr.bf16.mxu0 0
        %2639 = vmatpush1.bf16.msra.mxu0 %v2230
        %2640 = vmatprep.subr.bf16.mxu0 0
        %2641 = vmatpush1.bf16.msra.mxu0 %v2229
        %2642 = vmatprep.subr.bf16.mxu0 0
        %2643 = vmatpush2.bf16.msra.mxu0 0
        %2644 = vmatprep.subr.bf16.mxu0 0
        %2645 = vmatpush2.bf16.msra.mxu0 0
        %2646 = vmatprep.subr.bf16.mxu0 0
        %2647 = vmatpush2.bf16.msra.mxu0 0
        %2648 = vmatprep.subr.bf16.mxu0 0
        %2649 = vmatpush2.bf16.msra.mxu0 0
        %2650 = vmatprep.subr.bf16.mxu0 0
        %2651 = vmatpush2.bf16.msra.mxu0 0
        %2652 = vmatprep.subr.bf16.mxu0 0
        %2653 = vmatpush2.bf16.msra.mxu0 0
        %2654 = vmatprep.subr.bf16.mxu0 0
        %2655 = vmatpush2.bf16.msra.mxu0 0
        %2656 = vmatprep.subr.bf16.mxu0 0
        %2657 = vmatpush2.bf16.msra.mxu0 0
        %2658 = vmatprep.mubr.bf16.mxu0 0
        %2659 = vmatmul.mubr.bf16.gmra.mxu0 %v2624
        %v2660 = vpop.f32.mrf.mxu0
        %v2661 = vadd.f32 %v2219, %v2660
        %v2662 = vpop.f32.mrf.mxu0
        %v2663 = vpop.f32.mrf.mxu0
        %v2664 = vpop.f32.mrf.mxu0
        %2665 = vdwg.mxu0
        %v2666 = vadd.f32 %v2661, %v2621
        %v2667 = vsel %vm869, %v2666, 0.0
        %2668 = vadd.xlane.f32.xlu0 %v2667
        %v2669 = vpop.xlane.xlu0 %2668
        %v2670 = vmul.f32 %v2669, %v2181
        %v2671 = vsub.f32 %v2666, %v2670
        %v2672 = vmul.f32 %v2671, %v2671
        %v2673 = vsel %vm869, %v2672, 0.0
        %2674 = vadd.xlane.f32.xlu0 %v2673
        %v2675 = vpop.xlane.xlu0 %2674
        %v2676 = vmul.f32 %v2675, %v2181
        %v2677 = vadd.f32 %v2676, 1e-05
        %v2678 = vrsqrt.pop %v2677
        %v2679 = vmul.f32 %v2671, %v2678
        %v2680 = vmul.f32 %v2679, %v2294
        %v2681 = vadd.f32 %v2680, %v2301
        %v2682 = vadd.f32 %v2619, %v2681
        %v2683 = vld [vmem:[%s1287] sm:$0xff]
        %v2684 = vadd.f32 %v2683, %v2125
        %v2685 = vpack.c.bf16 %v2684, %v2684
        %v2687 = vsel %vm869, %v2685, 0
        %2689 = vmatprep.subr.bf16.mxu0 0
        %2690 = vmatpush1.bf16.msra.mxu0 0
        %2691 = vmatprep.subr.bf16.mxu0 0
        %2692 = vmatpush1.bf16.msra.mxu0 0
        %2693 = vmatprep.subr.bf16.mxu0 0
        %2694 = vmatpush1.bf16.msra.mxu0 0
        %2695 = vmatprep.subr.bf16.mxu0 0
        %2696 = vmatpush1.bf16.msra.mxu0 0
        %2697 = vmatprep.subr.bf16.mxu0 0
        %2698 = vmatpush1.bf16.msra.mxu0 0
        %2699 = vmatprep.subr.bf16.mxu0 0
        %2700 = vmatpush1.bf16.msra.mxu0 0
        %2701 = vmatprep.subr.bf16.mxu0 0
        %2702 = vmatpush1.bf16.msra.mxu0 %v2230
        %2703 = vmatprep.subr.bf16.mxu0 0
        %2704 = vmatpush1.bf16.msra.mxu0 %v2229
        %2705 = vmatprep.subr.bf16.mxu0 0
        %2706 = vmatpush2.bf16.msra.mxu0 0
        %2707 = vmatprep.subr.bf16.mxu0 0
        %2708 = vmatpush2.bf16.msra.mxu0 0
        %2709 = vmatprep.subr.bf16.mxu0 0
        %2710 = vmatpush2.bf16.msra.mxu0 0
        %2711 = vmatprep.subr.bf16.mxu0 0
        %2712 = vmatpush2.bf16.msra.mxu0 0
        %2713 = vmatprep.subr.bf16.mxu0 0
        %2714 = vmatpush2.bf16.msra.mxu0 0
        %2715 = vmatprep.subr.bf16.mxu0 0
        %2716 = vmatpush2.bf16.msra.mxu0 0
        %2717 = vmatprep.subr.bf16.mxu0 0
        %2718 = vmatpush2.bf16.msra.mxu0 0
        %2719 = vmatprep.subr.bf16.mxu0 0
        %2720 = vmatpush2.bf16.msra.mxu0 0
        %2721 = vmatprep.mubr.bf16.mxu0 0
        %2722 = vmatmul.mubr.bf16.gmra.mxu0 %v2687
        %v2723 = vpop.f32.mrf.mxu0
        %v2724 = vadd.f32 %v2219, %v2723
        %v2725 = vpop.f32.mrf.mxu0
        %v2726 = vpop.f32.mrf.mxu0
        %v2727 = vpop.f32.mrf.mxu0
        %2728 = vdwg.mxu0
        %v2729 = vadd.f32 %v2724, %v2684
        %v2730 = vsel %vm869, %v2729, 0.0
        %2731 = vadd.xlane.f32.xlu0 %v2730
        %v2732 = vpop.xlane.xlu0 %2731
        %v2733 = vmul.f32 %v2732, %v2181
        %v2734 = vsub.f32 %v2729, %v2733
        %v2735 = vmul.f32 %v2734, %v2734
        %v2736 = vsel %vm869, %v2735, 0.0
        %2737 = vadd.xlane.f32.xlu0 %v2736
        %v2738 = vpop.xlane.xlu0 %2737
        %v2739 = vmul.f32 %v2738, %v2181
        %v2740 = vadd.f32 %v2739, 1e-05
        %v2741 = vrsqrt.pop %v2740
        %v2742 = vmul.f32 %v2734, %v2741
        %v2743 = vmul.f32 %v2742, %v2294
        %v2744 = vadd.f32 %v2743, %v2301
        %v2745 = vadd.f32 %v2682, %v2744
        %v2746 = vmul.f32 %v2745, 0.125
        %v2747 = vpack.c.bf16 %v2205, %v2205
        %v2748 = vld [vmem:[%s11] sm:$0xf]
        %v2749 = vld [vmem:[%s11 + $0x4] sm:$0xf]
        %v2750 = vld [vmem:[%s11 + $0x8] sm:$0xf]
        %v2751 = vld [vmem:[%s11 + $0xc] sm:$0xf]
        %v2752 = vld [vmem:[%s12] sm:$0x1]
        %v2754 = vlaneseq
        %v2755 = vshrl.u32 %v2754, 7
        %v2756 = vsub.s32 0, %v2755
        %v2757 = vrot.slane %v2752, %v2756
        %v2763 = vunpack.c.l.b16 %v2748
        %v2764 = vunpack.c.l.b16 %v2749
        %v2765 = vunpack.c.l.b16 %v2750
        %v2766 = vunpack.c.l.b16 %v2751
        %v2767 = vpack.c.b16 %v2764, %v2763
        %v2768 = vpack.c.b16 %v2766, %v2765
        %v2772 = vsel %vm869, %v2747, 0
        %2774 = vmatprep.subr.bf16.mxu0 0
        %2775 = vmatpush1.bf16.msra.mxu0 0
        %2776 = vmatprep.subr.bf16.mxu0 0
        %2777 = vmatpush1.bf16.msra.mxu0 0
        %2778 = vmatprep.subr.bf16.mxu0 0
        %2779 = vmatpush1.bf16.msra.mxu0 0
        %2780 = vmatprep.subr.bf16.mxu0 0
        %2781 = vmatpush1.bf16.msra.mxu0 0
        %2782 = vmatprep.subr.bf16.mxu0 0
        %2783 = vmatpush1.bf16.msra.mxu0 0
        %2784 = vmatprep.subr.bf16.mxu0 0
        %2785 = vmatpush1.bf16.msra.mxu0 0
        %2786 = vmatprep.subr.bf16.mxu0 0
        %2787 = vmatpush1.bf16.msra.mxu0 %v2768
        %2788 = vmatprep.subr.bf16.mxu0 0
        %2789 = vmatpush1.bf16.msra.mxu0 %v2767
        %2790 = vmatprep.subr.bf16.mxu0 0
        %2791 = vmatpush2.bf16.msra.mxu0 0
        %2792 = vmatprep.subr.bf16.mxu0 0
        %2793 = vmatpush2.bf16.msra.mxu0 0
        %2794 = vmatprep.subr.bf16.mxu0 0
        %2795 = vmatpush2.bf16.msra.mxu0 0
        %2796 = vmatprep.subr.bf16.mxu0 0
        %2797 = vmatpush2.bf16.msra.mxu0 0
        %2798 = vmatprep.subr.bf16.mxu0 0
        %2799 = vmatpush2.bf16.msra.mxu0 0
        %2800 = vmatprep.subr.bf16.mxu0 0
        %2801 = vmatpush2.bf16.msra.mxu0 0
        %2802 = vmatprep.subr.bf16.mxu0 0
        %2803 = vmatpush2.bf16.msra.mxu0 0
        %2804 = vmatprep.subr.bf16.mxu0 0
        %2805 = vmatpush2.bf16.msra.mxu0 0
        %2806 = vmatprep.mubr.bf16.mxu0 0
        %2807 = vmatmul.mubr.bf16.gmra.mxu0 %v2772
        %v2808 = vpop.f32.mrf.mxu0
        %v2809 = vadd.f32 %v2757, %v2808
        %v2810 = vpop.f32.mrf.mxu0
        %v2811 = vpop.f32.mrf.mxu0
        %v2812 = vpop.f32.mrf.mxu0
        %2813 = vdwg.mxu0
        %v2814 = vpack.c.bf16 %v2809, %v2809
        %vm2815 = vcmask 781312
        %2816 = vst.msk [vmem:[#allocation5] sm:$0xf] %vm2815, %v2814
        %v2817 = vld [vmem:[#allocation5] sm:$0xf]
        %v2819 = vunpack.c.l.b16 %v2817
        %v2820 = vpack.c.b16 %v2819, %v2819
        %2821 = vrot.lane.b32.xlu0 %v2820, 96
        %v2822 = vpop.permute.xlu0 %2821
        %v2824 = vsel %vm1399, %v2817, 0
        %v2827 = vsel %vm1399, %v2822, 0
        %2829 = vmatprep.subr.bf16.mxu0 0
        %2830 = vmatpush1.bf16.xpose.msra.mxu0 0
        %2831 = vmatprep.subr.bf16.mxu0 0
        %2832 = vmatpush1.bf16.xpose.msra.mxu0 0
        %2833 = vmatprep.subr.bf16.mxu0 0
        %2834 = vmatpush1.bf16.xpose.msra.mxu0 0
        %2835 = vmatprep.subr.bf16.mxu0 0
        %2836 = vmatpush1.bf16.xpose.msra.mxu0 0
        %2837 = vmatprep.subr.bf16.mxu0 0
        %2838 = vmatpush1.bf16.xpose.msra.mxu0 0
        %2839 = vmatprep.subr.bf16.mxu0 0
        %2840 = vmatpush1.bf16.xpose.msra.mxu0 0
        %2841 = vmatprep.subr.bf16.mxu0 0
        %2842 = vmatpush1.bf16.xpose.msra.mxu0 0
        %2843 = vmatprep.subr.bf16.mxu0 0
        %2844 = vmatpush1.bf16.xpose.msra.mxu0 %v2827
        %2845 = vmatprep.subr.bf16.mxu0 0
        %2846 = vmatpush2.bf16.xpose.msra.mxu0 0
        %2847 = vmatprep.subr.bf16.mxu0 0
        %2848 = vmatpush2.bf16.xpose.msra.mxu0 0
        %2849 = vmatprep.subr.bf16.mxu0 0
        %2850 = vmatpush2.bf16.xpose.msra.mxu0 0
        %2851 = vmatprep.subr.bf16.mxu0 0
        %2852 = vmatpush2.bf16.xpose.msra.mxu0 0
        %2853 = vmatprep.subr.bf16.mxu0 0
        %2854 = vmatpush2.bf16.xpose.msra.mxu0 0
        %2855 = vmatprep.subr.bf16.mxu0 0
        %2856 = vmatpush2.bf16.xpose.msra.mxu0 0
        %2857 = vmatprep.subr.bf16.mxu0 0
        %2858 = vmatpush2.bf16.xpose.msra.mxu0 0
        %2859 = vmatprep.subr.bf16.mxu0 0
        %2860 = vmatpush2.bf16.xpose.msra.mxu0 0
        %2861 = vmatprep.mubr.bf16.mxu0 0
        %2862 = vmatmul.mubr.bf16.gmra.mxu0 %v2824
        %v2863 = vpop.f32.mrf.mxu0
        %v2864 = vadd.f32 0.0, %v2863
        %v2865 = vpop.f32.mrf.mxu0
        %v2866 = vpop.f32.mrf.mxu0
        %v2867 = vpop.f32.mrf.mxu0
        %2868 = vdwg.mxu0
        %v2869 = vmul.f32 %v2864, 0.35355338
        %v2870 = vsel %vm1399, %v2869, -inf
        %2871 = vmax.xlane.f32.xlu0 %v2870
        %v2872 = vpop.xlane.xlu0 %2871
        %v2873 = vsub.f32 %v2869, %v2872
        %v2874 = vmul.f32 %v2873, 1.442695
        %v2875 = vpow.pop %v2874
        %v2876 = vsel %vm1399, %v2875, 0.0
        %2877 = vadd.xlane.f32.xlu0 %v2876
        %v2878 = vpop.xlane.xlu0 %2877
        %v2879 = vrcp.pop %v2878
        %v2880 = vmul.f32 %v2875, %v2879
        %v2881 = vpack.c.bf16 %v2880, %v2880
        %2882 = vrot.lane.b32.xlu0 %v2820, 64
        %v2883 = vpop.permute.xlu0 %2882
        %v2885 = vsel %vm1399, %v2881, 0
        %v2888 = vsel %vm1417, %v2883, 0
        %2890 = vmatprep.subr.bf16.mxu0 0
        %2891 = vmatpush1.bf16.msra.mxu0 0
        %2892 = vmatprep.subr.bf16.mxu0 0
        %2893 = vmatpush1.bf16.msra.mxu0 0
        %2894 = vmatprep.subr.bf16.mxu0 0
        %2895 = vmatpush1.bf16.msra.mxu0 0
        %2896 = vmatprep.subr.bf16.mxu0 0
        %2897 = vmatpush1.bf16.msra.mxu0 0
        %2898 = vmatprep.subr.bf16.mxu0 0
        %2899 = vmatpush1.bf16.msra.mxu0 0
        %2900 = vmatprep.subr.bf16.mxu0 0
        %2901 = vmatpush1.bf16.msra.mxu0 0
        %2902 = vmatprep.subr.bf16.mxu0 0
        %2903 = vmatpush1.bf16.msra.mxu0 0
        %2904 = vmatprep.subr.bf16.mxu0 0
        %2905 = vmatpush1.bf16.msra.mxu0 %v2888
        %2906 = vmatprep.subr.bf16.mxu0 0
        %2907 = vmatpush2.bf16.msra.mxu0 0
        %2908 = vmatprep.subr.bf16.mxu0 0
        %2909 = vmatpush2.bf16.msra.mxu0 0
        %2910 = vmatprep.subr.bf16.mxu0 0
        %2911 = vmatpush2.bf16.msra.mxu0 0
        %2912 = vmatprep.subr.bf16.mxu0 0
        %2913 = vmatpush2.bf16.msra.mxu0 0
        %2914 = vmatprep.subr.bf16.mxu0 0
        %2915 = vmatpush2.bf16.msra.mxu0 0
        %2916 = vmatprep.subr.bf16.mxu0 0
        %2917 = vmatpush2.bf16.msra.mxu0 0
        %2918 = vmatprep.subr.bf16.mxu0 0
        %2919 = vmatpush2.bf16.msra.mxu0 0
        %2920 = vmatprep.subr.bf16.mxu0 0
        %2921 = vmatpush2.bf16.msra.mxu0 0
        %2922 = vmatprep.mubr.bf16.mxu0 0
        %2923 = vmatmul.mubr.bf16.gmra.mxu0 %v2885
        %v2924 = vpop.f32.mrf.mxu0
        %v2925 = vadd.f32 0.0, %v2924
        %v2926 = vpop.f32.mrf.mxu0
        %v2927 = vpop.f32.mrf.mxu0
        %v2928 = vpop.f32.mrf.mxu0
        %2929 = vdwg.mxu0
        %v2930 = vpack.c.bf16 %v2925, %v2925
        %v2931 = vld [vmem:[%s13] sm:$0xf]
        %2932 = vrot.lane.b32.xlu0 %v2820, 120
        %v2933 = vpop.permute.xlu0 %2932
        %2934 = vrot.lane.b32.xlu0 %v2820, 88
        %v2935 = vpop.permute.xlu0 %2934
        %v2937 = vsel %vm1399, %v2933, 0
        %v2940 = vsel %vm1399, %v2935, 0
        %2942 = vmatprep.subr.bf16.mxu0 0
        %2943 = vmatpush1.bf16.xpose.msra.mxu0 0
        %2944 = vmatprep.subr.bf16.mxu0 0
        %2945 = vmatpush1.bf16.xpose.msra.mxu0 0
        %2946 = vmatprep.subr.bf16.mxu0 0
        %2947 = vmatpush1.bf16.xpose.msra.mxu0 0
        %2948 = vmatprep.subr.bf16.mxu0 0
        %2949 = vmatpush1.bf16.xpose.msra.mxu0 0
        %2950 = vmatprep.subr.bf16.mxu0 0
        %2951 = vmatpush1.bf16.xpose.msra.mxu0 0
        %2952 = vmatprep.subr.bf16.mxu0 0
        %2953 = vmatpush1.bf16.xpose.msra.mxu0 0
        %2954 = vmatprep.subr.bf16.mxu0 0
        %2955 = vmatpush1.bf16.xpose.msra.mxu0 0
        %2956 = vmatprep.subr.bf16.mxu0 0
        %2957 = vmatpush1.bf16.xpose.msra.mxu0 %v2940
        %2958 = vmatprep.subr.bf16.mxu0 0
        %2959 = vmatpush2.bf16.xpose.msra.mxu0 0
        %2960 = vmatprep.subr.bf16.mxu0 0
        %2961 = vmatpush2.bf16.xpose.msra.mxu0 0
        %2962 = vmatprep.subr.bf16.mxu0 0
        %2963 = vmatpush2.bf16.xpose.msra.mxu0 0
        %2964 = vmatprep.subr.bf16.mxu0 0
        %2965 = vmatpush2.bf16.xpose.msra.mxu0 0
        %2966 = vmatprep.subr.bf16.mxu0 0
        %2967 = vmatpush2.bf16.xpose.msra.mxu0 0
        %2968 = vmatprep.subr.bf16.mxu0 0
        %2969 = vmatpush2.bf16.xpose.msra.mxu0 0
        %2970 = vmatprep.subr.bf16.mxu0 0
        %2971 = vmatpush2.bf16.xpose.msra.mxu0 0
        %2972 = vmatprep.subr.bf16.mxu0 0
        %2973 = vmatpush2.bf16.xpose.msra.mxu0 0
        %2974 = vmatprep.mubr.bf16.mxu0 0
        %2975 = vmatmul.mubr.bf16.gmra.mxu0 %v2937
        %v2976 = vpop.f32.mrf.mxu0
        %v2977 = vadd.f32 0.0, %v2976
        %v2978 = vpop.f32.mrf.mxu0
        %v2979 = vpop.f32.mrf.mxu0
        %v2980 = vpop.f32.mrf.mxu0
        %2981 = vdwg.mxu0
        %v2982 = vmul.f32 %v2977, 0.35355338
        %v2983 = vsel %vm1399, %v2982, -inf
        %2984 = vmax.xlane.f32.xlu0 %v2983
        %v2985 = vpop.xlane.xlu0 %2984
        %v2986 = vsub.f32 %v2982, %v2985
        %v2987 = vmul.f32 %v2986, 1.442695
        %v2988 = vpow.pop %v2987
        %v2989 = vsel %vm1399, %v2988, 0.0
        %2990 = vadd.xlane.f32.xlu0 %v2989
        %v2991 = vpop.xlane.xlu0 %2990
        %v2992 = vrcp.pop %v2991
        %v2993 = vmul.f32 %v2988, %v2992
        %v2994 = vpack.c.bf16 %v2993, %v2993
        %2995 = vrot.lane.b32.xlu0 %v2820, 56
        %v2996 = vpop.permute.xlu0 %2995
        %v2998 = vsel %vm1399, %v2994, 0
        %v3001 = vsel %vm1417, %v2996, 0
        %3003 = vmatprep.subr.bf16.mxu0 0
        %3004 = vmatpush1.bf16.msra.mxu0 0
        %3005 = vmatprep.subr.bf16.mxu0 0
        %3006 = vmatpush1.bf16.msra.mxu0 0
        %3007 = vmatprep.subr.bf16.mxu0 0
        %3008 = vmatpush1.bf16.msra.mxu0 0
        %3009 = vmatprep.subr.bf16.mxu0 0
        %3010 = vmatpush1.bf16.msra.mxu0 0
        %3011 = vmatprep.subr.bf16.mxu0 0
        %3012 = vmatpush1.bf16.msra.mxu0 0
        %3013 = vmatprep.subr.bf16.mxu0 0
        %3014 = vmatpush1.bf16.msra.mxu0 0
        %3015 = vmatprep.subr.bf16.mxu0 0
        %3016 = vmatpush1.bf16.msra.mxu0 0
        %3017 = vmatprep.subr.bf16.mxu0 0
        %3018 = vmatpush1.bf16.msra.mxu0 %v3001
        %3019 = vmatprep.subr.bf16.mxu0 0
        %3020 = vmatpush2.bf16.msra.mxu0 0
        %3021 = vmatprep.subr.bf16.mxu0 0
        %3022 = vmatpush2.bf16.msra.mxu0 0
        %3023 = vmatprep.subr.bf16.mxu0 0
        %3024 = vmatpush2.bf16.msra.mxu0 0
        %3025 = vmatprep.subr.bf16.mxu0 0
        %3026 = vmatpush2.bf16.msra.mxu0 0
        %3027 = vmatprep.subr.bf16.mxu0 0
        %3028 = vmatpush2.bf16.msra.mxu0 0
        %3029 = vmatprep.subr.bf16.mxu0 0
        %3030 = vmatpush2.bf16.msra.mxu0 0
        %3031 = vmatprep.subr.bf16.mxu0 0
        %3032 = vmatpush2.bf16.msra.mxu0 0
        %3033 = vmatprep.subr.bf16.mxu0 0
        %3034 = vmatpush2.bf16.msra.mxu0 0
        %3035 = vmatprep.mubr.bf16.mxu0 0
        %3036 = vmatmul.mubr.bf16.gmra.mxu0 %v2998
        %v3037 = vpop.f32.mrf.mxu0
        %v3038 = vadd.f32 0.0, %v3037
        %v3039 = vpop.f32.mrf.mxu0
        %v3040 = vpop.f32.mrf.mxu0
        %v3041 = vpop.f32.mrf.mxu0
        %3042 = vdwg.mxu0
        %v3043 = vpack.c.bf16 %v3038, %v3038
        %v3044 = vld [vmem:[%s13 + $0x4] sm:$0xf]
        %v3046 = vsel %vm1399, %v3043, 0
        %v3049 = vsel %vm1417, %v3044, 0
        %3051 = vmatprep.subr.bf16.mxu0 0
        %3052 = vmatpush1.bf16.msra.mxu0 0
        %3053 = vmatprep.subr.bf16.mxu0 0
        %3054 = vmatpush1.bf16.msra.mxu0 0
        %3055 = vmatprep.subr.bf16.mxu0 0
        %3056 = vmatpush1.bf16.msra.mxu0 0
        %3057 = vmatprep.subr.bf16.mxu0 0
        %3058 = vmatpush1.bf16.msra.mxu0 0
        %3059 = vmatprep.subr.bf16.mxu0 0
        %3060 = vmatpush1.bf16.msra.mxu0 0
        %3061 = vmatprep.subr.bf16.mxu0 0
        %3062 = vmatpush1.bf16.msra.mxu0 0
        %3063 = vmatprep.subr.bf16.mxu0 0
        %3064 = vmatpush1.bf16.msra.mxu0 0
        %3065 = vmatprep.subr.bf16.mxu0 0
        %3066 = vmatpush1.bf16.msra.mxu0 %v3049
        %3067 = vmatprep.subr.bf16.mxu0 0
        %3068 = vmatpush2.bf16.msra.mxu0 0
        %3069 = vmatprep.subr.bf16.mxu0 0
        %3070 = vmatpush2.bf16.msra.mxu0 0
        %3071 = vmatprep.subr.bf16.mxu0 0
        %3072 = vmatpush2.bf16.msra.mxu0 0
        %3073 = vmatprep.subr.bf16.mxu0 0
        %3074 = vmatpush2.bf16.msra.mxu0 0
        %3075 = vmatprep.subr.bf16.mxu0 0
        %3076 = vmatpush2.bf16.msra.mxu0 0
        %3077 = vmatprep.subr.bf16.mxu0 0
        %3078 = vmatpush2.bf16.msra.mxu0 0
        %3079 = vmatprep.subr.bf16.mxu0 0
        %3080 = vmatpush2.bf16.msra.mxu0 0
        %3081 = vmatprep.subr.bf16.mxu0 0
        %3082 = vmatpush2.bf16.msra.mxu0 0
        %3083 = vmatprep.mubr.bf16.mxu0 0
        %3084 = vmatmul.mubr.bf16.gmra.mxu0 %v3046
        %v3085 = vpop.f32.mrf.mxu0
        %v3086 = vadd.f32 0.0, %v3085
        %v3087 = vpop.f32.mrf.mxu0
        %v3088 = vpop.f32.mrf.mxu0
        %v3089 = vpop.f32.mrf.mxu0
        %3090 = vdwg.mxu0
        %v3092 = vsel %vm1399, %v2930, 0
        %v3095 = vsel %vm1417, %v2931, 0
        %3097 = vmatprep.subr.bf16.mxu0 0
        %3098 = vmatpush1.bf16.msra.mxu0 0
        %3099 = vmatprep.subr.bf16.mxu0 0
        %3100 = vmatpush1.bf16.msra.mxu0 0
        %3101 = vmatprep.subr.bf16.mxu0 0
        %3102 = vmatpush1.bf16.msra.mxu0 0
        %3103 = vmatprep.subr.bf16.mxu0 0
        %3104 = vmatpush1.bf16.msra.mxu0 0
        %3105 = vmatprep.subr.bf16.mxu0 0
        %3106 = vmatpush1.bf16.msra.mxu0 0
        %3107 = vmatprep.subr.bf16.mxu0 0
        %3108 = vmatpush1.bf16.msra.mxu0 0
        %3109 = vmatprep.subr.bf16.mxu0 0
        %3110 = vmatpush1.bf16.msra.mxu0 0
        %3111 = vmatprep.subr.bf16.mxu0 0
        %3112 = vmatpush1.bf16.msra.mxu0 %v3095
        %3113 = vmatprep.subr.bf16.mxu0 0
        %3114 = vmatpush2.bf16.msra.mxu0 0
        %3115 = vmatprep.subr.bf16.mxu0 0
        %3116 = vmatpush2.bf16.msra.mxu0 0
        %3117 = vmatprep.subr.bf16.mxu0 0
        %3118 = vmatpush2.bf16.msra.mxu0 0
        %3119 = vmatprep.subr.bf16.mxu0 0
        %3120 = vmatpush2.bf16.msra.mxu0 0
        %3121 = vmatprep.subr.bf16.mxu0 0
        %3122 = vmatpush2.bf16.msra.mxu0 0
        %3123 = vmatprep.subr.bf16.mxu0 0
        %3124 = vmatpush2.bf16.msra.mxu0 0
        %3125 = vmatprep.subr.bf16.mxu0 0
        %3126 = vmatpush2.bf16.msra.mxu0 0
        %3127 = vmatprep.subr.bf16.mxu0 0
        %3128 = vmatpush2.bf16.msra.mxu0 0
        %3129 = vmatprep.mubr.bf16.mxu0 0
        %3130 = vmatmul.mubr.bf16.gmra.mxu0 %v3092
        %v3131 = vpop.f32.mrf.mxu0
        %v3132 = vadd.f32 %v3086, %v3131
        %v3133 = vpop.f32.mrf.mxu0
        %v3134 = vpop.f32.mrf.mxu0
        %v3135 = vpop.f32.mrf.mxu0
        %3136 = vdwg.mxu0
        %3137 = vrot.lane.b32.xlu0 %v2820, 112
        %v3138 = vpop.permute.xlu0 %3137
        %3139 = vrot.lane.b32.xlu0 %v2820, 80
        %v3140 = vpop.permute.xlu0 %3139
        %v3142 = vsel %vm1399, %v3138, 0
        %v3145 = vsel %vm1399, %v3140, 0
        %3147 = vmatprep.subr.bf16.mxu0 0
        %3148 = vmatpush1.bf16.xpose.msra.mxu0 0
        %3149 = vmatprep.subr.bf16.mxu0 0
        %3150 = vmatpush1.bf16.xpose.msra.mxu0 0
        %3151 = vmatprep.subr.bf16.mxu0 0
        %3152 = vmatpush1.bf16.xpose.msra.mxu0 0
        %3153 = vmatprep.subr.bf16.mxu0 0
        %3154 = vmatpush1.bf16.xpose.msra.mxu0 0
        %3155 = vmatprep.subr.bf16.mxu0 0
        %3156 = vmatpush1.bf16.xpose.msra.mxu0 0
        %3157 = vmatprep.subr.bf16.mxu0 0
        %3158 = vmatpush1.bf16.xpose.msra.mxu0 0
        %3159 = vmatprep.subr.bf16.mxu0 0
        %3160 = vmatpush1.bf16.xpose.msra.mxu0 0
        %3161 = vmatprep.subr.bf16.mxu0 0
        %3162 = vmatpush1.bf16.xpose.msra.mxu0 %v3145
        %3163 = vmatprep.subr.bf16.mxu0 0
        %3164 = vmatpush2.bf16.xpose.msra.mxu0 0
        %3165 = vmatprep.subr.bf16.mxu0 0
        %3166 = vmatpush2.bf16.xpose.msra.mxu0 0
        %3167 = vmatprep.subr.bf16.mxu0 0
        %3168 = vmatpush2.bf16.xpose.msra.mxu0 0
        %3169 = vmatprep.subr.bf16.mxu0 0
        %3170 = vmatpush2.bf16.xpose.msra.mxu0 0
        %3171 = vmatprep.subr.bf16.mxu0 0
        %3172 = vmatpush2.bf16.xpose.msra.mxu0 0
        %3173 = vmatprep.subr.bf16.mxu0 0
        %3174 = vmatpush2.bf16.xpose.msra.mxu0 0
        %3175 = vmatprep.subr.bf16.mxu0 0
        %3176 = vmatpush2.bf16.xpose.msra.mxu0 0
        %3177 = vmatprep.subr.bf16.mxu0 0
        %3178 = vmatpush2.bf16.xpose.msra.mxu0 0
        %3179 = vmatprep.mubr.bf16.mxu0 0
        %3180 = vmatmul.mubr.bf16.gmra.mxu0 %v3142
        %v3181 = vpop.f32.mrf.mxu0
        %v3182 = vadd.f32 0.0, %v3181
        %v3183 = vpop.f32.mrf.mxu0
        %v3184 = vpop.f32.mrf.mxu0
        %v3185 = vpop.f32.mrf.mxu0
        %3186 = vdwg.mxu0
        %v3187 = vmul.f32 %v3182, 0.35355338
        %v3188 = vsel %vm1399, %v3187, -inf
        %3189 = vmax.xlane.f32.xlu0 %v3188
        %v3190 = vpop.xlane.xlu0 %3189
        %v3191 = vsub.f32 %v3187, %v3190
        %v3192 = vmul.f32 %v3191, 1.442695
        %v3193 = vpow.pop %v3192
        %v3194 = vsel %vm1399, %v3193, 0.0
        %3195 = vadd.xlane.f32.xlu0 %v3194
        %v3196 = vpop.xlane.xlu0 %3195
        %v3197 = vrcp.pop %v3196
        %v3198 = vmul.f32 %v3193, %v3197
        %v3199 = vpack.c.bf16 %v3198, %v3198
        %3200 = vrot.lane.b32.xlu0 %v2820, 48
        %v3201 = vpop.permute.xlu0 %3200
        %v3203 = vsel %vm1399, %v3199, 0
        %v3206 = vsel %vm1417, %v3201, 0
        %3208 = vmatprep.subr.bf16.mxu0 0
        %3209 = vmatpush1.bf16.msra.mxu0 0
        %3210 = vmatprep.subr.bf16.mxu0 0
        %3211 = vmatpush1.bf16.msra.mxu0 0
        %3212 = vmatprep.subr.bf16.mxu0 0
        %3213 = vmatpush1.bf16.msra.mxu0 0
        %3214 = vmatprep.subr.bf16.mxu0 0
        %3215 = vmatpush1.bf16.msra.mxu0 0
        %3216 = vmatprep.subr.bf16.mxu0 0
        %3217 = vmatpush1.bf16.msra.mxu0 0
        %3218 = vmatprep.subr.bf16.mxu0 0
        %3219 = vmatpush1.bf16.msra.mxu0 0
        %3220 = vmatprep.subr.bf16.mxu0 0
        %3221 = vmatpush1.bf16.msra.mxu0 0
        %3222 = vmatprep.subr.bf16.mxu0 0
        %3223 = vmatpush1.bf16.msra.mxu0 %v3206
        %3224 = vmatprep.subr.bf16.mxu0 0
        %3225 = vmatpush2.bf16.msra.mxu0 0
        %3226 = vmatprep.subr.bf16.mxu0 0
        %3227 = vmatpush2.bf16.msra.mxu0 0
        %3228 = vmatprep.subr.bf16.mxu0 0
        %3229 = vmatpush2.bf16.msra.mxu0 0
        %3230 = vmatprep.subr.bf16.mxu0 0
        %3231 = vmatpush2.bf16.msra.mxu0 0
        %3232 = vmatprep.subr.bf16.mxu0 0
        %3233 = vmatpush2.bf16.msra.mxu0 0
        %3234 = vmatprep.subr.bf16.mxu0 0
        %3235 = vmatpush2.bf16.msra.mxu0 0
        %3236 = vmatprep.subr.bf16.mxu0 0
        %3237 = vmatpush2.bf16.msra.mxu0 0
        %3238 = vmatprep.subr.bf16.mxu0 0
        %3239 = vmatpush2.bf16.msra.mxu0 0
        %3240 = vmatprep.mubr.bf16.mxu0 0
        %3241 = vmatmul.mubr.bf16.gmra.mxu0 %v3203
        %v3242 = vpop.f32.mrf.mxu0
        %v3243 = vadd.f32 0.0, %v3242
        %v3244 = vpop.f32.mrf.mxu0
        %v3245 = vpop.f32.mrf.mxu0
        %v3246 = vpop.f32.mrf.mxu0
        %3247 = vdwg.mxu0
        %v3248 = vpack.c.bf16 %v3243, %v3243
        %v3249 = vld [vmem:[%s13 + $0x8] sm:$0xf]
        %v3251 = vsel %vm1399, %v3248, 0
        %v3254 = vsel %vm1417, %v3249, 0
        %3256 = vmatprep.subr.bf16.mxu0 0
        %3257 = vmatpush1.bf16.msra.mxu0 0
        %3258 = vmatprep.subr.bf16.mxu0 0
        %3259 = vmatpush1.bf16.msra.mxu0 0
        %3260 = vmatprep.subr.bf16.mxu0 0
        %3261 = vmatpush1.bf16.msra.mxu0 0
        %3262 = vmatprep.subr.bf16.mxu0 0
        %3263 = vmatpush1.bf16.msra.mxu0 0
        %3264 = vmatprep.subr.bf16.mxu0 0
        %3265 = vmatpush1.bf16.msra.mxu0 0
        %3266 = vmatprep.subr.bf16.mxu0 0
        %3267 = vmatpush1.bf16.msra.mxu0 0
        %3268 = vmatprep.subr.bf16.mxu0 0
        %3269 = vmatpush1.bf16.msra.mxu0 0
        %3270 = vmatprep.subr.bf16.mxu0 0
        %3271 = vmatpush1.bf16.msra.mxu0 %v3254
        %3272 = vmatprep.subr.bf16.mxu0 0
        %3273 = vmatpush2.bf16.msra.mxu0 0
        %3274 = vmatprep.subr.bf16.mxu0 0
        %3275 = vmatpush2.bf16.msra.mxu0 0
        %3276 = vmatprep.subr.bf16.mxu0 0
        %3277 = vmatpush2.bf16.msra.mxu0 0
        %3278 = vmatprep.subr.bf16.mxu0 0
        %3279 = vmatpush2.bf16.msra.mxu0 0
        %3280 = vmatprep.subr.bf16.mxu0 0
        %3281 = vmatpush2.bf16.msra.mxu0 0
        %3282 = vmatprep.subr.bf16.mxu0 0
        %3283 = vmatpush2.bf16.msra.mxu0 0
        %3284 = vmatprep.subr.bf16.mxu0 0
        %3285 = vmatpush2.bf16.msra.mxu0 0
        %3286 = vmatprep.subr.bf16.mxu0 0
        %3287 = vmatpush2.bf16.msra.mxu0 0
        %3288 = vmatprep.mubr.bf16.mxu0 0
        %3289 = vmatmul.mubr.bf16.gmra.mxu0 %v3251
        %v3290 = vpop.f32.mrf.mxu0
        %v3291 = vadd.f32 0.0, %v3290
        %v3292 = vpop.f32.mrf.mxu0
        %v3293 = vpop.f32.mrf.mxu0
        %v3294 = vpop.f32.mrf.mxu0
        %3295 = vdwg.mxu0
        %v3296 = vadd.f32 %v3132, %v3291
        %3297 = vrot.lane.b32.xlu0 %v2820, 104
        %v3298 = vpop.permute.xlu0 %3297
        %3299 = vrot.lane.b32.xlu0 %v2820, 72
        %v3300 = vpop.permute.xlu0 %3299
        %v3302 = vsel %vm1399, %v3298, 0
        %v3305 = vsel %vm1399, %v3300, 0
        %3307 = vmatprep.subr.bf16.mxu0 0
        %3308 = vmatpush1.bf16.xpose.msra.mxu0 0
        %3309 = vmatprep.subr.bf16.mxu0 0
        %3310 = vmatpush1.bf16.xpose.msra.mxu0 0
        %3311 = vmatprep.subr.bf16.mxu0 0
        %3312 = vmatpush1.bf16.xpose.msra.mxu0 0
        %3313 = vmatprep.subr.bf16.mxu0 0
        %3314 = vmatpush1.bf16.xpose.msra.mxu0 0
        %3315 = vmatprep.subr.bf16.mxu0 0
        %3316 = vmatpush1.bf16.xpose.msra.mxu0 0
        %3317 = vmatprep.subr.bf16.mxu0 0
        %3318 = vmatpush1.bf16.xpose.msra.mxu0 0
        %3319 = vmatprep.subr.bf16.mxu0 0
        %3320 = vmatpush1.bf16.xpose.msra.mxu0 0
        %3321 = vmatprep.subr.bf16.mxu0 0
        %3322 = vmatpush1.bf16.xpose.msra.mxu0 %v3305
        %3323 = vmatprep.subr.bf16.mxu0 0
        %3324 = vmatpush2.bf16.xpose.msra.mxu0 0
        %3325 = vmatprep.subr.bf16.mxu0 0
        %3326 = vmatpush2.bf16.xpose.msra.mxu0 0
        %3327 = vmatprep.subr.bf16.mxu0 0
        %3328 = vmatpush2.bf16.xpose.msra.mxu0 0
        %3329 = vmatprep.subr.bf16.mxu0 0
        %3330 = vmatpush2.bf16.xpose.msra.mxu0 0
        %3331 = vmatprep.subr.bf16.mxu0 0
        %3332 = vmatpush2.bf16.xpose.msra.mxu0 0
        %3333 = vmatprep.subr.bf16.mxu0 0
        %3334 = vmatpush2.bf16.xpose.msra.mxu0 0
        %3335 = vmatprep.subr.bf16.mxu0 0
        %3336 = vmatpush2.bf16.xpose.msra.mxu0 0
        %3337 = vmatprep.subr.bf16.mxu0 0
        %3338 = vmatpush2.bf16.xpose.msra.mxu0 0
        %3339 = vmatprep.mubr.bf16.mxu0 0
        %3340 = vmatmul.mubr.bf16.gmra.mxu0 %v3302
        %v3341 = vpop.f32.mrf.mxu0
        %v3342 = vadd.f32 0.0, %v3341
        %v3343 = vpop.f32.mrf.mxu0
        %v3344 = vpop.f32.mrf.mxu0
        %v3345 = vpop.f32.mrf.mxu0
        %3346 = vdwg.mxu0
        %v3347 = vmul.f32 %v3342, 0.35355338
        %v3348 = vsel %vm1399, %v3347, -inf
        %3349 = vmax.xlane.f32.xlu0 %v3348
        %v3350 = vpop.xlane.xlu0 %3349
        %v3351 = vsub.f32 %v3347, %v3350
        %v3352 = vmul.f32 %v3351, 1.442695
        %v3353 = vpow.pop %v3352
        %v3354 = vsel %vm1399, %v3353, 0.0
        %3355 = vadd.xlane.f32.xlu0 %v3354
        %v3356 = vpop.xlane.xlu0 %3355
        %v3357 = vrcp.pop %v3356
        %v3358 = vmul.f32 %v3353, %v3357
        %v3359 = vpack.c.bf16 %v3358, %v3358
        %3360 = vrot.lane.b32.xlu0 %v2820, 40
        %v3361 = vpop.permute.xlu0 %3360
        %v3363 = vsel %vm1399, %v3359, 0
        %v3366 = vsel %vm1417, %v3361, 0
        %3368 = vmatprep.subr.bf16.mxu0 0
        %3369 = vmatpush1.bf16.msra.mxu0 0
        %3370 = vmatprep.subr.bf16.mxu0 0
        %3371 = vmatpush1.bf16.msra.mxu0 0
        %3372 = vmatprep.subr.bf16.mxu0 0
        %3373 = vmatpush1.bf16.msra.mxu0 0
        %3374 = vmatprep.subr.bf16.mxu0 0
        %3375 = vmatpush1.bf16.msra.mxu0 0
        %3376 = vmatprep.subr.bf16.mxu0 0
        %3377 = vmatpush1.bf16.msra.mxu0 0
        %3378 = vmatprep.subr.bf16.mxu0 0
        %3379 = vmatpush1.bf16.msra.mxu0 0
        %3380 = vmatprep.subr.bf16.mxu0 0
        %3381 = vmatpush1.bf16.msra.mxu0 0
        %3382 = vmatprep.subr.bf16.mxu0 0
        %3383 = vmatpush1.bf16.msra.mxu0 %v3366
        %3384 = vmatprep.subr.bf16.mxu0 0
        %3385 = vmatpush2.bf16.msra.mxu0 0
        %3386 = vmatprep.subr.bf16.mxu0 0
        %3387 = vmatpush2.bf16.msra.mxu0 0
        %3388 = vmatprep.subr.bf16.mxu0 0
        %3389 = vmatpush2.bf16.msra.mxu0 0
        %3390 = vmatprep.subr.bf16.mxu0 0
        %3391 = vmatpush2.bf16.msra.mxu0 0
        %3392 = vmatprep.subr.bf16.mxu0 0
        %3393 = vmatpush2.bf16.msra.mxu0 0
        %3394 = vmatprep.subr.bf16.mxu0 0
        %3395 = vmatpush2.bf16.msra.mxu0 0
        %3396 = vmatprep.subr.bf16.mxu0 0
        %3397 = vmatpush2.bf16.msra.mxu0 0
        %3398 = vmatprep.subr.bf16.mxu0 0
        %3399 = vmatpush2.bf16.msra.mxu0 0
        %3400 = vmatprep.mubr.bf16.mxu0 0
        %3401 = vmatmul.mubr.bf16.gmra.mxu0 %v3363
        %v3402 = vpop.f32.mrf.mxu0
        %v3403 = vadd.f32 0.0, %v3402
        %v3404 = vpop.f32.mrf.mxu0
        %v3405 = vpop.f32.mrf.mxu0
        %v3406 = vpop.f32.mrf.mxu0
        %3407 = vdwg.mxu0
        %v3408 = vpack.c.bf16 %v3403, %v3403
        %v3409 = vld [vmem:[%s13 + $0xc] sm:$0xf]
        %v3411 = vsel %vm1399, %v3408, 0
        %v3414 = vsel %vm1417, %v3409, 0
        %3416 = vmatprep.subr.bf16.mxu0 0
        %3417 = vmatpush1.bf16.msra.mxu0 0
        %3418 = vmatprep.subr.bf16.mxu0 0
        %3419 = vmatpush1.bf16.msra.mxu0 0
        %3420 = vmatprep.subr.bf16.mxu0 0
        %3421 = vmatpush1.bf16.msra.mxu0 0
        %3422 = vmatprep.subr.bf16.mxu0 0
        %3423 = vmatpush1.bf16.msra.mxu0 0
        %3424 = vmatprep.subr.bf16.mxu0 0
        %3425 = vmatpush1.bf16.msra.mxu0 0
        %3426 = vmatprep.subr.bf16.mxu0 0
        %3427 = vmatpush1.bf16.msra.mxu0 0
        %3428 = vmatprep.subr.bf16.mxu0 0
        %3429 = vmatpush1.bf16.msra.mxu0 0
        %3430 = vmatprep.subr.bf16.mxu0 0
        %3431 = vmatpush1.bf16.msra.mxu0 %v3414
        %3432 = vmatprep.subr.bf16.mxu0 0
        %3433 = vmatpush2.bf16.msra.mxu0 0
        %3434 = vmatprep.subr.bf16.mxu0 0
        %3435 = vmatpush2.bf16.msra.mxu0 0
        %3436 = vmatprep.subr.bf16.mxu0 0
        %3437 = vmatpush2.bf16.msra.mxu0 0
        %3438 = vmatprep.subr.bf16.mxu0 0
        %3439 = vmatpush2.bf16.msra.mxu0 0
        %3440 = vmatprep.subr.bf16.mxu0 0
        %3441 = vmatpush2.bf16.msra.mxu0 0
        %3442 = vmatprep.subr.bf16.mxu0 0
        %3443 = vmatpush2.bf16.msra.mxu0 0
        %3444 = vmatprep.subr.bf16.mxu0 0
        %3445 = vmatpush2.bf16.msra.mxu0 0
        %3446 = vmatprep.subr.bf16.mxu0 0
        %3447 = vmatpush2.bf16.msra.mxu0 0
        %3448 = vmatprep.mubr.bf16.mxu0 0
        %3449 = vmatmul.mubr.bf16.gmra.mxu0 %v3411
        %v3450 = vpop.f32.mrf.mxu0
        %v3451 = vadd.f32 0.0, %v3450
        %v3452 = vpop.f32.mrf.mxu0
        %v3453 = vpop.f32.mrf.mxu0
        %v3454 = vpop.f32.mrf.mxu0
        %3455 = vdwg.mxu0
        %v3456 = vadd.f32 %v3296, %v3451
        %v3457 = vld [vmem:[%s14] sm:$0x1]
        %v3459 = vlaneseq
        %v3460 = vshrl.u32 %v3459, 7
        %v3461 = vsub.s32 0, %v3460
        %v3462 = vrot.slane %v3457, %v3461
        %v3464 = vadd.f32 %v3456, %v3462
        %v3465 = vadd.f32 %v3464, %v2205
        %v3466 = vld [vmem:[%s15] sm:$0x1]
        %v3467 = vld [vmem:[#allocation6] sm:$0x1]
        %v3468 = vsel %vm869, %v3465, 0.0
        %3469 = vadd.xlane.f32.xlu0 %v3468
        %v3470 = vpop.xlane.xlu0 %3469
        %v3471 = vmul.f32 %v3470, %v2181
        %v3472 = vsub.f32 %v3465, %v3471
        %v3473 = vmul.f32 %v3472, %v3472
        %v3474 = vsel %vm869, %v3473, 0.0
        %3475 = vadd.xlane.f32.xlu0 %v3474
        %v3476 = vpop.xlane.xlu0 %3475
        %v3477 = vmul.f32 %v3476, %v2181
        %v3478 = vadd.f32 %v3477, 1e-05
        %v3479 = vrsqrt.pop %v3478
        %v3480 = vmul.f32 %v3472, %v3479
        %v3482 = vlaneseq
        %v3483 = vshrl.u32 %v3482, 7
        %v3484 = vsub.s32 0, %v3483
        %v3485 = vrot.slane %v3466, %v3484
        %v3487 = vmul.f32 %v3480, %v3485
        %v3489 = vlaneseq
        %v3490 = vshrl.u32 %v3489, 7
        %v3491 = vsub.s32 0, %v3490
        %v3492 = vrot.slane %v3467, %v3491
        %v3494 = vadd.f32 %v3487, %v3492
        %v3495 = vpack.c.bf16 %v3494, %v3494
        %v3496 = vld [vmem:[#allocation9] sm:$0xf]
        %v3497 = vld [vmem:[#allocation9 + $0x4] sm:$0xf]
        %v3498 = vld [vmem:[#allocation9 + $0x8] sm:$0xf]
        %v3499 = vld [vmem:[#allocation9 + $0xc] sm:$0xf]
        %v3504 = vunpack.c.l.b16 %v3496
        %v3505 = vunpack.c.l.b16 %v3497
        %v3506 = vunpack.c.l.b16 %v3498
        %v3507 = vunpack.c.l.b16 %v3499
        %v3508 = vpack.c.b16 %v3505, %v3504
        %v3509 = vpack.c.b16 %v3507, %v3506
        %v3513 = vsel %vm869, %v3495, 0
        %3515 = vmatprep.subr.bf16.mxu0 0
        %3516 = vmatpush1.bf16.msra.mxu0 0
        %3517 = vmatprep.subr.bf16.mxu0 0
        %3518 = vmatpush1.bf16.msra.mxu0 0
        %3519 = vmatprep.subr.bf16.mxu0 0
        %3520 = vmatpush1.bf16.msra.mxu0 0
        %3521 = vmatprep.subr.bf16.mxu0 0
        %3522 = vmatpush1.bf16.msra.mxu0 0
        %3523 = vmatprep.subr.bf16.mxu0 0
        %3524 = vmatpush1.bf16.msra.mxu0 0
        %3525 = vmatprep.subr.bf16.mxu0 0
        %3526 = vmatpush1.bf16.msra.mxu0 0
        %3527 = vmatprep.subr.bf16.mxu0 0
        %3528 = vmatpush1.bf16.msra.mxu0 %v3509
        %3529 = vmatprep.subr.bf16.mxu0 0
        %3530 = vmatpush1.bf16.msra.mxu0 %v3508
        %3531 = vmatprep.subr.bf16.mxu0 0
        %3532 = vmatpush2.bf16.msra.mxu0 0
        %3533 = vmatprep.subr.bf16.mxu0 0
        %3534 = vmatpush2.bf16.msra.mxu0 0
        %3535 = vmatprep.subr.bf16.mxu0 0
        %3536 = vmatpush2.bf16.msra.mxu0 0
        %3537 = vmatprep.subr.bf16.mxu0 0
        %3538 = vmatpush2.bf16.msra.mxu0 0
        %3539 = vmatprep.subr.bf16.mxu0 0
        %3540 = vmatpush2.bf16.msra.mxu0 0
        %3541 = vmatprep.subr.bf16.mxu0 0
        %3542 = vmatpush2.bf16.msra.mxu0 0
        %3543 = vmatprep.subr.bf16.mxu0 0
        %3544 = vmatpush2.bf16.msra.mxu0 0
        %3545 = vmatprep.subr.bf16.mxu0 0
        %3546 = vmatpush2.bf16.msra.mxu0 0
        %3547 = vmatprep.mubr.bf16.mxu0 0
        %3548 = vmatmul.mubr.bf16.gmra.mxu0 %v3513
        %v3549 = vpop.f32.mrf.mxu0
        %v3550 = vadd.f32 0.0, %v3549
        %v3551 = vpop.f32.mrf.mxu0
        %v3552 = vpop.f32.mrf.mxu0
        %v3553 = vpop.f32.mrf.mxu0
        %3554 = vdwg.mxu0
        %v3555 = vadd.f32 %v3494, %v3550
        %v3556 = vld [vmem:[#allocation11] sm:$0x1]
        %v3558 = vlaneseq
        %v3559 = vshrl.u32 %v3558, 7
        %v3560 = vsub.s32 0, %v3559
        %v3561 = vrot.slane %v3556, %v3560
        %v3563 = vadd.f32 %v3555, %v3561
        %v3564 = vld [vmem:[#allocation12] sm:$0x1]
        %v3565 = vld [vmem:[#allocation14] sm:$0x1]
        %v3566 = vsel %vm869, %v3563, 0.0
        %3567 = vadd.xlane.f32.xlu0 %v3566
        %v3568 = vpop.xlane.xlu0 %3567
        %v3569 = vmul.f32 %v3568, %v2181
        %v3570 = vsub.f32 %v3563, %v3569
        %v3571 = vmul.f32 %v3570, %v3570
        %v3572 = vsel %vm869, %v3571, 0.0
        %3573 = vadd.xlane.f32.xlu0 %v3572
        %v3574 = vpop.xlane.xlu0 %3573
        %v3575 = vmul.f32 %v3574, %v2181
        %v3576 = vadd.f32 %v3575, 1e-05
        %v3577 = vrsqrt.pop %v3576
        %v3578 = vmul.f32 %v3570, %v3577
        %v3580 = vlaneseq
        %v3581 = vshrl.u32 %v3580, 7
        %v3582 = vsub.s32 0, %v3581
        %v3583 = vrot.slane %v3564, %v3582
        %v3585 = vmul.f32 %v3578, %v3583
        %v3587 = vlaneseq
        %v3588 = vshrl.u32 %v3587, 7
        %v3589 = vsub.s32 0, %v3588
        %v3590 = vrot.slane %v3565, %v3589
        %v3592 = vadd.f32 %v3585, %v3590
        %v3593 = vpack.c.bf16 %v3592, %v3592
        %v3594 = vld [vmem:[#allocation15] sm:$0xf]
        %v3595 = vld [vmem:[#allocation15 + $0x4] sm:$0xf]
        %v3596 = vld [vmem:[#allocation15 + $0x8] sm:$0xf]
        %v3597 = vld [vmem:[#allocation15 + $0xc] sm:$0xf]
        %v3598 = vpack.c.bf16 %v2746, %v2746
        %v3599 = vld [vmem:[#allocation17] sm:$0xf]
        %v3600 = vld [vmem:[#allocation17 + $0x4] sm:$0xf]
        %v3601 = vld [vmem:[#allocation17 + $0x8] sm:$0xf]
        %v3602 = vld [vmem:[#allocation17 + $0xc] sm:$0xf]
        %v3607 = vunpack.c.l.b16 %v3599
        %v3608 = vunpack.c.l.b16 %v3600
        %v3609 = vunpack.c.l.b16 %v3601
        %v3610 = vunpack.c.l.b16 %v3602
        %v3611 = vpack.c.b16 %v3608, %v3607
        %v3612 = vpack.c.b16 %v3610, %v3609
        %v3616 = vsel %vm869, %v3598, 0
        %3618 = vmatprep.subr.bf16.mxu0 0
        %3619 = vmatpush1.bf16.msra.mxu0 0
        %3620 = vmatprep.subr.bf16.mxu0 0
        %3621 = vmatpush1.bf16.msra.mxu0 0
        %3622 = vmatprep.subr.bf16.mxu0 0
        %3623 = vmatpush1.bf16.msra.mxu0 0
        %3624 = vmatprep.subr.bf16.mxu0 0
        %3625 = vmatpush1.bf16.msra.mxu0 0
        %3626 = vmatprep.subr.bf16.mxu0 0
        %3627 = vmatpush1.bf16.msra.mxu0 0
        %3628 = vmatprep.subr.bf16.mxu0 0
        %3629 = vmatpush1.bf16.msra.mxu0 0
        %3630 = vmatprep.subr.bf16.mxu0 0
        %3631 = vmatpush1.bf16.msra.mxu0 %v3612
        %3632 = vmatprep.subr.bf16.mxu0 0
        %3633 = vmatpush1.bf16.msra.mxu0 %v3611
        %3634 = vmatprep.subr.bf16.mxu0 0
        %3635 = vmatpush2.bf16.msra.mxu0 0
        %3636 = vmatprep.subr.bf16.mxu0 0
        %3637 = vmatpush2.bf16.msra.mxu0 0
        %3638 = vmatprep.subr.bf16.mxu0 0
        %3639 = vmatpush2.bf16.msra.mxu0 0
        %3640 = vmatprep.subr.bf16.mxu0 0
        %3641 = vmatpush2.bf16.msra.mxu0 0
        %3642 = vmatprep.subr.bf16.mxu0 0
        %3643 = vmatpush2.bf16.msra.mxu0 0
        %3644 = vmatprep.subr.bf16.mxu0 0
        %3645 = vmatpush2.bf16.msra.mxu0 0
        %3646 = vmatprep.subr.bf16.mxu0 0
        %3647 = vmatpush2.bf16.msra.mxu0 0
        %3648 = vmatprep.subr.bf16.mxu0 0
        %3649 = vmatpush2.bf16.msra.mxu0 0
        %3650 = vmatprep.mubr.bf16.mxu0 0
        %3651 = vmatmul.mubr.bf16.gmra.mxu0 %v3616
        %v3652 = vpop.f32.mrf.mxu0
        %v3653 = vadd.f32 0.0, %v3652
        %v3654 = vpop.f32.mrf.mxu0
        %v3655 = vpop.f32.mrf.mxu0
        %v3656 = vpop.f32.mrf.mxu0
        %3657 = vdwg.mxu0
        %v3662 = vunpack.c.l.b16 %v3594
        %v3663 = vunpack.c.l.b16 %v3595
        %v3664 = vunpack.c.l.b16 %v3596
        %v3665 = vunpack.c.l.b16 %v3597
        %v3666 = vpack.c.b16 %v3663, %v3662
        %v3667 = vpack.c.b16 %v3665, %v3664
        %v3671 = vsel %vm869, %v3593, 0
        %3673 = vmatprep.subr.bf16.mxu0 0
        %3674 = vmatpush1.bf16.msra.mxu0 0
        %3675 = vmatprep.subr.bf16.mxu0 0
        %3676 = vmatpush1.bf16.msra.mxu0 0
        %3677 = vmatprep.subr.bf16.mxu0 0
        %3678 = vmatpush1.bf16.msra.mxu0 0
        %3679 = vmatprep.subr.bf16.mxu0 0
        %3680 = vmatpush1.bf16.msra.mxu0 0
        %3681 = vmatprep.subr.bf16.mxu0 0
        %3682 = vmatpush1.bf16.msra.mxu0 0
        %3683 = vmatprep.subr.bf16.mxu0 0
        %3684 = vmatpush1.bf16.msra.mxu0 0
        %3685 = vmatprep.subr.bf16.mxu0 0
        %3686 = vmatpush1.bf16.msra.mxu0 %v3667
        %3687 = vmatprep.subr.bf16.mxu0 0
        %3688 = vmatpush1.bf16.msra.mxu0 %v3666
        %3689 = vmatprep.subr.bf16.mxu0 0
        %3690 = vmatpush2.bf16.msra.mxu0 0
        %3691 = vmatprep.subr.bf16.mxu0 0
        %3692 = vmatpush2.bf16.msra.mxu0 0
        %3693 = vmatprep.subr.bf16.mxu0 0
        %3694 = vmatpush2.bf16.msra.mxu0 0
        %3695 = vmatprep.subr.bf16.mxu0 0
        %3696 = vmatpush2.bf16.msra.mxu0 0
        %3697 = vmatprep.subr.bf16.mxu0 0
        %3698 = vmatpush2.bf16.msra.mxu0 0
        %3699 = vmatprep.subr.bf16.mxu0 0
        %3700 = vmatpush2.bf16.msra.mxu0 0
        %3701 = vmatprep.subr.bf16.mxu0 0
        %3702 = vmatpush2.bf16.msra.mxu0 0
        %3703 = vmatprep.subr.bf16.mxu0 0
        %3704 = vmatpush2.bf16.msra.mxu0 0
        %3705 = vmatprep.mubr.bf16.mxu0 0
        %3706 = vmatmul.mubr.bf16.gmra.mxu0 %v3671
        %v3707 = vpop.f32.mrf.mxu0
        %v3708 = vadd.f32 %v3653, %v3707
        %v3709 = vpop.f32.mrf.mxu0
        %v3710 = vpop.f32.mrf.mxu0
        %v3711 = vpop.f32.mrf.mxu0
        %3712 = vdwg.mxu0
        %v3713 = vld [vmem:[#allocation18] sm:$0x1]
        %v3715 = vlaneseq
        %v3716 = vshrl.u32 %v3715, 7
        %v3717 = vsub.s32 0, %v3716
        %v3718 = vrot.slane %v3713, %v3717
        %v3720 = vadd.f32 %v3708, %v3718
        %3721 = vst.msk [vmem:[%s837] sm:$0xff] %vm869, %v3720
        %s3722 = sand.u32 %s560, 1
        %s3723 = scalar_lea.sflag [#allocation8], %s3722
        %s3724 = sand.u32 %s560, 1
        %s3725 = smul.addr %s3724, 8
        %s3726 = scalar_lea.vmem [#allocation20], %s3725
        // Predicated region
        $region149: #{coattention_forward.1} parent=115 // pred_check
          %p3727 = pneg %p570
        $region150: #{coattention_forward.1} parent=115 // pred_check_branch
          %3729 = sbr.rel (%p3727) target = $region152
        $region151: #{coattention_forward.1} parent=115 // pred_region
          %s3731 = ssub.s32 128, 128
          %3732 = vsyncadd %s3723, %s3731
          %s3733 = smul.addr %s43, 128
          %s3734 = scalar_lea.hbm %s24, %s3733
          %s3736 = sshll.u32 %s3726, 4
          %s3737 = int_to_ptr.vmem [resolvable:$true] %s3736
          %3739 = dma.vmem_to_hbm [thread:$0]  %s3737, 128, %s3734, %s3723
        $region152: #{coattention_forward.1} parent=115 // pred_fallthru
          _
      $region116: #{coattention_forward.1} parent=5 // pred_fallthru
        _
      %p3740 = scmp.le.s32.totalorder 2, %s38
      // Predicated region
      $region153: #{coattention_forward.1} parent=5 // pred_check
        %p3741 = pneg %p3740
      $region154: #{coattention_forward.1} parent=5 // pred_check_branch
        %3743 = sbr.rel (%p3741) target = $region156
      $region155: #{coattention_forward.1} parent=5 // pred_region
        %s3744 = ssub.s32 %s38, 2
        // Predicated region
        $region157: #{coattention_forward.1} parent=155 // pred_check
          %p3745 = pneg %p576
        $region158: #{coattention_forward.1} parent=155 // pred_check_branch
          %3747 = sbr.rel (%p3745) target = $region160
        $region159: #{coattention_forward.1} parent=155 // pred_region
          %s3748 = sand.u32 %s561, 1
          %s3749 = scalar_lea.sflag [#allocation8], %s3748
          %s3750 = sand.u32 %s561, 1
          %s3751 = smul.addr %s3750, 8
          %s3752 = scalar_lea.vmem [#allocation20], %s3751
          %3753 = dma.done %s3749, 128
        $region160: #{coattention_forward.1} parent=155 // pred_fallthru
          _
      $region156: #{coattention_forward.1} parent=5 // pred_fallthru
        _
    $region6: #{coattention_forward.1} parent=1 // loop_footer
      %s42 = sadd.s32 1, %s38
    $region7: #{coattention_forward.1} parent=1 // loop_footer_branch
      %37 = sbr.rel target = $region3
    $region8: #{coattention_forward.1} parent=1 // loop_exit
      _
    %3754 = vsyncpa [#allocation7], 1
    %s3755 = scalar_lea.sflag [#allocation7], 1
    %3756 = vsyncpa %s3755, 1
    %3757 = vsyncpa [#allocation10], 1
    %3758 = vsyncpa [#allocation13], 1
    %3759 = vsyncpa [#allocation16], 1
    %3760 = vsyncpa [#allocation19], 1
    %3761 = vsyncpa [#allocation8], 1
    %s3762 = scalar_lea.sflag [#allocation8], 1
    %3763 = vsyncpa %s3762, 1

</llo_original>
